<compile_context>
chip_gen: v5e
topology: v5e:2x2
jax: 0.10.0
libtpu: 0.0.40
codegen_flags: <defaults>
</compile_context>

<pallas_src>
import jax
import jax.numpy as jnp
from jax.experimental import pallas as pl
from jax.experimental.pallas import tpu as pltpu

IN_DIM = 28 * 28          # 784, matches nn.Flatten / nn.Unflatten(1, (1, 28, 28))
H1 = 256
H2 = 64


def _round_up(n, m):
    return ((n + m - 1) // m) * m


def autoencoder_kernel(x_ref,
                       w1_ref, b1_ref,
                       w2_ref, b2_ref,
                       w3_ref, b3_ref,
                       w4_ref, b4_ref,
                       o_ref):
    # f32 -> bf16 cast fused here (no separate wrapper HBM pass for the cast/pad).
    x = x_ref[...].astype(jnp.bfloat16)
    # encoder: Linear(784,256) + ReLU   (bf16 MXU inputs, f32 accumulation)
    h = jnp.dot(x, w1_ref[...], preferred_element_type=jnp.float32) + b1_ref[...]
    h = jnp.maximum(h, 0.0).astype(jnp.bfloat16)
    # encoder: Linear(256,64) + ReLU
    h = jnp.dot(h, w2_ref[...], preferred_element_type=jnp.float32) + b2_ref[...]
    h = jnp.maximum(h, 0.0).astype(jnp.bfloat16)
    # decoder: Linear(64,256) + ReLU
    h = jnp.dot(h, w3_ref[...], preferred_element_type=jnp.float32) + b3_ref[...]
    h = jnp.maximum(h, 0.0).astype(jnp.bfloat16)
    # decoder: Linear(256,784) + Sigmoid; approx reciprocal keeps the divide on the EUP slot.
    h = jnp.dot(h, w4_ref[...], preferred_element_type=jnp.float32) + b4_ref[...]
    o_ref[...] = (pl.reciprocal(1.0 + jnp.exp(-h), approx=True)).astype(o_ref.dtype)


_WEIGHT_SHAPES = ((IN_DIM, H1), (1, H1),
                  (H1, H2), (1, H2),
                  (H2, H1), (1, H1),
                  (H1, IN_DIM), (1, IN_DIM))


def _const_spec(shape, single_buffer):
    # Constant index_map -> Pallas fetches the block once and never re-DMAs it.
    if single_buffer:
        return pl.BlockSpec(shape, lambda i: (0,) * len(shape),
                            pipeline_mode=pl.Buffered(1))
    return pl.BlockSpec(shape, lambda i: (0,) * len(shape))


def _build_call(bt, n_tiles, B_pad, single_buffer_weights):
    in_specs = [pl.BlockSpec((bt, IN_DIM), lambda i: (i, 0))]          # x tile (f32)
    in_specs += [_const_spec(s, single_buffer_weights) for s in _WEIGHT_SHAPES]
    return pl.pallas_call(
        autoencoder_kernel,
        out_shape=jax.ShapeDtypeStruct((B_pad, IN_DIM), jnp.bfloat16),  # bf16 output slab
        grid_spec=pltpu.PrefetchScalarGridSpec(
            num_scalar_prefetch=0,
            grid=(n_tiles,),
            in_specs=in_specs,
            out_specs=pl.BlockSpec((bt, IN_DIM), lambda i: (i, 0)),
        ),
        compiler_params=pltpu.CompilerParams(
            dimension_semantics=("parallel",)),
    )


def autoencoder_forward(x_nchw, params, *, batch_tile=512, out_dtype=jnp.bfloat16):
    """x_nchw: (B, 1, 28, 28) float32. Returns (B, 1, 28, 28) in `out_dtype`."""
    B = x_nchw.shape[0]
    w1, b1, w2, b2, w3, b3, w4, b4 = params

    # nn.Flatten: contiguous reshape, no HBM pass. Input stays f32; bf16 cast is in-kernel.
    x = x_nchw.reshape(B, IN_DIM)

    # Tile selection:
    #  * clamp for small batches (16 = bf16 sublane pack) so tiny calls don't pad to 512,
    #  * otherwise prefer >= 2 grid steps so both v7x TensorCores get work.
    bt = min(batch_tile, _round_up(B, 16))
    if B > 16 and pl.cdiv(B, bt) == 1:
        bt = _round_up(pl.cdiv(B, 2), 16)
    n_tiles = pl.cdiv(B, bt)
    B_pad = n_tiles * bt
    if B_pad != B:
        x = jnp.pad(x, ((0, B_pad - B), (0, 0)))

    # One-time bf16 cast of the (small) weights; biases stay f32 (added to the f32 acc).
    w1b, w2b, w3b, w4b = (w.astype(jnp.bfloat16) for w in (w1, w2, w3, w4))
    args = (x, w1b, b1, w2b, b2, w3b, b3, w4b, b4)

    try:
        out = _build_call(bt, n_tiles, B_pad, single_buffer_weights=True)(*args)
    except Exception:
        # Fallback for jax versions without per-operand pipeline_mode=pl.Buffered support.
        out = _build_call(bt, n_tiles, B_pad, single_buffer_weights=False)(*args)

    if B_pad != B:
        out = out[:B]
    # nn.Unflatten(1, (1, 28, 28)): contiguous reshape, no copy.
    out = out.reshape(B, 1, 28, 28)
    return out.astype(out_dtype)


def init_params(key):
    """Deterministic init matching nn.Linear shapes; weights stored pre-transposed as
    (in, out) so the kernel computes x @ W + b. Kept in f32; bf16 cast happens once."""
    def linear(key, fan_in, fan_out):
        kw, kb = jax.random.split(key)
        bound = 1.0 / jnp.sqrt(fan_in)
        w = jax.random.uniform(kw, (fan_in, fan_out), jnp.float32, -bound, bound)
        b = jax.random.uniform(kb, (1, fan_out), jnp.float32, -bound, bound)
        return w, b

    k1, k2, k3, k4 = jax.random.split(key, 4)
    w1, b1 = linear(k1, IN_DIM, H1)   # Linear(784, 256)
    w2, b2 = linear(k2, H1, H2)       # Linear(256, 64)
    w3, b3 = linear(k3, H2, H1)       # Linear(64, 256)
    w4, b4 = linear(k4, H1, IN_DIM)   # Linear(256, 784)
    return (w1, b1, w2, b2, w3, b3, w4, b4)


if __name__ == "__main__":
    key = jax.random.PRNGKey(0)
    k_x, k_p = jax.random.split(key)

    B = 8
    x = jax.random.uniform(k_x, (B, 1, 28, 28), jnp.float32)  # MNIST-like input
    params = init_params(k_p)

    out = autoencoder_forward(x, params)
    out = jax.block_until_ready(out)

    # sanity check against a plain-JAX f32 reference (bf16 MXU inputs/output -> loose tol)
    w1, b1, w2, b2, w3, b3, w4, b4 = params
    xf = x.reshape(B, IN_DIM)
    h = jnp.maximum(xf @ w1 + b1, 0.0)
    h = jnp.maximum(h @ w2 + b2, 0.0)
    h = jnp.maximum(h @ w3 + b3, 0.0)
    ref = jax.nn.sigmoid(h @ w4 + b4).reshape(B, 1, 28, 28)

    assert out.shape == (B, 1, 28, 28)
    err = float(jnp.max(jnp.abs(out.astype(jnp.float32) - ref)))
    assert err < 3e-2, err

    print("KERNEL_OK")
</pallas_src>

<mosaic_0001>
module attributes {stable_mosaic.version = 11 : i64} {
  func.func @autoencoder_kernel(%arg0: i32, %arg1: memref<16x784xf32, #tpu.memory_space<vmem>>, %arg2: memref<784x256xbf16, #tpu.memory_space<vmem>>, %arg3: memref<1x256xf32, #tpu.memory_space<vmem>>, %arg4: memref<256x64xbf16, #tpu.memory_space<vmem>>, %arg5: memref<1x64xf32, #tpu.memory_space<vmem>>, %arg6: memref<64x256xbf16, #tpu.memory_space<vmem>>, %arg7: memref<1x256xf32, #tpu.memory_space<vmem>>, %arg8: memref<256x784xbf16, #tpu.memory_space<vmem>>, %arg9: memref<1x784xf32, #tpu.memory_space<vmem>>, %arg10: memref<16x784xbf16, #tpu.memory_space<vmem>>) attributes {dimension_semantics = [#tpu.dimension_semantics<parallel>], iteration_bounds = array<i64: 1>, scalar_prefetch = 0 : i64, scratch_operands = 0 : i64, tpu.core_type = #tpu.core_type<tc>, window_params = [{transform_indices = @transform_0, window_bounds = array<i64: 16, 784>}, {pipeline_mode = #tpu.pipeline_mode<synchronous>, transform_indices = @transform_1, window_bounds = array<i64: 784, 256>}, {pipeline_mode = #tpu.pipeline_mode<synchronous>, transform_indices = @transform_2, window_bounds = array<i64: 1, 256>}, {pipeline_mode = #tpu.pipeline_mode<synchronous>, transform_indices = @transform_3, window_bounds = array<i64: 256, 64>}, {pipeline_mode = #tpu.pipeline_mode<synchronous>, transform_indices = @transform_4, window_bounds = array<i64: 1, 64>}, {pipeline_mode = #tpu.pipeline_mode<synchronous>, transform_indices = @transform_5, window_bounds = array<i64: 64, 256>}, {pipeline_mode = #tpu.pipeline_mode<synchronous>, transform_indices = @transform_6, window_bounds = array<i64: 1, 256>}, {pipeline_mode = #tpu.pipeline_mode<synchronous>, transform_indices = @transform_7, window_bounds = array<i64: 256, 784>}, {pipeline_mode = #tpu.pipeline_mode<synchronous>, transform_indices = @transform_8, window_bounds = array<i64: 1, 784>}, {transform_indices = @transform_9, window_bounds = array<i64: 16, 784>}]} {
    %c0 = arith.constant 0 : index
    %c0_0 = arith.constant 0 : index
    %0 = vector.load %arg1[%c0, %c0_0] : memref<16x784xf32, #tpu.memory_space<vmem>>, vector<16x784xf32>
    %1 = arith.truncf %0 : vector<16x784xf32> to vector<16x784xbf16>
    %c0_1 = arith.constant 0 : index
    %c0_2 = arith.constant 0 : index
    %2 = vector.load %arg2[%c0_1, %c0_2] : memref<784x256xbf16, #tpu.memory_space<vmem>>, vector<784x256xbf16>
    %cst = arith.constant dense<0.000000e+00> : vector<16x256xf32>
    %3 = tpu.matmul %1, %2, %cst {dimension_numbers = #tpu.dot_dimension_numbers<[1], [0], [0], [1], [0, 0, 1, 1], [], []>} : vector<16x784xbf16>, vector<784x256xbf16>, vector<16x256xf32> -> vector<16x256xf32>
    %c0_3 = arith.constant 0 : index
    %c0_4 = arith.constant 0 : index
    %4 = vector.load %arg3[%c0_3, %c0_4] : memref<1x256xf32, #tpu.memory_space<vmem>>, vector<1x256xf32>
    %5 = vector.broadcast %4 : vector<1x256xf32> to vector<16x256xf32>
    %6 = arith.addf %3, %5 : vector<16x256xf32>
    %cst_5 = arith.constant 0.000000e+00 : f32
    %7 = vector.broadcast %cst_5 : f32 to vector<16x256xf32>
    %8 = arith.maximumf %6, %7 : vector<16x256xf32>
    %9 = arith.truncf %8 : vector<16x256xf32> to vector<16x256xbf16>
    %c0_6 = arith.constant 0 : index
    %c0_7 = arith.constant 0 : index
    %10 = vector.load %arg4[%c0_6, %c0_7] : memref<256x64xbf16, #tpu.memory_space<vmem>>, vector<256x64xbf16>
    %cst_8 = arith.constant dense<0.000000e+00> : vector<16x64xf32>
    %11 = tpu.matmul %9, %10, %cst_8 {dimension_numbers = #tpu.dot_dimension_numbers<[1], [0], [0], [1], [0, 0, 1, 1], [], []>} : vector<16x256xbf16>, vector<256x64xbf16>, vector<16x64xf32> -> vector<16x64xf32>
    %c0_9 = arith.constant 0 : index
    %c0_10 = arith.constant 0 : index
    %12 = vector.load %arg5[%c0_9, %c0_10] : memref<1x64xf32, #tpu.memory_space<vmem>>, vector<1x64xf32>
    %13 = vector.broadcast %12 : vector<1x64xf32> to vector<16x64xf32>
    %14 = arith.addf %11, %13 : vector<16x64xf32>
    %cst_11 = arith.constant 0.000000e+00 : f32
    %15 = vector.broadcast %cst_11 : f32 to vector<16x64xf32>
    %16 = arith.maximumf %14, %15 : vector<16x64xf32>
    %17 = arith.truncf %16 : vector<16x64xf32> to vector<16x64xbf16>
    %c0_12 = arith.constant 0 : index
    %c0_13 = arith.constant 0 : index
    %18 = vector.load %arg6[%c0_12, %c0_13] : memref<64x256xbf16, #tpu.memory_space<vmem>>, vector<64x256xbf16>
    %cst_14 = arith.constant dense<0.000000e+00> : vector<16x256xf32>
    %19 = tpu.matmul %17, %18, %cst_14 {dimension_numbers = #tpu.dot_dimension_numbers<[1], [0], [0], [1], [0, 0, 1, 1], [], []>} : vector<16x64xbf16>, vector<64x256xbf16>, vector<16x256xf32> -> vector<16x256xf32>
    %c0_15 = arith.constant 0 : index
    %c0_16 = arith.constant 0 : index
    %20 = vector.load %arg7[%c0_15, %c0_16] : memref<1x256xf32, #tpu.memory_space<vmem>>, vector<1x256xf32>
    %21 = vector.broadcast %20 : vector<1x256xf32> to vector<16x256xf32>
    %22 = arith.addf %19, %21 : vector<16x256xf32>
    %cst_17 = arith.constant 0.000000e+00 : f32
    %23 = vector.broadcast %cst_17 : f32 to vector<16x256xf32>
    %24 = arith.maximumf %22, %23 : vector<16x256xf32>
    %25 = arith.truncf %24 : vector<16x256xf32> to vector<16x256xbf16>
    %c0_18 = arith.constant 0 : index
    %c0_19 = arith.constant 0 : index
    %26 = vector.load %arg8[%c0_18, %c0_19] : memref<256x784xbf16, #tpu.memory_space<vmem>>, vector<256x784xbf16>
    %cst_20 = arith.constant dense<0.000000e+00> : vector<16x784xf32>
    %27 = tpu.matmul %25, %26, %cst_20 {dimension_numbers = #tpu.dot_dimension_numbers<[1], [0], [0], [1], [0, 0, 1, 1], [], []>} : vector<16x256xbf16>, vector<256x784xbf16>, vector<16x784xf32> -> vector<16x784xf32>
    %c0_21 = arith.constant 0 : index
    %c0_22 = arith.constant 0 : index
    %28 = vector.load %arg9[%c0_21, %c0_22] : memref<1x784xf32, #tpu.memory_space<vmem>>, vector<1x784xf32>
    %29 = vector.broadcast %28 : vector<1x784xf32> to vector<16x784xf32>
    %30 = arith.addf %27, %29 : vector<16x784xf32>
    %cst_23 = arith.constant 0.000000e+00 : f32
    %31 = vector.broadcast %cst_23 : f32 to vector<16x784xf32>
    %32 = arith.subf %31, %30 : vector<16x784xf32>
    %33 = math.exp %32 : vector<16x784xf32>
    %cst_24 = arith.constant 1.000000e+00 : f32
    %34 = vector.broadcast %cst_24 : f32 to vector<16x784xf32>
    %35 = arith.addf %34, %33 : vector<16x784xf32>
    %36 = tpu.reciprocal %35 {approx = true} : vector<16x784xf32> -> vector<16x784xf32>
    %37 = arith.truncf %36 : vector<16x784xf32> to vector<16x784xbf16>
    %c0_25 = arith.constant 0 : index
    %c0_26 = arith.constant 0 : index
    %38 = vector.load %arg10[%c0_25, %c0_26] : memref<16x784xbf16, #tpu.memory_space<vmem>>, vector<16x784xbf16>
    tpu.vector_store %arg10[%c0_25, %c0_26], %37 {strides = array<i32>} : memref<16x784xbf16, #tpu.memory_space<vmem>>, vector<16x784xbf16>,
    return
  }
  func.func @transform_0(%arg0: i32) -> (i32, i32) {
    %c0_i32 = arith.constant 0 : i32
    %c0_i32_0 = arith.constant 0 : i32
    return %arg0, %c0_i32 : i32, i32
  }
  func.func @transform_1(%arg0: i32) -> (i32, i32) {
    %c0_i32 = arith.constant 0 : i32
    %c0_i32_0 = arith.constant 0 : i32
    %c0_i32_1 = arith.constant 0 : i32
    return %c0_i32, %c0_i32_0 : i32, i32
  }
  func.func @transform_2(%arg0: i32) -> (i32, i32) {
    %c0_i32 = arith.constant 0 : i32
    %c0_i32_0 = arith.constant 0 : i32
    %c0_i32_1 = arith.constant 0 : i32
    return %c0_i32, %c0_i32_0 : i32, i32
  }
  func.func @transform_3(%arg0: i32) -> (i32, i32) {
    %c0_i32 = arith.constant 0 : i32
    %c0_i32_0 = arith.constant 0 : i32
    %c0_i32_1 = arith.constant 0 : i32
    return %c0_i32, %c0_i32_0 : i32, i32
  }
  func.func @transform_4(%arg0: i32) -> (i32, i32) {
    %c0_i32 = arith.constant 0 : i32
    %c0_i32_0 = arith.constant 0 : i32
    %c0_i32_1 = arith.constant 0 : i32
    return %c0_i32, %c0_i32_0 : i32, i32
  }
  func.func @transform_5(%arg0: i32) -> (i32, i32) {
    %c0_i32 = arith.constant 0 : i32
    %c0_i32_0 = arith.constant 0 : i32
    %c0_i32_1 = arith.constant 0 : i32
    return %c0_i32, %c0_i32_0 : i32, i32
  }
  func.func @transform_6(%arg0: i32) -> (i32, i32) {
    %c0_i32 = arith.constant 0 : i32
    %c0_i32_0 = arith.constant 0 : i32
    %c0_i32_1 = arith.constant 0 : i32
    return %c0_i32, %c0_i32_0 : i32, i32
  }
  func.func @transform_7(%arg0: i32) -> (i32, i32) {
    %c0_i32 = arith.constant 0 : i32
    %c0_i32_0 = arith.constant 0 : i32
    %c0_i32_1 = arith.constant 0 : i32
    return %c0_i32, %c0_i32_0 : i32, i32
  }
  func.func @transform_8(%arg0: i32) -> (i32, i32) {
    %c0_i32 = arith.constant 0 : i32
    %c0_i32_0 = arith.constant 0 : i32
    %c0_i32_1 = arith.constant 0 : i32
    return %c0_i32, %c0_i32_0 : i32, i32
  }
  func.func @transform_9(%arg0: i32) -> (i32, i32) {
    %c0_i32 = arith.constant 0 : i32
    %c0_i32_0 = arith.constant 0 : i32
    return %arg0, %c0_i32 : i32, i32
  }
}

module attributes {stable_mosaic.version = 11 : i64} {
  func.func @autoencoder_kernel(%arg0: i32, %arg1: memref<16x784xf32, #tpu.memory_space<vmem>>, %arg2: memref<784x256xbf16, #tpu.memory_space<vmem>>, %arg3: memref<1x256xf32, #tpu.memory_space<vmem>>, %arg4: memref<256x64xbf16, #tpu.memory_space<vmem>>, %arg5: memref<1x64xf32, #tpu.memory_space<vmem>>, %arg6: memref<64x256xbf16, #tpu.memory_space<vmem>>, %arg7: memref<1x256xf32, #tpu.memory_space<vmem>>, %arg8: memref<256x784xbf16, #tpu.memory_space<vmem>>, %arg9: memref<1x784xf32, #tpu.memory_space<vmem>>, %arg10: memref<16x784xbf16, #tpu.memory_space<vmem>>) attributes {dimension_semantics = [#tpu.dimension_semantics<parallel>], iteration_bounds = array<i64: 1>, scalar_prefetch = 0 : i64, scratch_operands = 0 : i64, tpu.core_type = #tpu.core_type<tc>, window_params = [{transform_indices = @transform_0, window_bounds = array<i64: 16, 784>}, {pipeline_mode = #tpu.pipeline_mode<synchronous>, transform_indices = @transform_1, window_bounds = array<i64: 784, 256>}, {pipeline_mode = #tpu.pipeline_mode<synchronous>, transform_indices = @transform_2, window_bounds = array<i64: 1, 256>}, {pipeline_mode = #tpu.pipeline_mode<synchronous>, transform_indices = @transform_3, window_bounds = array<i64: 256, 64>}, {pipeline_mode = #tpu.pipeline_mode<synchronous>, transform_indices = @transform_4, window_bounds = array<i64: 1, 64>}, {pipeline_mode = #tpu.pipeline_mode<synchronous>, transform_indices = @transform_5, window_bounds = array<i64: 64, 256>}, {pipeline_mode = #tpu.pipeline_mode<synchronous>, transform_indices = @transform_6, window_bounds = array<i64: 1, 256>}, {pipeline_mode = #tpu.pipeline_mode<synchronous>, transform_indices = @transform_7, window_bounds = array<i64: 256, 784>}, {pipeline_mode = #tpu.pipeline_mode<synchronous>, transform_indices = @transform_8, window_bounds = array<i64: 1, 784>}, {transform_indices = @transform_9, window_bounds = array<i64: 16, 784>}]} {
    %c0 = arith.constant 0 : index
    %c0_0 = arith.constant 0 : index
    %0 = vector.load %arg1[%c0, %c0_0] : memref<16x784xf32, #tpu.memory_space<vmem>>, vector<16x784xf32>
    %1 = arith.truncf %0 : vector<16x784xf32> to vector<16x784xbf16>
    %c0_1 = arith.constant 0 : index
    %c0_2 = arith.constant 0 : index
    %2 = vector.load %arg2[%c0_1, %c0_2] : memref<784x256xbf16, #tpu.memory_space<vmem>>, vector<784x256xbf16>
    %cst = arith.constant dense<0.000000e+00> : vector<16x256xf32>
    %3 = tpu.matmul %1, %2, %cst {dimension_numbers = #tpu.dot_dimension_numbers<[1], [0], [0], [1], [0, 0, 1, 1], [], []>} : vector<16x784xbf16>, vector<784x256xbf16>, vector<16x256xf32> -> vector<16x256xf32>
    %c0_3 = arith.constant 0 : index
    %c0_4 = arith.constant 0 : index
    %4 = vector.load %arg3[%c0_3, %c0_4] : memref<1x256xf32, #tpu.memory_space<vmem>>, vector<1x256xf32>
    %5 = vector.broadcast %4 : vector<1x256xf32> to vector<16x256xf32>
    %6 = arith.addf %3, %5 : vector<16x256xf32>
    %cst_5 = arith.constant 0.000000e+00 : f32
    %7 = vector.broadcast %cst_5 : f32 to vector<16x256xf32>
    %8 = arith.maximumf %6, %7 : vector<16x256xf32>
    %9 = arith.truncf %8 : vector<16x256xf32> to vector<16x256xbf16>
    %c0_6 = arith.constant 0 : index
    %c0_7 = arith.constant 0 : index
    %10 = vector.load %arg4[%c0_6, %c0_7] : memref<256x64xbf16, #tpu.memory_space<vmem>>, vector<256x64xbf16>
    %cst_8 = arith.constant dense<0.000000e+00> : vector<16x64xf32>
    %11 = tpu.matmul %9, %10, %cst_8 {dimension_numbers = #tpu.dot_dimension_numbers<[1], [0], [0], [1], [0, 0, 1, 1], [], []>} : vector<16x256xbf16>, vector<256x64xbf16>, vector<16x64xf32> -> vector<16x64xf32>
    %c0_9 = arith.constant 0 : index
    %c0_10 = arith.constant 0 : index
    %12 = vector.load %arg5[%c0_9, %c0_10] : memref<1x64xf32, #tpu.memory_space<vmem>>, vector<1x64xf32>
    %13 = vector.broadcast %12 : vector<1x64xf32> to vector<16x64xf32>
    %14 = arith.addf %11, %13 : vector<16x64xf32>
    %cst_11 = arith.constant 0.000000e+00 : f32
    %15 = vector.broadcast %cst_11 : f32 to vector<16x64xf32>
    %16 = arith.maximumf %14, %15 : vector<16x64xf32>
    %17 = arith.truncf %16 : vector<16x64xf32> to vector<16x64xbf16>
    %c0_12 = arith.constant 0 : index
    %c0_13 = arith.constant 0 : index
    %18 = vector.load %arg6[%c0_12, %c0_13] : memref<64x256xbf16, #tpu.memory_space<vmem>>, vector<64x256xbf16>
    %cst_14 = arith.constant dense<0.000000e+00> : vector<16x256xf32>
    %19 = tpu.matmul %17, %18, %cst_14 {dimension_numbers = #tpu.dot_dimension_numbers<[1], [0], [0], [1], [0, 0, 1, 1], [], []>} : vector<16x64xbf16>, vector<64x256xbf16>, vector<16x256xf32> -> vector<16x256xf32>
    %c0_15 = arith.constant 0 : index
    %c0_16 = arith.constant 0 : index
    %20 = vector.load %arg7[%c0_15, %c0_16] : memref<1x256xf32, #tpu.memory_space<vmem>>, vector<1x256xf32>
    %21 = vector.broadcast %20 : vector<1x256xf32> to vector<16x256xf32>
    %22 = arith.addf %19, %21 : vector<16x256xf32>
    %cst_17 = arith.constant 0.000000e+00 : f32
    %23 = vector.broadcast %cst_17 : f32 to vector<16x256xf32>
    %24 = arith.maximumf %22, %23 : vector<16x256xf32>
    %25 = arith.truncf %24 : vector<16x256xf32> to vector<16x256xbf16>
    %c0_18 = arith.constant 0 : index
    %c0_19 = arith.constant 0 : index
    %26 = vector.load %arg8[%c0_18, %c0_19] : memref<256x784xbf16, #tpu.memory_space<vmem>>, vector<256x784xbf16>
    %cst_20 = arith.constant dense<0.000000e+00> : vector<16x784xf32>
    %27 = tpu.matmul %25, %26, %cst_20 {dimension_numbers = #tpu.dot_dimension_numbers<[1], [0], [0], [1], [0, 0, 1, 1], [], []>} : vector<16x256xbf16>, vector<256x784xbf16>, vector<16x784xf32> -> vector<16x784xf32>
    %c0_21 = arith.constant 0 : index
    %c0_22 = arith.constant 0 : index
    %28 = vector.load %arg9[%c0_21, %c0_22] : memref<1x784xf32, #tpu.memory_space<vmem>>, vector<1x784xf32>
    %29 = vector.broadcast %28 : vector<1x784xf32> to vector<16x784xf32>
    %30 = arith.addf %27, %29 : vector<16x784xf32>
    %cst_23 = arith.constant 0.000000e+00 : f32
    %31 = vector.broadcast %cst_23 : f32 to vector<16x784xf32>
    %32 = arith.subf %31, %30 : vector<16x784xf32>
    %33 = math.exp %32 : vector<16x784xf32>
    %cst_24 = arith.constant 1.000000e+00 : f32
    %34 = vector.broadcast %cst_24 : f32 to vector<16x784xf32>
    %35 = arith.addf %34, %33 : vector<16x784xf32>
    %36 = tpu.reciprocal %35 {approx = true} : vector<16x784xf32> -> vector<16x784xf32>
    %37 = arith.truncf %36 : vector<16x784xf32> to vector<16x784xbf16>
    %c0_25 = arith.constant 0 : index
    %c0_26 = arith.constant 0 : index
    %38 = vector.load %arg10[%c0_25, %c0_26] : memref<16x784xbf16, #tpu.memory_space<vmem>>, vector<16x784xbf16>
    tpu.vector_store %arg10[%c0_25, %c0_26], %37 {strides = array<i32>} : memref<16x784xbf16, #tpu.memory_space<vmem>>, vector<16x784xbf16>,
    return
  }
  func.func @transform_0(%arg0: i32) -> (i32, i32) {
    %c0_i32 = arith.constant 0 : i32
    %c0_i32_0 = arith.constant 0 : i32
    return %arg0, %c0_i32 : i32, i32
  }
  func.func @transform_1(%arg0: i32) -> (i32, i32) {
    %c0_i32 = arith.constant 0 : i32
    %c0_i32_0 = arith.constant 0 : i32
    %c0_i32_1 = arith.constant 0 : i32
    return %c0_i32, %c0_i32_0 : i32, i32
  }
  func.func @transform_2(%arg0: i32) -> (i32, i32) {
    %c0_i32 = arith.constant 0 : i32
    %c0_i32_0 = arith.constant 0 : i32
    %c0_i32_1 = arith.constant 0 : i32
    return %c0_i32, %c0_i32_0 : i32, i32
  }
  func.func @transform_3(%arg0: i32) -> (i32, i32) {
    %c0_i32 = arith.constant 0 : i32
    %c0_i32_0 = arith.constant 0 : i32
    %c0_i32_1 = arith.constant 0 : i32
    return %c0_i32, %c0_i32_0 : i32, i32
  }
  func.func @transform_4(%arg0: i32) -> (i32, i32) {
    %c0_i32 = arith.constant 0 : i32
    %c0_i32_0 = arith.constant 0 : i32
    %c0_i32_1 = arith.constant 0 : i32
    return %c0_i32, %c0_i32_0 : i32, i32
  }
  func.func @transform_5(%arg0: i32) -> (i32, i32) {
    %c0_i32 = arith.constant 0 : i32
    %c0_i32_0 = arith.constant 0 : i32
    %c0_i32_1 = arith.constant 0 : i32
    return %c0_i32, %c0_i32_0 : i32, i32
  }
  func.func @transform_6(%arg0: i32) -> (i32, i32) {
    %c0_i32 = arith.constant 0 : i32
    %c0_i32_0 = arith.constant 0 : i32
    %c0_i32_1 = arith.constant 0 : i32
    return %c0_i32, %c0_i32_0 : i32, i32
  }
  func.func @transform_7(%arg0: i32) -> (i32, i32) {
    %c0_i32 = arith.constant 0 : i32
    %c0_i32_0 = arith.constant 0 : i32
    %c0_i32_1 = arith.constant 0 : i32
    return %c0_i32, %c0_i32_0 : i32, i32
  }
  func.func @transform_8(%arg0: i32) -> (i32, i32) {
    %c0_i32 = arith.constant 0 : i32
    %c0_i32_0 = arith.constant 0 : i32
    %c0_i32_1 = arith.constant 0 : i32
    return %c0_i32, %c0_i32_0 : i32, i32
  }
  func.func @transform_9(%arg0: i32) -> (i32, i32) {
    %c0_i32 = arith.constant 0 : i32
    %c0_i32_0 = arith.constant 0 : i32
    return %arg0, %c0_i32 : i32, i32
  }
}

</mosaic_0001>

<llo_original>
// kernel: tpu_custom_call.1
$region0: #{tpu_custom_call.1}
  #allocation0 [shape = 'u32[]', space=smem, size = 0x4, offset = 0x4, fixed_abs, tag = 'smem constant byte address 0x4 - core index']
  #allocation1 [shape = 'u32[72,128]{1,0:T(1,128)}', space=vmem, size = 0x9000, scoped, tag = 'internal scratch']
  %s0 = inlined_call_operand.vmem [shape: f32[16,784], index: 0, kind: input, shape index: {}]
  %s1 = inlined_call_operand.vmem [shape: bf16[784,256], index: 1, kind: input, shape index: {}]
  %s2 = inlined_call_operand.vmem [shape: f32[1,256], index: 2, kind: input, shape index: {}]
  %s3 = inlined_call_operand.vmem [shape: bf16[256,64], index: 3, kind: input, shape index: {}]
  %s4 = inlined_call_operand.vmem [shape: f32[1,64], index: 4, kind: input, shape index: {}]
  %s5 = inlined_call_operand.vmem [shape: bf16[64,256], index: 5, kind: input, shape index: {}]
  %s6 = inlined_call_operand.vmem [shape: f32[1,256], index: 6, kind: input, shape index: {}]
  %s7 = inlined_call_operand.vmem [shape: bf16[256,784], index: 7, kind: input, shape index: {}]
  %s8 = inlined_call_operand.vmem [shape: f32[1,784], index: 8, kind: input, shape index: {}]
  %s9 = inlined_call_operand.hbm [shape: bf16[16,784], index: 9, kind: output, shape index: {}]
  %s10 = sld [smem:[#allocation0]]
  $region46: #{tpu_custom_call.1} parent=0
    _
  %s12 = ssub.s32 1, %s10
  %s13 = scalar_select 0, %s12, %s10
  $region1: #{tpu_custom_call.1} parent=0
    #allocation2 [shape = 'u8[28672]{0}', space=vmem, size = 0x7000, scoped, tag = 'output window, operand 0, single buffered']
    #allocation3 [shape = 's32[1]{0}', space=sflag, size = 0x4, scoped, tag = 'scoped memory for tpu_custom_call.1']
    %14 = vsyncpa [#allocation3], 0
    // Predicated region
    $region2: #{tpu_custom_call.1} parent=1 // pred_check
      _
    $region3: #{tpu_custom_call.1} parent=1 // pred_check_branch
      %16 = sbr.rel (0) target = $region5
    $region4: #{tpu_custom_call.1} parent=1 // pred_region
      _
    $region5: #{tpu_custom_call.1} parent=1 // pred_fallthru
      _
    // Predicated region
    $region6: #{tpu_custom_call.1} parent=1 // pred_check
      _
    $region7: #{tpu_custom_call.1} parent=1 // pred_check_branch
      %18 = sbr.rel (0) target = $region9
    $region8: #{tpu_custom_call.1} parent=1 // pred_region
      _
    $region9: #{tpu_custom_call.1} parent=1 // pred_fallthru
      _
    // Predicated region
    $region10: #{tpu_custom_call.1} parent=1 // pred_check
      _
    $region11: #{tpu_custom_call.1} parent=1 // pred_check_branch
      %20 = sbr.rel (0) target = $region13
    $region12: #{tpu_custom_call.1} parent=1 // pred_region
      _
    $region13: #{tpu_custom_call.1} parent=1 // pred_fallthru
      _
    // Predicated region
    $region14: #{tpu_custom_call.1} parent=1 // pred_check
      _
    $region15: #{tpu_custom_call.1} parent=1 // pred_check_branch
      %22 = sbr.rel (0) target = $region17
    $region16: #{tpu_custom_call.1} parent=1 // pred_region
      _
    $region17: #{tpu_custom_call.1} parent=1 // pred_fallthru
      _
    // Predicated region
    $region18: #{tpu_custom_call.1} parent=1 // pred_check
      _
    $region19: #{tpu_custom_call.1} parent=1 // pred_check_branch
      %24 = sbr.rel (0) target = $region21
    $region20: #{tpu_custom_call.1} parent=1 // pred_region
      _
    $region21: #{tpu_custom_call.1} parent=1 // pred_fallthru
      _
    // Predicated region
    $region22: #{tpu_custom_call.1} parent=1 // pred_check
      _
    $region23: #{tpu_custom_call.1} parent=1 // pred_check_branch
      %26 = sbr.rel (0) target = $region25
    $region24: #{tpu_custom_call.1} parent=1 // pred_region
      _
    $region25: #{tpu_custom_call.1} parent=1 // pred_fallthru
      _
    // Predicated region
    $region26: #{tpu_custom_call.1} parent=1 // pred_check
      _
    $region27: #{tpu_custom_call.1} parent=1 // pred_check_branch
      %28 = sbr.rel (0) target = $region29
    $region28: #{tpu_custom_call.1} parent=1 // pred_region
      _
    $region29: #{tpu_custom_call.1} parent=1 // pred_fallthru
      _
    // Predicated region
    $region30: #{tpu_custom_call.1} parent=1 // pred_check
      _
    $region31: #{tpu_custom_call.1} parent=1 // pred_check_branch
      %30 = sbr.rel (0) target = $region33
    $region32: #{tpu_custom_call.1} parent=1 // pred_region
      _
    $region33: #{tpu_custom_call.1} parent=1 // pred_fallthru
      _
    // Predicated region
    $region34: #{tpu_custom_call.1} parent=1 // pred_check
      _
    $region35: #{tpu_custom_call.1} parent=1 // pred_check_branch
      %32 = sbr.rel (0) target = $region37
    $region36: #{tpu_custom_call.1} parent=1 // pred_region
      _
    $region37: #{tpu_custom_call.1} parent=1 // pred_fallthru
      _
    %v34 = vld [vmem:[%s0] sm:$0xff]
    %v35 = vld [vmem:[%s0 + $0x8] sm:$0xff]
    %v36 = vld [vmem:[%s0 + $0x10] sm:$0xff]
    %v37 = vld [vmem:[%s0 + $0x18] sm:$0xff]
    %v38 = vld [vmem:[%s0 + $0x20] sm:$0xff]
    %v39 = vld [vmem:[%s0 + $0x28] sm:$0xff]
    %v40 = vld [vmem:[%s0 + $0x30] sm:$0xff]
    %v41 = vld [vmem:[%s0 + $0x38] sm:$0xff]
    %v42 = vld [vmem:[%s0 + $0x40] sm:$0xff]
    %v43 = vld [vmem:[%s0 + $0x48] sm:$0xff]
    %v44 = vld [vmem:[%s0 + $0x50] sm:$0xff]
    %v45 = vld [vmem:[%s0 + $0x58] sm:$0xff]
    %v46 = vld [vmem:[%s0 + $0x60] sm:$0xff]
    %v47 = vld [vmem:[%s0 + $0x68] sm:$0xff]
    %v48 = vpack.c.bf16 %v41, %v34
    %v49 = vpack.c.bf16 %v42, %v35
    %v50 = vpack.c.bf16 %v43, %v36
    %v51 = vpack.c.bf16 %v44, %v37
    %v52 = vpack.c.bf16 %v45, %v38
    %v53 = vpack.c.bf16 %v46, %v39
    %v54 = vpack.c.bf16 %v47, %v40
    %v55 = vld [vmem:[%s1] sm:$0xff]
    %v56 = vld [vmem:[%s1 + $0x8] sm:$0xff]
    %v57 = vld [vmem:[%s1 + $0x10] sm:$0xff]
    %v58 = vld [vmem:[%s1 + $0x18] sm:$0xff]
    %v59 = vld [vmem:[%s1 + $0x20] sm:$0xff]
    %v60 = vld [vmem:[%s1 + $0x28] sm:$0xff]
    %v61 = vld [vmem:[%s1 + $0x30] sm:$0xff]
    %v62 = vld [vmem:[%s1 + $0x38] sm:$0xff]
    %v63 = vld [vmem:[%s1 + $0x40] sm:$0xff]
    %v64 = vld [vmem:[%s1 + $0x48] sm:$0xff]
    %v65 = vld [vmem:[%s1 + $0x50] sm:$0xff]
    %v66 = vld [vmem:[%s1 + $0x58] sm:$0xff]
    %v67 = vld [vmem:[%s1 + $0x60] sm:$0xff]
    %v68 = vld [vmem:[%s1 + $0x68] sm:$0xff]
    %v69 = vld [vmem:[%s1 + $0x70] sm:$0xff]
    %v70 = vld [vmem:[%s1 + $0x78] sm:$0xff]
    %v71 = vld [vmem:[%s1 + $0x80] sm:$0xff]
    %v72 = vld [vmem:[%s1 + $0x88] sm:$0xff]
    %v73 = vld [vmem:[%s1 + $0x90] sm:$0xff]
    %v74 = vld [vmem:[%s1 + $0x98] sm:$0xff]
    %v75 = vld [vmem:[%s1 + $0xa0] sm:$0xff]
    %v76 = vld [vmem:[%s1 + $0xa8] sm:$0xff]
    %v77 = vld [vmem:[%s1 + $0xb0] sm:$0xff]
    %v78 = vld [vmem:[%s1 + $0xb8] sm:$0xff]
    %v79 = vld [vmem:[%s1 + $0xc0] sm:$0xff]
    %v80 = vld [vmem:[%s1 + $0xc8] sm:$0xff]
    %v81 = vld [vmem:[%s1 + $0xd0] sm:$0xff]
    %v82 = vld [vmem:[%s1 + $0xd8] sm:$0xff]
    %v83 = vld [vmem:[%s1 + $0xe0] sm:$0xff]
    %v84 = vld [vmem:[%s1 + $0xe8] sm:$0xff]
    %v85 = vld [vmem:[%s1 + $0xf0] sm:$0xff]
    %v86 = vld [vmem:[%s1 + $0xf8] sm:$0xff]
    %v87 = vld [vmem:[%s1 + $0x100] sm:$0xff]
    %v88 = vld [vmem:[%s1 + $0x108] sm:$0xff]
    %v89 = vld [vmem:[%s1 + $0x110] sm:$0xff]
    %v90 = vld [vmem:[%s1 + $0x118] sm:$0xff]
    %v91 = vld [vmem:[%s1 + $0x120] sm:$0xff]
    %v92 = vld [vmem:[%s1 + $0x128] sm:$0xff]
    %v93 = vld [vmem:[%s1 + $0x130] sm:$0xff]
    %v94 = vld [vmem:[%s1 + $0x138] sm:$0xff]
    %v95 = vld [vmem:[%s1 + $0x140] sm:$0xff]
    %v96 = vld [vmem:[%s1 + $0x148] sm:$0xff]
    %v97 = vld [vmem:[%s1 + $0x150] sm:$0xff]
    %v98 = vld [vmem:[%s1 + $0x158] sm:$0xff]
    %v99 = vld [vmem:[%s1 + $0x160] sm:$0xff]
    %v100 = vld [vmem:[%s1 + $0x168] sm:$0xff]
    %v101 = vld [vmem:[%s1 + $0x170] sm:$0xff]
    %v102 = vld [vmem:[%s1 + $0x178] sm:$0xff]
    %v103 = vld [vmem:[%s1 + $0x180] sm:$0xff]
    %v104 = vld [vmem:[%s1 + $0x188] sm:$0xff]
    %v105 = vld [vmem:[%s1 + $0x190] sm:$0xff]
    %v106 = vld [vmem:[%s1 + $0x198] sm:$0xff]
    %v107 = vld [vmem:[%s1 + $0x1a0] sm:$0xff]
    %v108 = vld [vmem:[%s1 + $0x1a8] sm:$0xff]
    %v109 = vld [vmem:[%s1 + $0x1b0] sm:$0xff]
    %v110 = vld [vmem:[%s1 + $0x1b8] sm:$0xff]
    %v111 = vld [vmem:[%s1 + $0x1c0] sm:$0xff]
    %v112 = vld [vmem:[%s1 + $0x1c8] sm:$0xff]
    %v113 = vld [vmem:[%s1 + $0x1d0] sm:$0xff]
    %v114 = vld [vmem:[%s1 + $0x1d8] sm:$0xff]
    %v115 = vld [vmem:[%s1 + $0x1e0] sm:$0xff]
    %v116 = vld [vmem:[%s1 + $0x1e8] sm:$0xff]
    %v117 = vld [vmem:[%s1 + $0x1f0] sm:$0xff]
    %v118 = vld [vmem:[%s1 + $0x1f8] sm:$0xff]
    %v119 = vld [vmem:[%s1 + $0x200] sm:$0xff]
    %v120 = vld [vmem:[%s1 + $0x208] sm:$0xff]
    %v121 = vld [vmem:[%s1 + $0x210] sm:$0xff]
    %v122 = vld [vmem:[%s1 + $0x218] sm:$0xff]
    %v123 = vld [vmem:[%s1 + $0x220] sm:$0xff]
    %v124 = vld [vmem:[%s1 + $0x228] sm:$0xff]
    %v125 = vld [vmem:[%s1 + $0x230] sm:$0xff]
    %v126 = vld [vmem:[%s1 + $0x238] sm:$0xff]
    %v127 = vld [vmem:[%s1 + $0x240] sm:$0xff]
    %v128 = vld [vmem:[%s1 + $0x248] sm:$0xff]
    %v129 = vld [vmem:[%s1 + $0x250] sm:$0xff]
    %v130 = vld [vmem:[%s1 + $0x258] sm:$0xff]
    %v131 = vld [vmem:[%s1 + $0x260] sm:$0xff]
    %v132 = vld [vmem:[%s1 + $0x268] sm:$0xff]
    %v133 = vld [vmem:[%s1 + $0x270] sm:$0xff]
    %v134 = vld [vmem:[%s1 + $0x278] sm:$0xff]
    %v135 = vld [vmem:[%s1 + $0x280] sm:$0xff]
    %v136 = vld [vmem:[%s1 + $0x288] sm:$0xff]
    %v137 = vld [vmem:[%s1 + $0x290] sm:$0xff]
    %v138 = vld [vmem:[%s1 + $0x298] sm:$0xff]
    %v139 = vld [vmem:[%s1 + $0x2a0] sm:$0xff]
    %v140 = vld [vmem:[%s1 + $0x2a8] sm:$0xff]
    %v141 = vld [vmem:[%s1 + $0x2b0] sm:$0xff]
    %v142 = vld [vmem:[%s1 + $0x2b8] sm:$0xff]
    %v143 = vld [vmem:[%s1 + $0x2c0] sm:$0xff]
    %v144 = vld [vmem:[%s1 + $0x2c8] sm:$0xff]
    %v145 = vld [vmem:[%s1 + $0x2d0] sm:$0xff]
    %v146 = vld [vmem:[%s1 + $0x2d8] sm:$0xff]
    %v147 = vld [vmem:[%s1 + $0x2e0] sm:$0xff]
    %v148 = vld [vmem:[%s1 + $0x2e8] sm:$0xff]
    %v149 = vld [vmem:[%s1 + $0x2f0] sm:$0xff]
    %v150 = vld [vmem:[%s1 + $0x2f8] sm:$0xff]
    %v151 = vld [vmem:[%s1 + $0x300] sm:$0xff]
    %v152 = vld [vmem:[%s1 + $0x308] sm:$0xff]
    %v153 = vld [vmem:[%s2] sm:$0x3]
    %v155 = vperm.slane %v153, 0
    %v156 = vperm.slane %v153, 1
    %v257 = vunpack.c.l.b16 %v55
    %v258 = vunpack.c.h.b16 %v55
    %v259 = vunpack.c.l.b16 %v56
    %v260 = vunpack.c.h.b16 %v56
    %v261 = vunpack.c.l.b16 %v57
    %v262 = vunpack.c.h.b16 %v57
    %v263 = vunpack.c.l.b16 %v58
    %v264 = vunpack.c.h.b16 %v58
    %v265 = vunpack.c.l.b16 %v59
    %v266 = vunpack.c.h.b16 %v59
    %v267 = vunpack.c.l.b16 %v60
    %v268 = vunpack.c.h.b16 %v60
    %v269 = vunpack.c.l.b16 %v61
    %v270 = vunpack.c.h.b16 %v61
    %v271 = vunpack.c.l.b16 %v62
    %v272 = vunpack.c.h.b16 %v62
    %v273 = vunpack.c.l.b16 %v63
    %v274 = vunpack.c.h.b16 %v63
    %v275 = vunpack.c.l.b16 %v64
    %v276 = vunpack.c.h.b16 %v64
    %v277 = vunpack.c.l.b16 %v65
    %v278 = vunpack.c.h.b16 %v65
    %v279 = vunpack.c.l.b16 %v66
    %v280 = vunpack.c.h.b16 %v66
    %v281 = vunpack.c.l.b16 %v67
    %v282 = vunpack.c.h.b16 %v67
    %v283 = vunpack.c.l.b16 %v68
    %v284 = vunpack.c.h.b16 %v68
    %v285 = vunpack.c.l.b16 %v69
    %v286 = vunpack.c.h.b16 %v69
    %v287 = vunpack.c.l.b16 %v70
    %v288 = vunpack.c.h.b16 %v70
    %v289 = vunpack.c.l.b16 %v71
    %v290 = vunpack.c.h.b16 %v71
    %v291 = vunpack.c.l.b16 %v72
    %v292 = vunpack.c.h.b16 %v72
    %v293 = vunpack.c.l.b16 %v73
    %v294 = vunpack.c.h.b16 %v73
    %v295 = vunpack.c.l.b16 %v74
    %v296 = vunpack.c.h.b16 %v74
    %v297 = vunpack.c.l.b16 %v75
    %v298 = vunpack.c.h.b16 %v75
    %v299 = vunpack.c.l.b16 %v76
    %v300 = vunpack.c.h.b16 %v76
    %v301 = vunpack.c.l.b16 %v77
    %v302 = vunpack.c.h.b16 %v77
    %v303 = vunpack.c.l.b16 %v78
    %v304 = vunpack.c.h.b16 %v78
    %v305 = vunpack.c.l.b16 %v79
    %v306 = vunpack.c.h.b16 %v79
    %v307 = vunpack.c.l.b16 %v80
    %v308 = vunpack.c.h.b16 %v80
    %v309 = vunpack.c.l.b16 %v81
    %v310 = vunpack.c.h.b16 %v81
    %v311 = vunpack.c.l.b16 %v82
    %v312 = vunpack.c.h.b16 %v82
    %v313 = vunpack.c.l.b16 %v83
    %v314 = vunpack.c.h.b16 %v83
    %v315 = vunpack.c.l.b16 %v84
    %v316 = vunpack.c.h.b16 %v84
    %v317 = vunpack.c.l.b16 %v85
    %v318 = vunpack.c.h.b16 %v85
    %v319 = vunpack.c.l.b16 %v86
    %v320 = vunpack.c.h.b16 %v86
    %v321 = vunpack.c.l.b16 %v87
    %v322 = vunpack.c.h.b16 %v87
    %v323 = vunpack.c.l.b16 %v88
    %v324 = vunpack.c.h.b16 %v88
    %v325 = vunpack.c.l.b16 %v89
    %v326 = vunpack.c.h.b16 %v89
    %v327 = vunpack.c.l.b16 %v90
    %v328 = vunpack.c.h.b16 %v90
    %v329 = vunpack.c.l.b16 %v91
    %v330 = vunpack.c.h.b16 %v91
    %v331 = vunpack.c.l.b16 %v92
    %v332 = vunpack.c.h.b16 %v92
    %v333 = vunpack.c.l.b16 %v93
    %v334 = vunpack.c.h.b16 %v93
    %v335 = vunpack.c.l.b16 %v94
    %v336 = vunpack.c.h.b16 %v94
    %v337 = vunpack.c.l.b16 %v95
    %v338 = vunpack.c.h.b16 %v95
    %v339 = vunpack.c.l.b16 %v96
    %v340 = vunpack.c.h.b16 %v96
    %v341 = vunpack.c.l.b16 %v97
    %v342 = vunpack.c.h.b16 %v97
    %v343 = vunpack.c.l.b16 %v98
    %v344 = vunpack.c.h.b16 %v98
    %v345 = vunpack.c.l.b16 %v99
    %v346 = vunpack.c.h.b16 %v99
    %v347 = vunpack.c.l.b16 %v100
    %v348 = vunpack.c.h.b16 %v100
    %v349 = vunpack.c.l.b16 %v101
    %v350 = vunpack.c.h.b16 %v101
    %v351 = vunpack.c.l.b16 %v102
    %v352 = vunpack.c.h.b16 %v102
    %v353 = vunpack.c.l.b16 %v103
    %v354 = vunpack.c.h.b16 %v103
    %v355 = vunpack.c.l.b16 %v104
    %v356 = vunpack.c.h.b16 %v104
    %v357 = vunpack.c.l.b16 %v105
    %v358 = vunpack.c.h.b16 %v105
    %v359 = vunpack.c.l.b16 %v106
    %v360 = vunpack.c.h.b16 %v106
    %v361 = vunpack.c.l.b16 %v107
    %v362 = vunpack.c.h.b16 %v107
    %v363 = vunpack.c.l.b16 %v108
    %v364 = vunpack.c.h.b16 %v108
    %v365 = vunpack.c.l.b16 %v109
    %v366 = vunpack.c.h.b16 %v109
    %v367 = vunpack.c.l.b16 %v110
    %v368 = vunpack.c.h.b16 %v110
    %v369 = vunpack.c.l.b16 %v111
    %v370 = vunpack.c.h.b16 %v111
    %v371 = vunpack.c.l.b16 %v112
    %v372 = vunpack.c.h.b16 %v112
    %v373 = vunpack.c.l.b16 %v113
    %v374 = vunpack.c.h.b16 %v113
    %v375 = vunpack.c.l.b16 %v114
    %v376 = vunpack.c.h.b16 %v114
    %v377 = vunpack.c.l.b16 %v115
    %v378 = vunpack.c.h.b16 %v115
    %v379 = vunpack.c.l.b16 %v116
    %v380 = vunpack.c.h.b16 %v116
    %v381 = vunpack.c.l.b16 %v117
    %v382 = vunpack.c.h.b16 %v117
    %v383 = vunpack.c.l.b16 %v118
    %v384 = vunpack.c.h.b16 %v118
    %v385 = vunpack.c.l.b16 %v119
    %v386 = vunpack.c.h.b16 %v119
    %v387 = vunpack.c.l.b16 %v120
    %v388 = vunpack.c.h.b16 %v120
    %v389 = vunpack.c.l.b16 %v121
    %v390 = vunpack.c.h.b16 %v121
    %v391 = vunpack.c.l.b16 %v122
    %v392 = vunpack.c.h.b16 %v122
    %v393 = vunpack.c.l.b16 %v123
    %v394 = vunpack.c.h.b16 %v123
    %v395 = vunpack.c.l.b16 %v124
    %v396 = vunpack.c.h.b16 %v124
    %v397 = vunpack.c.l.b16 %v125
    %v398 = vunpack.c.h.b16 %v125
    %v399 = vunpack.c.l.b16 %v126
    %v400 = vunpack.c.h.b16 %v126
    %v401 = vunpack.c.l.b16 %v127
    %v402 = vunpack.c.h.b16 %v127
    %v403 = vunpack.c.l.b16 %v128
    %v404 = vunpack.c.h.b16 %v128
    %v405 = vunpack.c.l.b16 %v129
    %v406 = vunpack.c.h.b16 %v129
    %v407 = vunpack.c.l.b16 %v130
    %v408 = vunpack.c.h.b16 %v130
    %v409 = vunpack.c.l.b16 %v131
    %v410 = vunpack.c.h.b16 %v131
    %v411 = vunpack.c.l.b16 %v132
    %v412 = vunpack.c.h.b16 %v132
    %v413 = vunpack.c.l.b16 %v133
    %v414 = vunpack.c.h.b16 %v133
    %v415 = vunpack.c.l.b16 %v134
    %v416 = vunpack.c.h.b16 %v134
    %v417 = vunpack.c.l.b16 %v135
    %v418 = vunpack.c.h.b16 %v135
    %v419 = vunpack.c.l.b16 %v136
    %v420 = vunpack.c.h.b16 %v136
    %v421 = vunpack.c.l.b16 %v137
    %v422 = vunpack.c.h.b16 %v137
    %v423 = vunpack.c.l.b16 %v138
    %v424 = vunpack.c.h.b16 %v138
    %v425 = vunpack.c.l.b16 %v139
    %v426 = vunpack.c.h.b16 %v139
    %v427 = vunpack.c.l.b16 %v140
    %v428 = vunpack.c.h.b16 %v140
    %v429 = vunpack.c.l.b16 %v141
    %v430 = vunpack.c.h.b16 %v141
    %v431 = vunpack.c.l.b16 %v142
    %v432 = vunpack.c.h.b16 %v142
    %v433 = vunpack.c.l.b16 %v143
    %v434 = vunpack.c.h.b16 %v143
    %v435 = vunpack.c.l.b16 %v144
    %v436 = vunpack.c.h.b16 %v144
    %v437 = vunpack.c.l.b16 %v145
    %v438 = vunpack.c.h.b16 %v145
    %v439 = vunpack.c.l.b16 %v146
    %v440 = vunpack.c.h.b16 %v146
    %v441 = vunpack.c.l.b16 %v147
    %v442 = vunpack.c.h.b16 %v147
    %v443 = vunpack.c.l.b16 %v148
    %v444 = vunpack.c.h.b16 %v148
    %v445 = vunpack.c.l.b16 %v149
    %v446 = vunpack.c.h.b16 %v149
    %v447 = vunpack.c.l.b16 %v150
    %v448 = vunpack.c.h.b16 %v150
    %v449 = vunpack.c.l.b16 %v151
    %v450 = vunpack.c.h.b16 %v151
    %v451 = vunpack.c.l.b16 %v152
    %v452 = vunpack.c.h.b16 %v152
    %v453 = vpack.c.b16 %v259, %v257
    %v454 = vpack.c.b16 %v260, %v258
    %v455 = vpack.c.b16 %v263, %v261
    %v456 = vpack.c.b16 %v264, %v262
    %v457 = vpack.c.b16 %v267, %v265
    %v458 = vpack.c.b16 %v268, %v266
    %v459 = vpack.c.b16 %v271, %v269
    %v460 = vpack.c.b16 %v272, %v270
    %v461 = vpack.c.b16 %v275, %v273
    %v462 = vpack.c.b16 %v276, %v274
    %v463 = vpack.c.b16 %v279, %v277
    %v464 = vpack.c.b16 %v280, %v278
    %v465 = vpack.c.b16 %v283, %v281
    %v466 = vpack.c.b16 %v284, %v282
    %v467 = vpack.c.b16 %v287, %v285
    %v468 = vpack.c.b16 %v288, %v286
    %v469 = vpack.c.b16 %v291, %v289
    %v470 = vpack.c.b16 %v292, %v290
    %v471 = vpack.c.b16 %v295, %v293
    %v472 = vpack.c.b16 %v296, %v294
    %v473 = vpack.c.b16 %v299, %v297
    %v474 = vpack.c.b16 %v300, %v298
    %v475 = vpack.c.b16 %v303, %v301
    %v476 = vpack.c.b16 %v304, %v302
    %v477 = vpack.c.b16 %v307, %v305
    %v478 = vpack.c.b16 %v308, %v306
    %v479 = vpack.c.b16 %v311, %v309
    %v480 = vpack.c.b16 %v312, %v310
    %v481 = vpack.c.b16 %v315, %v313
    %v482 = vpack.c.b16 %v316, %v314
    %v483 = vpack.c.b16 %v319, %v317
    %v484 = vpack.c.b16 %v320, %v318
    %v485 = vpack.c.b16 %v323, %v321
    %v486 = vpack.c.b16 %v324, %v322
    %v487 = vpack.c.b16 %v327, %v325
    %v488 = vpack.c.b16 %v328, %v326
    %v489 = vpack.c.b16 %v331, %v329
    %v490 = vpack.c.b16 %v332, %v330
    %v491 = vpack.c.b16 %v335, %v333
    %v492 = vpack.c.b16 %v336, %v334
    %v493 = vpack.c.b16 %v339, %v337
    %v494 = vpack.c.b16 %v340, %v338
    %v495 = vpack.c.b16 %v343, %v341
    %v496 = vpack.c.b16 %v344, %v342
    %v497 = vpack.c.b16 %v347, %v345
    %v498 = vpack.c.b16 %v348, %v346
    %v499 = vpack.c.b16 %v351, %v349
    %v500 = vpack.c.b16 %v352, %v350
    %v501 = vpack.c.b16 %v355, %v353
    %v502 = vpack.c.b16 %v356, %v354
    %v503 = vpack.c.b16 %v359, %v357
    %v504 = vpack.c.b16 %v360, %v358
    %v505 = vpack.c.b16 %v363, %v361
    %v506 = vpack.c.b16 %v364, %v362
    %v507 = vpack.c.b16 %v367, %v365
    %v508 = vpack.c.b16 %v368, %v366
    %v509 = vpack.c.b16 %v371, %v369
    %v510 = vpack.c.b16 %v372, %v370
    %v511 = vpack.c.b16 %v375, %v373
    %v512 = vpack.c.b16 %v376, %v374
    %v513 = vpack.c.b16 %v379, %v377
    %v514 = vpack.c.b16 %v380, %v378
    %v515 = vpack.c.b16 %v383, %v381
    %v516 = vpack.c.b16 %v384, %v382
    %v517 = vpack.c.b16 %v387, %v385
    %v518 = vpack.c.b16 %v388, %v386
    %v519 = vpack.c.b16 %v391, %v389
    %v520 = vpack.c.b16 %v392, %v390
    %v521 = vpack.c.b16 %v395, %v393
    %v522 = vpack.c.b16 %v396, %v394
    %v523 = vpack.c.b16 %v399, %v397
    %v524 = vpack.c.b16 %v400, %v398
    %v525 = vpack.c.b16 %v403, %v401
    %v526 = vpack.c.b16 %v404, %v402
    %v527 = vpack.c.b16 %v407, %v405
    %v528 = vpack.c.b16 %v408, %v406
    %v529 = vpack.c.b16 %v411, %v409
    %v530 = vpack.c.b16 %v412, %v410
    %v531 = vpack.c.b16 %v415, %v413
    %v532 = vpack.c.b16 %v416, %v414
    %v533 = vpack.c.b16 %v419, %v417
    %v534 = vpack.c.b16 %v420, %v418
    %v535 = vpack.c.b16 %v423, %v421
    %v536 = vpack.c.b16 %v424, %v422
    %v537 = vpack.c.b16 %v427, %v425
    %v538 = vpack.c.b16 %v428, %v426
    %v539 = vpack.c.b16 %v431, %v429
    %v540 = vpack.c.b16 %v432, %v430
    %v541 = vpack.c.b16 %v435, %v433
    %v542 = vpack.c.b16 %v436, %v434
    %v543 = vpack.c.b16 %v439, %v437
    %v544 = vpack.c.b16 %v440, %v438
    %v545 = vpack.c.b16 %v443, %v441
    %v546 = vpack.c.b16 %v444, %v442
    %v547 = vpack.c.b16 %v447, %v445
    %v548 = vpack.c.b16 %v448, %v446
    %v549 = vpack.c.b16 %v451, %v449
    %v550 = vpack.c.b16 %v452, %v450
    %vm649 = vcmask 130048
    %v651 = vsel %vm649, %v54, 0
    %653 = vmatpush.bf16.msra.mxu0 %v467
    %654 = vmatpush.bf16.msra.mxu0 %v465
    %655 = vmatpush.bf16.msra.mxu0 %v463
    %656 = vmatpush.bf16.msra.mxu0 %v461
    %657 = vmatpush.bf16.msra.mxu0 %v459
    %658 = vmatpush.bf16.msra.mxu0 %v457
    %659 = vmatpush.bf16.msra.mxu0 %v455
    %660 = vmatpush.bf16.msra.mxu0 %v453
    %661 = vmatmul.bf16.gmra.mxu0 %v48
    %v662 = vpop.f32.mrf.mxu0
    %v663 = vadd.f32 %v155, %v662
    %v664 = vpop.f32.mrf.mxu0
    %v665 = vadd.f32 %v155, %v664
    %666 = vdwg.mxu0
    %667 = vmatpush.bf16.msra.mxu0 %v483
    %668 = vmatpush.bf16.msra.mxu0 %v481
    %669 = vmatpush.bf16.msra.mxu0 %v479
    %670 = vmatpush.bf16.msra.mxu0 %v477
    %671 = vmatpush.bf16.msra.mxu0 %v475
    %672 = vmatpush.bf16.msra.mxu0 %v473
    %673 = vmatpush.bf16.msra.mxu0 %v471
    %674 = vmatpush.bf16.msra.mxu0 %v469
    %675 = vmatmul.bf16.gmra.mxu0 %v49
    %v676 = vpop.f32.mrf.mxu0
    %v677 = vadd.f32 %v663, %v676
    %v678 = vpop.f32.mrf.mxu0
    %v679 = vadd.f32 %v665, %v678
    %680 = vdwg.mxu0
    %681 = vmatpush.bf16.msra.mxu0 %v499
    %682 = vmatpush.bf16.msra.mxu0 %v497
    %683 = vmatpush.bf16.msra.mxu0 %v495
    %684 = vmatpush.bf16.msra.mxu0 %v493
    %685 = vmatpush.bf16.msra.mxu0 %v491
    %686 = vmatpush.bf16.msra.mxu0 %v489
    %687 = vmatpush.bf16.msra.mxu0 %v487
    %688 = vmatpush.bf16.msra.mxu0 %v485
    %689 = vmatmul.bf16.gmra.mxu0 %v50
    %v690 = vpop.f32.mrf.mxu0
    %v691 = vadd.f32 %v677, %v690
    %v692 = vpop.f32.mrf.mxu0
    %v693 = vadd.f32 %v679, %v692
    %694 = vdwg.mxu0
    %695 = vmatpush.bf16.msra.mxu0 %v515
    %696 = vmatpush.bf16.msra.mxu0 %v513
    %697 = vmatpush.bf16.msra.mxu0 %v511
    %698 = vmatpush.bf16.msra.mxu0 %v509
    %699 = vmatpush.bf16.msra.mxu0 %v507
    %700 = vmatpush.bf16.msra.mxu0 %v505
    %701 = vmatpush.bf16.msra.mxu0 %v503
    %702 = vmatpush.bf16.msra.mxu0 %v501
    %703 = vmatmul.bf16.gmra.mxu0 %v51
    %v704 = vpop.f32.mrf.mxu0
    %v705 = vadd.f32 %v691, %v704
    %v706 = vpop.f32.mrf.mxu0
    %v707 = vadd.f32 %v693, %v706
    %708 = vdwg.mxu0
    %709 = vmatpush.bf16.msra.mxu0 %v531
    %710 = vmatpush.bf16.msra.mxu0 %v529
    %711 = vmatpush.bf16.msra.mxu0 %v527
    %712 = vmatpush.bf16.msra.mxu0 %v525
    %713 = vmatpush.bf16.msra.mxu0 %v523
    %714 = vmatpush.bf16.msra.mxu0 %v521
    %715 = vmatpush.bf16.msra.mxu0 %v519
    %716 = vmatpush.bf16.msra.mxu0 %v517
    %717 = vmatmul.bf16.gmra.mxu0 %v52
    %v718 = vpop.f32.mrf.mxu0
    %v719 = vadd.f32 %v705, %v718
    %v720 = vpop.f32.mrf.mxu0
    %v721 = vadd.f32 %v707, %v720
    %722 = vdwg.mxu0
    %723 = vmatpush.bf16.msra.mxu0 %v547
    %724 = vmatpush.bf16.msra.mxu0 %v545
    %725 = vmatpush.bf16.msra.mxu0 %v543
    %726 = vmatpush.bf16.msra.mxu0 %v541
    %727 = vmatpush.bf16.msra.mxu0 %v539
    %728 = vmatpush.bf16.msra.mxu0 %v537
    %729 = vmatpush.bf16.msra.mxu0 %v535
    %730 = vmatpush.bf16.msra.mxu0 %v533
    %731 = vmatmul.bf16.gmra.mxu0 %v53
    %v732 = vpop.f32.mrf.mxu0
    %v733 = vadd.f32 %v719, %v732
    %v734 = vpop.f32.mrf.mxu0
    %v735 = vadd.f32 %v721, %v734
    %736 = vdwg.mxu0
    %737 = vmatpush.bf16.msra.mxu0 0
    %738 = vmatpush.bf16.msra.mxu0 0
    %739 = vmatpush.bf16.msra.mxu0 0
    %740 = vmatpush.bf16.msra.mxu0 0
    %741 = vmatpush.bf16.msra.mxu0 0
    %742 = vmatpush.bf16.msra.mxu0 0
    %743 = vmatpush.bf16.msra.mxu0 0
    %744 = vmatpush.bf16.msra.mxu0 %v549
    %745 = vmatmul.bf16.gmra.mxu0 %v651
    %v746 = vpop.f32.mrf.mxu0
    %v747 = vadd.f32 %v733, %v746
    %v748 = vpop.f32.mrf.mxu0
    %v749 = vadd.f32 %v735, %v748
    %750 = vdwg.mxu0
    %751 = vmatpush.bf16.msra.mxu0 %v468
    %752 = vmatpush.bf16.msra.mxu0 %v466
    %753 = vmatpush.bf16.msra.mxu0 %v464
    %754 = vmatpush.bf16.msra.mxu0 %v462
    %755 = vmatpush.bf16.msra.mxu0 %v460
    %756 = vmatpush.bf16.msra.mxu0 %v458
    %757 = vmatpush.bf16.msra.mxu0 %v456
    %758 = vmatpush.bf16.msra.mxu0 %v454
    %759 = vmatmul.bf16.gmra.mxu0 %v48
    %v760 = vpop.f32.mrf.mxu0
    %v761 = vadd.f32 %v156, %v760
    %v762 = vpop.f32.mrf.mxu0
    %v763 = vadd.f32 %v156, %v762
    %764 = vdwg.mxu0
    %765 = vmatpush.bf16.msra.mxu0 %v484
    %766 = vmatpush.bf16.msra.mxu0 %v482
    %767 = vmatpush.bf16.msra.mxu0 %v480
    %768 = vmatpush.bf16.msra.mxu0 %v478
    %769 = vmatpush.bf16.msra.mxu0 %v476
    %770 = vmatpush.bf16.msra.mxu0 %v474
    %771 = vmatpush.bf16.msra.mxu0 %v472
    %772 = vmatpush.bf16.msra.mxu0 %v470
    %773 = vmatmul.bf16.gmra.mxu0 %v49
    %v774 = vpop.f32.mrf.mxu0
    %v775 = vadd.f32 %v761, %v774
    %v776 = vpop.f32.mrf.mxu0
    %v777 = vadd.f32 %v763, %v776
    %778 = vdwg.mxu0
    %779 = vmatpush.bf16.msra.mxu0 %v500
    %780 = vmatpush.bf16.msra.mxu0 %v498
    %781 = vmatpush.bf16.msra.mxu0 %v496
    %782 = vmatpush.bf16.msra.mxu0 %v494
    %783 = vmatpush.bf16.msra.mxu0 %v492
    %784 = vmatpush.bf16.msra.mxu0 %v490
    %785 = vmatpush.bf16.msra.mxu0 %v488
    %786 = vmatpush.bf16.msra.mxu0 %v486
    %787 = vmatmul.bf16.gmra.mxu0 %v50
    %v788 = vpop.f32.mrf.mxu0
    %v789 = vadd.f32 %v775, %v788
    %v790 = vpop.f32.mrf.mxu0
    %v791 = vadd.f32 %v777, %v790
    %792 = vdwg.mxu0
    %793 = vmatpush.bf16.msra.mxu0 %v516
    %794 = vmatpush.bf16.msra.mxu0 %v514
    %795 = vmatpush.bf16.msra.mxu0 %v512
    %796 = vmatpush.bf16.msra.mxu0 %v510
    %797 = vmatpush.bf16.msra.mxu0 %v508
    %798 = vmatpush.bf16.msra.mxu0 %v506
    %799 = vmatpush.bf16.msra.mxu0 %v504
    %800 = vmatpush.bf16.msra.mxu0 %v502
    %801 = vmatmul.bf16.gmra.mxu0 %v51
    %v802 = vpop.f32.mrf.mxu0
    %v803 = vadd.f32 %v789, %v802
    %v804 = vpop.f32.mrf.mxu0
    %v805 = vadd.f32 %v791, %v804
    %806 = vdwg.mxu0
    %807 = vmatpush.bf16.msra.mxu0 %v532
    %808 = vmatpush.bf16.msra.mxu0 %v530
    %809 = vmatpush.bf16.msra.mxu0 %v528
    %810 = vmatpush.bf16.msra.mxu0 %v526
    %811 = vmatpush.bf16.msra.mxu0 %v524
    %812 = vmatpush.bf16.msra.mxu0 %v522
    %813 = vmatpush.bf16.msra.mxu0 %v520
    %814 = vmatpush.bf16.msra.mxu0 %v518
    %815 = vmatmul.bf16.gmra.mxu0 %v52
    %v816 = vpop.f32.mrf.mxu0
    %v817 = vadd.f32 %v803, %v816
    %v818 = vpop.f32.mrf.mxu0
    %v819 = vadd.f32 %v805, %v818
    %820 = vdwg.mxu0
    %821 = vmatpush.bf16.msra.mxu0 %v548
    %822 = vmatpush.bf16.msra.mxu0 %v546
    %823 = vmatpush.bf16.msra.mxu0 %v544
    %824 = vmatpush.bf16.msra.mxu0 %v542
    %825 = vmatpush.bf16.msra.mxu0 %v540
    %826 = vmatpush.bf16.msra.mxu0 %v538
    %827 = vmatpush.bf16.msra.mxu0 %v536
    %828 = vmatpush.bf16.msra.mxu0 %v534
    %829 = vmatmul.bf16.gmra.mxu0 %v53
    %v830 = vpop.f32.mrf.mxu0
    %v831 = vadd.f32 %v817, %v830
    %v832 = vpop.f32.mrf.mxu0
    %v833 = vadd.f32 %v819, %v832
    %834 = vdwg.mxu0
    %835 = vmatpush.bf16.msra.mxu0 0
    %836 = vmatpush.bf16.msra.mxu0 0
    %837 = vmatpush.bf16.msra.mxu0 0
    %838 = vmatpush.bf16.msra.mxu0 0
    %839 = vmatpush.bf16.msra.mxu0 0
    %840 = vmatpush.bf16.msra.mxu0 0
    %841 = vmatpush.bf16.msra.mxu0 0
    %842 = vmatpush.bf16.msra.mxu0 %v550
    %843 = vmatmul.bf16.gmra.mxu0 %v651
    %v844 = vpop.f32.mrf.mxu0
    %v845 = vadd.f32 %v831, %v844
    %v846 = vpop.f32.mrf.mxu0
    %v847 = vadd.f32 %v833, %v846
    %848 = vdwg.mxu0
    %v849 = vmax.f32 %v747, 0.0
    %v850 = vmax.f32 %v845, 0.0
    %v851 = vmax.f32 %v749, 0.0
    %v852 = vmax.f32 %v847, 0.0
    %v853 = vpack.c.bf16 %v851, %v849
    %v854 = vpack.c.bf16 %v852, %v850
    %v855 = vld [vmem:[%s3] sm:$0xf]
    %v856 = vld [vmem:[%s3 + $0x4] sm:$0xf]
    %v857 = vld [vmem:[%s3 + $0x8] sm:$0xf]
    %v858 = vld [vmem:[%s3 + $0xc] sm:$0xf]
    %v859 = vld [vmem:[%s3 + $0x10] sm:$0xf]
    %v860 = vld [vmem:[%s3 + $0x14] sm:$0xf]
    %v861 = vld [vmem:[%s3 + $0x18] sm:$0xf]
    %v862 = vld [vmem:[%s3 + $0x1c] sm:$0xf]
    %v863 = vld [vmem:[%s3 + $0x20] sm:$0xf]
    %v864 = vld [vmem:[%s3 + $0x24] sm:$0xf]
    %v865 = vld [vmem:[%s3 + $0x28] sm:$0xf]
    %v866 = vld [vmem:[%s3 + $0x2c] sm:$0xf]
    %v867 = vld [vmem:[%s3 + $0x30] sm:$0xf]
    %v868 = vld [vmem:[%s3 + $0x34] sm:$0xf]
    %v869 = vld [vmem:[%s3 + $0x38] sm:$0xf]
    %v870 = vld [vmem:[%s3 + $0x3c] sm:$0xf]
    %v871 = vld [vmem:[%s3 + $0x40] sm:$0xf]
    %v872 = vld [vmem:[%s3 + $0x44] sm:$0xf]
    %v873 = vld [vmem:[%s3 + $0x48] sm:$0xf]
    %v874 = vld [vmem:[%s3 + $0x4c] sm:$0xf]
    %v875 = vld [vmem:[%s3 + $0x50] sm:$0xf]
    %v876 = vld [vmem:[%s3 + $0x54] sm:$0xf]
    %v877 = vld [vmem:[%s3 + $0x58] sm:$0xf]
    %v878 = vld [vmem:[%s3 + $0x5c] sm:$0xf]
    %v879 = vld [vmem:[%s3 + $0x60] sm:$0xf]
    %v880 = vld [vmem:[%s3 + $0x64] sm:$0xf]
    %v881 = vld [vmem:[%s3 + $0x68] sm:$0xf]
    %v882 = vld [vmem:[%s3 + $0x6c] sm:$0xf]
    %v883 = vld [vmem:[%s3 + $0x70] sm:$0xf]
    %v884 = vld [vmem:[%s3 + $0x74] sm:$0xf]
    %v885 = vld [vmem:[%s3 + $0x78] sm:$0xf]
    %v886 = vld [vmem:[%s3 + $0x7c] sm:$0xf]
    %v887 = vld [vmem:[%s4] sm:$0x1]
    %v889 = vperm.slane %v887, 0
    %v923 = vunpack.c.l.b16 %v855
    %v924 = vunpack.c.l.b16 %v856
    %v925 = vunpack.c.l.b16 %v857
    %v926 = vunpack.c.l.b16 %v858
    %v927 = vunpack.c.l.b16 %v859
    %v928 = vunpack.c.l.b16 %v860
    %v929 = vunpack.c.l.b16 %v861
    %v930 = vunpack.c.l.b16 %v862
    %v931 = vunpack.c.l.b16 %v863
    %v932 = vunpack.c.l.b16 %v864
    %v933 = vunpack.c.l.b16 %v865
    %v934 = vunpack.c.l.b16 %v866
    %v935 = vunpack.c.l.b16 %v867
    %v936 = vunpack.c.l.b16 %v868
    %v937 = vunpack.c.l.b16 %v869
    %v938 = vunpack.c.l.b16 %v870
    %v939 = vunpack.c.l.b16 %v871
    %v940 = vunpack.c.l.b16 %v872
    %v941 = vunpack.c.l.b16 %v873
    %v942 = vunpack.c.l.b16 %v874
    %v943 = vunpack.c.l.b16 %v875
    %v944 = vunpack.c.l.b16 %v876
    %v945 = vunpack.c.l.b16 %v877
    %v946 = vunpack.c.l.b16 %v878
    %v947 = vunpack.c.l.b16 %v879
    %v948 = vunpack.c.l.b16 %v880
    %v949 = vunpack.c.l.b16 %v881
    %v950 = vunpack.c.l.b16 %v882
    %v951 = vunpack.c.l.b16 %v883
    %v952 = vunpack.c.l.b16 %v884
    %v953 = vunpack.c.l.b16 %v885
    %v954 = vunpack.c.l.b16 %v886
    %v955 = vpack.c.b16 %v924, %v923
    %v956 = vpack.c.b16 %v926, %v925
    %v957 = vpack.c.b16 %v928, %v927
    %v958 = vpack.c.b16 %v930, %v929
    %v959 = vpack.c.b16 %v932, %v931
    %v960 = vpack.c.b16 %v934, %v933
    %v961 = vpack.c.b16 %v936, %v935
    %v962 = vpack.c.b16 %v938, %v937
    %v963 = vpack.c.b16 %v940, %v939
    %v964 = vpack.c.b16 %v942, %v941
    %v965 = vpack.c.b16 %v944, %v943
    %v966 = vpack.c.b16 %v946, %v945
    %v967 = vpack.c.b16 %v948, %v947
    %v968 = vpack.c.b16 %v950, %v949
    %v969 = vpack.c.b16 %v952, %v951
    %v970 = vpack.c.b16 %v954, %v953
    %987 = vmatpush.bf16.msra.mxu0 %v962
    %988 = vmatpush.bf16.msra.mxu0 %v961
    %989 = vmatpush.bf16.msra.mxu0 %v960
    %990 = vmatpush.bf16.msra.mxu0 %v959
    %991 = vmatpush.bf16.msra.mxu0 %v958
    %992 = vmatpush.bf16.msra.mxu0 %v957
    %993 = vmatpush.bf16.msra.mxu0 %v956
    %994 = vmatpush.bf16.msra.mxu0 %v955
    %995 = vmatmul.bf16.gmra.mxu0 %v853
    %v996 = vpop.f32.mrf.mxu0
    %v997 = vadd.f32 %v889, %v996
    %v998 = vpop.f32.mrf.mxu0
    %v999 = vadd.f32 %v889, %v998
    %1000 = vdwg.mxu0
    %1001 = vmatpush.bf16.msra.mxu0 %v970
    %1002 = vmatpush.bf16.msra.mxu0 %v969
    %1003 = vmatpush.bf16.msra.mxu0 %v968
    %1004 = vmatpush.bf16.msra.mxu0 %v967
    %1005 = vmatpush.bf16.msra.mxu0 %v966
    %1006 = vmatpush.bf16.msra.mxu0 %v965
    %1007 = vmatpush.bf16.msra.mxu0 %v964
    %1008 = vmatpush.bf16.msra.mxu0 %v963
    %1009 = vmatmul.bf16.gmra.mxu0 %v854
    %v1010 = vpop.f32.mrf.mxu0
    %v1011 = vadd.f32 %v997, %v1010
    %v1012 = vpop.f32.mrf.mxu0
    %v1013 = vadd.f32 %v999, %v1012
    %1014 = vdwg.mxu0
    %v1015 = vmax.f32 %v1011, 0.0
    %v1016 = vmax.f32 %v1013, 0.0
    %v1017 = vpack.c.bf16 %v1016, %v1015
    %v1018 = vld [vmem:[%s5] sm:$0xff]
    %v1019 = vld [vmem:[%s5 + $0x8] sm:$0xff]
    %v1020 = vld [vmem:[%s5 + $0x10] sm:$0xff]
    %v1021 = vld [vmem:[%s5 + $0x18] sm:$0xff]
    %v1022 = vld [vmem:[%s5 + $0x20] sm:$0xff]
    %v1023 = vld [vmem:[%s5 + $0x28] sm:$0xff]
    %v1024 = vld [vmem:[%s5 + $0x30] sm:$0xff]
    %v1025 = vld [vmem:[%s5 + $0x38] sm:$0xff]
    %v1026 = vld [vmem:[%s6] sm:$0x3]
    %v1028 = vperm.slane %v1026, 0
    %v1029 = vperm.slane %v1026, 1
    %v1040 = vunpack.c.l.b16 %v1018
    %v1041 = vunpack.c.h.b16 %v1018
    %v1042 = vunpack.c.l.b16 %v1019
    %v1043 = vunpack.c.h.b16 %v1019
    %v1044 = vunpack.c.l.b16 %v1020
    %v1045 = vunpack.c.h.b16 %v1020
    %v1046 = vunpack.c.l.b16 %v1021
    %v1047 = vunpack.c.h.b16 %v1021
    %v1048 = vunpack.c.l.b16 %v1022
    %v1049 = vunpack.c.h.b16 %v1022
    %v1050 = vunpack.c.l.b16 %v1023
    %v1051 = vunpack.c.h.b16 %v1023
    %v1052 = vunpack.c.l.b16 %v1024
    %v1053 = vunpack.c.h.b16 %v1024
    %v1054 = vunpack.c.l.b16 %v1025
    %v1055 = vunpack.c.h.b16 %v1025
    %v1056 = vpack.c.b16 %v1042, %v1040
    %v1057 = vpack.c.b16 %v1043, %v1041
    %v1058 = vpack.c.b16 %v1046, %v1044
    %v1059 = vpack.c.b16 %v1047, %v1045
    %v1060 = vpack.c.b16 %v1050, %v1048
    %v1061 = vpack.c.b16 %v1051, %v1049
    %v1062 = vpack.c.b16 %v1054, %v1052
    %v1063 = vpack.c.b16 %v1055, %v1053
    %vm1072 = vcmask 523264
    %v1074 = vsel %vm1072, %v1017, 0
    %1076 = vmatpush.bf16.msra.mxu0 0
    %1077 = vmatpush.bf16.msra.mxu0 0
    %1078 = vmatpush.bf16.msra.mxu0 0
    %1079 = vmatpush.bf16.msra.mxu0 0
    %1080 = vmatpush.bf16.msra.mxu0 %v1062
    %1081 = vmatpush.bf16.msra.mxu0 %v1060
    %1082 = vmatpush.bf16.msra.mxu0 %v1058
    %1083 = vmatpush.bf16.msra.mxu0 %v1056
    %1084 = vmatmul.bf16.gmra.mxu0 %v1074
    %v1085 = vpop.f32.mrf.mxu0
    %v1086 = vadd.f32 %v1028, %v1085
    %v1087 = vpop.f32.mrf.mxu0
    %v1088 = vadd.f32 %v1028, %v1087
    %1089 = vdwg.mxu0
    %1090 = vmatpush.bf16.msra.mxu0 0
    %1091 = vmatpush.bf16.msra.mxu0 0
    %1092 = vmatpush.bf16.msra.mxu0 0
    %1093 = vmatpush.bf16.msra.mxu0 0
    %1094 = vmatpush.bf16.msra.mxu0 %v1063
    %1095 = vmatpush.bf16.msra.mxu0 %v1061
    %1096 = vmatpush.bf16.msra.mxu0 %v1059
    %1097 = vmatpush.bf16.msra.mxu0 %v1057
    %1098 = vmatmul.bf16.gmra.mxu0 %v1074
    %v1099 = vpop.f32.mrf.mxu0
    %v1100 = vadd.f32 %v1029, %v1099
    %v1101 = vpop.f32.mrf.mxu0
    %v1102 = vadd.f32 %v1029, %v1101
    %1103 = vdwg.mxu0
    %v1104 = vmax.f32 %v1086, 0.0
    %v1105 = vmax.f32 %v1100, 0.0
    %v1106 = vmax.f32 %v1088, 0.0
    %v1107 = vmax.f32 %v1102, 0.0
    %v1108 = vpack.c.bf16 %v1106, %v1104
    %v1109 = vpack.c.bf16 %v1107, %v1105
    %v1110 = vld [vmem:[%s7] sm:$0xff]
    %v1111 = vld [vmem:[%s7 + $0x8] sm:$0xff]
    %v1112 = vld [vmem:[%s7 + $0x10] sm:$0xff]
    %v1113 = vld [vmem:[%s7 + $0x18] sm:$0xf]
    %v1114 = vld [vmem:[%s7 + $0x1c] sm:$0xff]
    %v1115 = vld [vmem:[%s7 + $0x24] sm:$0xff]
    %v1116 = vld [vmem:[%s7 + $0x2c] sm:$0xff]
    %v1117 = vld [vmem:[%s7 + $0x34] sm:$0xf]
    %v1118 = vld [vmem:[%s7 + $0x38] sm:$0xff]
    %v1119 = vld [vmem:[%s7 + $0x40] sm:$0xff]
    %v1120 = vld [vmem:[%s7 + $0x48] sm:$0xff]
    %v1121 = vld [vmem:[%s7 + $0x50] sm:$0xf]
    %v1122 = vld [vmem:[%s7 + $0x54] sm:$0xff]
    %v1123 = vld [vmem:[%s7 + $0x5c] sm:$0xff]
    %v1124 = vld [vmem:[%s7 + $0x64] sm:$0xff]
    %v1125 = vld [vmem:[%s7 + $0x6c] sm:$0xf]
    %v1126 = vld [vmem:[%s7 + $0x70] sm:$0xff]
    %v1127 = vld [vmem:[%s7 + $0x78] sm:$0xff]
    %v1128 = vld [vmem:[%s7 + $0x80] sm:$0xff]
    %v1129 = vld [vmem:[%s7 + $0x88] sm:$0xf]
    %v1130 = vld [vmem:[%s7 + $0x8c] sm:$0xff]
    %v1131 = vld [vmem:[%s7 + $0x94] sm:$0xff]
    %v1132 = vld [vmem:[%s7 + $0x9c] sm:$0xff]
    %v1133 = vld [vmem:[%s7 + $0xa4] sm:$0xf]
    %v1134 = vld [vmem:[%s7 + $0xa8] sm:$0xff]
    %v1135 = vld [vmem:[%s7 + $0xb0] sm:$0xff]
    %v1136 = vld [vmem:[%s7 + $0xb8] sm:$0xff]
    %v1137 = vld [vmem:[%s7 + $0xc0] sm:$0xf]
    %v1138 = vld [vmem:[%s7 + $0xc4] sm:$0xff]
    %v1139 = vld [vmem:[%s7 + $0xcc] sm:$0xff]
    %v1140 = vld [vmem:[%s7 + $0xd4] sm:$0xff]
    %v1141 = vld [vmem:[%s7 + $0xdc] sm:$0xf]
    %v1142 = vld [vmem:[%s7 + $0xe0] sm:$0xff]
    %v1143 = vld [vmem:[%s7 + $0xe8] sm:$0xff]
    %v1144 = vld [vmem:[%s7 + $0xf0] sm:$0xff]
    %v1145 = vld [vmem:[%s7 + $0xf8] sm:$0xf]
    %v1146 = vld [vmem:[%s7 + $0xfc] sm:$0xff]
    %v1147 = vld [vmem:[%s7 + $0x104] sm:$0xff]
    %v1148 = vld [vmem:[%s7 + $0x10c] sm:$0xff]
    %v1149 = vld [vmem:[%s7 + $0x114] sm:$0xf]
    %v1150 = vld [vmem:[%s7 + $0x118] sm:$0xff]
    %v1151 = vld [vmem:[%s7 + $0x120] sm:$0xff]
    %v1152 = vld [vmem:[%s7 + $0x128] sm:$0xff]
    %v1153 = vld [vmem:[%s7 + $0x130] sm:$0xf]
    %v1154 = vld [vmem:[%s7 + $0x134] sm:$0xff]
    %v1155 = vld [vmem:[%s7 + $0x13c] sm:$0xff]
    %v1156 = vld [vmem:[%s7 + $0x144] sm:$0xff]
    %v1157 = vld [vmem:[%s7 + $0x14c] sm:$0xf]
    %v1158 = vld [vmem:[%s7 + $0x150] sm:$0xff]
    %v1159 = vld [vmem:[%s7 + $0x158] sm:$0xff]
    %v1160 = vld [vmem:[%s7 + $0x160] sm:$0xff]
    %v1161 = vld [vmem:[%s7 + $0x168] sm:$0xf]
    %v1162 = vld [vmem:[%s7 + $0x16c] sm:$0xff]
    %v1163 = vld [vmem:[%s7 + $0x174] sm:$0xff]
    %v1164 = vld [vmem:[%s7 + $0x17c] sm:$0xff]
    %v1165 = vld [vmem:[%s7 + $0x184] sm:$0xf]
    %v1166 = vld [vmem:[%s7 + $0x188] sm:$0xff]
    %v1167 = vld [vmem:[%s7 + $0x190] sm:$0xff]
    %v1168 = vld [vmem:[%s7 + $0x198] sm:$0xff]
    %v1169 = vld [vmem:[%s7 + $0x1a0] sm:$0xf]
    %v1170 = vld [vmem:[%s7 + $0x1a4] sm:$0xff]
    %v1171 = vld [vmem:[%s7 + $0x1ac] sm:$0xff]
    %v1172 = vld [vmem:[%s7 + $0x1b4] sm:$0xff]
    %v1173 = vld [vmem:[%s7 + $0x1bc] sm:$0xf]
    %v1174 = vld [vmem:[%s7 + $0x1c0] sm:$0xff]
    %v1175 = vld [vmem:[%s7 + $0x1c8] sm:$0xff]
    %v1176 = vld [vmem:[%s7 + $0x1d0] sm:$0xff]
    %v1177 = vld [vmem:[%s7 + $0x1d8] sm:$0xf]
    %v1178 = vld [vmem:[%s7 + $0x1dc] sm:$0xff]
    %v1179 = vld [vmem:[%s7 + $0x1e4] sm:$0xff]
    %v1180 = vld [vmem:[%s7 + $0x1ec] sm:$0xff]
    %v1181 = vld [vmem:[%s7 + $0x1f4] sm:$0xf]
    %v1182 = vld [vmem:[%s7 + $0x1f8] sm:$0xff]
    %v1183 = vld [vmem:[%s7 + $0x200] sm:$0xff]
    %v1184 = vld [vmem:[%s7 + $0x208] sm:$0xff]
    %v1185 = vld [vmem:[%s7 + $0x210] sm:$0xf]
    %v1186 = vld [vmem:[%s7 + $0x214] sm:$0xff]
    %v1187 = vld [vmem:[%s7 + $0x21c] sm:$0xff]
    %v1188 = vld [vmem:[%s7 + $0x224] sm:$0xff]
    %v1189 = vld [vmem:[%s7 + $0x22c] sm:$0xf]
    %v1190 = vld [vmem:[%s7 + $0x230] sm:$0xff]
    %v1191 = vld [vmem:[%s7 + $0x238] sm:$0xff]
    %v1192 = vld [vmem:[%s7 + $0x240] sm:$0xff]
    %v1193 = vld [vmem:[%s7 + $0x248] sm:$0xf]
    %v1194 = vld [vmem:[%s7 + $0x24c] sm:$0xff]
    %v1195 = vld [vmem:[%s7 + $0x254] sm:$0xff]
    %v1196 = vld [vmem:[%s7 + $0x25c] sm:$0xff]
    %v1197 = vld [vmem:[%s7 + $0x264] sm:$0xf]
    %v1198 = vld [vmem:[%s7 + $0x268] sm:$0xff]
    %v1199 = vld [vmem:[%s7 + $0x270] sm:$0xff]
    %v1200 = vld [vmem:[%s7 + $0x278] sm:$0xff]
    %v1201 = vld [vmem:[%s7 + $0x280] sm:$0xf]
    %v1202 = vld [vmem:[%s7 + $0x284] sm:$0xff]
    %v1203 = vld [vmem:[%s7 + $0x28c] sm:$0xff]
    %v1204 = vld [vmem:[%s7 + $0x294] sm:$0xff]
    %v1205 = vld [vmem:[%s7 + $0x29c] sm:$0xf]
    %v1206 = vld [vmem:[%s7 + $0x2a0] sm:$0xff]
    %v1207 = vld [vmem:[%s7 + $0x2a8] sm:$0xff]
    %v1208 = vld [vmem:[%s7 + $0x2b0] sm:$0xff]
    %v1209 = vld [vmem:[%s7 + $0x2b8] sm:$0xf]
    %v1210 = vld [vmem:[%s7 + $0x2bc] sm:$0xff]
    %v1211 = vld [vmem:[%s7 + $0x2c4] sm:$0xff]
    %v1212 = vld [vmem:[%s7 + $0x2cc] sm:$0xff]
    %v1213 = vld [vmem:[%s7 + $0x2d4] sm:$0xf]
    %v1214 = vld [vmem:[%s7 + $0x2d8] sm:$0xff]
    %v1215 = vld [vmem:[%s7 + $0x2e0] sm:$0xff]
    %v1216 = vld [vmem:[%s7 + $0x2e8] sm:$0xff]
    %v1217 = vld [vmem:[%s7 + $0x2f0] sm:$0xf]
    %v1218 = vld [vmem:[%s7 + $0x2f4] sm:$0xff]
    %v1219 = vld [vmem:[%s7 + $0x2fc] sm:$0xff]
    %v1220 = vld [vmem:[%s7 + $0x304] sm:$0xff]
    %v1221 = vld [vmem:[%s7 + $0x30c] sm:$0xf]
    %v1222 = vld [vmem:[%s7 + $0x310] sm:$0xff]
    %v1223 = vld [vmem:[%s7 + $0x318] sm:$0xff]
    %v1224 = vld [vmem:[%s7 + $0x320] sm:$0xff]
    %v1225 = vld [vmem:[%s7 + $0x328] sm:$0xf]
    %v1226 = vld [vmem:[%s7 + $0x32c] sm:$0xff]
    %v1227 = vld [vmem:[%s7 + $0x334] sm:$0xff]
    %v1228 = vld [vmem:[%s7 + $0x33c] sm:$0xff]
    %v1229 = vld [vmem:[%s7 + $0x344] sm:$0xf]
    %v1230 = vld [vmem:[%s7 + $0x348] sm:$0xff]
    %v1231 = vld [vmem:[%s7 + $0x350] sm:$0xff]
    %v1232 = vld [vmem:[%s7 + $0x358] sm:$0xff]
    %v1233 = vld [vmem:[%s7 + $0x360] sm:$0xf]
    %v1234 = vld [vmem:[%s7 + $0x364] sm:$0xff]
    %v1235 = vld [vmem:[%s7 + $0x36c] sm:$0xff]
    %v1236 = vld [vmem:[%s7 + $0x374] sm:$0xff]
    %v1237 = vld [vmem:[%s7 + $0x37c] sm:$0xf]
    %v1238 = vld [vmem:[%s8] sm:$0x7f]
    %v1240 = vperm.slane %v1238, 0
    %v1241 = vperm.slane %v1238, 1
    %v1242 = vperm.slane %v1238, 2
    %v1243 = vperm.slane %v1238, 3
    %v1244 = vperm.slane %v1238, 4
    %v1245 = vperm.slane %v1238, 5
    %v1246 = vperm.slane %v1238, 6
    %v1382 = vunpack.c.l.b16 %v1110
    %v1383 = vunpack.c.h.b16 %v1110
    %v1384 = vunpack.c.l.b16 %v1111
    %v1385 = vunpack.c.h.b16 %v1111
    %v1386 = vunpack.c.l.b16 %v1112
    %v1387 = vunpack.c.h.b16 %v1112
    %v1388 = vunpack.c.l.b16 %v1113
    %v1389 = vunpack.c.l.b16 %v1114
    %v1390 = vunpack.c.h.b16 %v1114
    %v1391 = vunpack.c.l.b16 %v1115
    %v1392 = vunpack.c.h.b16 %v1115
    %v1393 = vunpack.c.l.b16 %v1116
    %v1394 = vunpack.c.h.b16 %v1116
    %v1395 = vunpack.c.l.b16 %v1117
    %v1396 = vunpack.c.l.b16 %v1118
    %v1397 = vunpack.c.h.b16 %v1118
    %v1398 = vunpack.c.l.b16 %v1119
    %v1399 = vunpack.c.h.b16 %v1119
    %v1400 = vunpack.c.l.b16 %v1120
    %v1401 = vunpack.c.h.b16 %v1120
    %v1402 = vunpack.c.l.b16 %v1121
    %v1403 = vunpack.c.l.b16 %v1122
    %v1404 = vunpack.c.h.b16 %v1122
    %v1405 = vunpack.c.l.b16 %v1123
    %v1406 = vunpack.c.h.b16 %v1123
    %v1407 = vunpack.c.l.b16 %v1124
    %v1408 = vunpack.c.h.b16 %v1124
    %v1409 = vunpack.c.l.b16 %v1125
    %v1410 = vunpack.c.l.b16 %v1126
    %v1411 = vunpack.c.h.b16 %v1126
    %v1412 = vunpack.c.l.b16 %v1127
    %v1413 = vunpack.c.h.b16 %v1127
    %v1414 = vunpack.c.l.b16 %v1128
    %v1415 = vunpack.c.h.b16 %v1128
    %v1416 = vunpack.c.l.b16 %v1129
    %v1417 = vunpack.c.l.b16 %v1130
    %v1418 = vunpack.c.h.b16 %v1130
    %v1419 = vunpack.c.l.b16 %v1131
    %v1420 = vunpack.c.h.b16 %v1131
    %v1421 = vunpack.c.l.b16 %v1132
    %v1422 = vunpack.c.h.b16 %v1132
    %v1423 = vunpack.c.l.b16 %v1133
    %v1424 = vunpack.c.l.b16 %v1134
    %v1425 = vunpack.c.h.b16 %v1134
    %v1426 = vunpack.c.l.b16 %v1135
    %v1427 = vunpack.c.h.b16 %v1135
    %v1428 = vunpack.c.l.b16 %v1136
    %v1429 = vunpack.c.h.b16 %v1136
    %v1430 = vunpack.c.l.b16 %v1137
    %v1431 = vunpack.c.l.b16 %v1138
    %v1432 = vunpack.c.h.b16 %v1138
    %v1433 = vunpack.c.l.b16 %v1139
    %v1434 = vunpack.c.h.b16 %v1139
    %v1435 = vunpack.c.l.b16 %v1140
    %v1436 = vunpack.c.h.b16 %v1140
    %v1437 = vunpack.c.l.b16 %v1141
    %v1438 = vunpack.c.l.b16 %v1142
    %v1439 = vunpack.c.h.b16 %v1142
    %v1440 = vunpack.c.l.b16 %v1143
    %v1441 = vunpack.c.h.b16 %v1143
    %v1442 = vunpack.c.l.b16 %v1144
    %v1443 = vunpack.c.h.b16 %v1144
    %v1444 = vunpack.c.l.b16 %v1145
    %v1445 = vunpack.c.l.b16 %v1146
    %v1446 = vunpack.c.h.b16 %v1146
    %v1447 = vunpack.c.l.b16 %v1147
    %v1448 = vunpack.c.h.b16 %v1147
    %v1449 = vunpack.c.l.b16 %v1148
    %v1450 = vunpack.c.h.b16 %v1148
    %v1451 = vunpack.c.l.b16 %v1149
    %v1452 = vunpack.c.l.b16 %v1150
    %v1453 = vunpack.c.h.b16 %v1150
    %v1454 = vunpack.c.l.b16 %v1151
    %v1455 = vunpack.c.h.b16 %v1151
    %v1456 = vunpack.c.l.b16 %v1152
    %v1457 = vunpack.c.h.b16 %v1152
    %v1458 = vunpack.c.l.b16 %v1153
    %v1459 = vunpack.c.l.b16 %v1154
    %v1460 = vunpack.c.h.b16 %v1154
    %v1461 = vunpack.c.l.b16 %v1155
    %v1462 = vunpack.c.h.b16 %v1155
    %v1463 = vunpack.c.l.b16 %v1156
    %v1464 = vunpack.c.h.b16 %v1156
    %v1465 = vunpack.c.l.b16 %v1157
    %v1466 = vunpack.c.l.b16 %v1158
    %v1467 = vunpack.c.h.b16 %v1158
    %v1468 = vunpack.c.l.b16 %v1159
    %v1469 = vunpack.c.h.b16 %v1159
    %v1470 = vunpack.c.l.b16 %v1160
    %v1471 = vunpack.c.h.b16 %v1160
    %v1472 = vunpack.c.l.b16 %v1161
    %v1473 = vunpack.c.l.b16 %v1162
    %v1474 = vunpack.c.h.b16 %v1162
    %v1475 = vunpack.c.l.b16 %v1163
    %v1476 = vunpack.c.h.b16 %v1163
    %v1477 = vunpack.c.l.b16 %v1164
    %v1478 = vunpack.c.h.b16 %v1164
    %v1479 = vunpack.c.l.b16 %v1165
    %v1480 = vunpack.c.l.b16 %v1166
    %v1481 = vunpack.c.h.b16 %v1166
    %v1482 = vunpack.c.l.b16 %v1167
    %v1483 = vunpack.c.h.b16 %v1167
    %v1484 = vunpack.c.l.b16 %v1168
    %v1485 = vunpack.c.h.b16 %v1168
    %v1486 = vunpack.c.l.b16 %v1169
    %v1487 = vunpack.c.l.b16 %v1170
    %v1488 = vunpack.c.h.b16 %v1170
    %v1489 = vunpack.c.l.b16 %v1171
    %v1490 = vunpack.c.h.b16 %v1171
    %v1491 = vunpack.c.l.b16 %v1172
    %v1492 = vunpack.c.h.b16 %v1172
    %v1493 = vunpack.c.l.b16 %v1173
    %v1494 = vunpack.c.l.b16 %v1174
    %v1495 = vunpack.c.h.b16 %v1174
    %v1496 = vunpack.c.l.b16 %v1175
    %v1497 = vunpack.c.h.b16 %v1175
    %v1498 = vunpack.c.l.b16 %v1176
    %v1499 = vunpack.c.h.b16 %v1176
    %v1500 = vunpack.c.l.b16 %v1177
    %v1501 = vunpack.c.l.b16 %v1178
    %v1502 = vunpack.c.h.b16 %v1178
    %v1503 = vunpack.c.l.b16 %v1179
    %v1504 = vunpack.c.h.b16 %v1179
    %v1505 = vunpack.c.l.b16 %v1180
    %v1506 = vunpack.c.h.b16 %v1180
    %v1507 = vunpack.c.l.b16 %v1181
    %v1508 = vunpack.c.l.b16 %v1182
    %v1509 = vunpack.c.h.b16 %v1182
    %v1510 = vunpack.c.l.b16 %v1183
    %v1511 = vunpack.c.h.b16 %v1183
    %v1512 = vunpack.c.l.b16 %v1184
    %v1513 = vunpack.c.h.b16 %v1184
    %v1514 = vunpack.c.l.b16 %v1185
    %v1515 = vunpack.c.l.b16 %v1186
    %v1516 = vunpack.c.h.b16 %v1186
    %v1517 = vunpack.c.l.b16 %v1187
    %v1518 = vunpack.c.h.b16 %v1187
    %v1519 = vunpack.c.l.b16 %v1188
    %v1520 = vunpack.c.h.b16 %v1188
    %v1521 = vunpack.c.l.b16 %v1189
    %v1522 = vunpack.c.l.b16 %v1190
    %v1523 = vunpack.c.h.b16 %v1190
    %v1524 = vunpack.c.l.b16 %v1191
    %v1525 = vunpack.c.h.b16 %v1191
    %v1526 = vunpack.c.l.b16 %v1192
    %v1527 = vunpack.c.h.b16 %v1192
    %v1528 = vunpack.c.l.b16 %v1193
    %v1529 = vunpack.c.l.b16 %v1194
    %v1530 = vunpack.c.h.b16 %v1194
    %v1531 = vunpack.c.l.b16 %v1195
    %v1532 = vunpack.c.h.b16 %v1195
    %v1533 = vunpack.c.l.b16 %v1196
    %v1534 = vunpack.c.h.b16 %v1196
    %v1535 = vunpack.c.l.b16 %v1197
    %v1536 = vunpack.c.l.b16 %v1198
    %v1537 = vunpack.c.h.b16 %v1198
    %v1538 = vunpack.c.l.b16 %v1199
    %v1539 = vunpack.c.h.b16 %v1199
    %v1540 = vunpack.c.l.b16 %v1200
    %v1541 = vunpack.c.h.b16 %v1200
    %v1542 = vunpack.c.l.b16 %v1201
    %v1543 = vunpack.c.l.b16 %v1202
    %v1544 = vunpack.c.h.b16 %v1202
    %v1545 = vunpack.c.l.b16 %v1203
    %v1546 = vunpack.c.h.b16 %v1203
    %v1547 = vunpack.c.l.b16 %v1204
    %v1548 = vunpack.c.h.b16 %v1204
    %v1549 = vunpack.c.l.b16 %v1205
    %v1550 = vunpack.c.l.b16 %v1206
    %v1551 = vunpack.c.h.b16 %v1206
    %v1552 = vunpack.c.l.b16 %v1207
    %v1553 = vunpack.c.h.b16 %v1207
    %v1554 = vunpack.c.l.b16 %v1208
    %v1555 = vunpack.c.h.b16 %v1208
    %v1556 = vunpack.c.l.b16 %v1209
    %v1557 = vunpack.c.l.b16 %v1210
    %v1558 = vunpack.c.h.b16 %v1210
    %v1559 = vunpack.c.l.b16 %v1211
    %v1560 = vunpack.c.h.b16 %v1211
    %v1561 = vunpack.c.l.b16 %v1212
    %v1562 = vunpack.c.h.b16 %v1212
    %v1563 = vunpack.c.l.b16 %v1213
    %v1564 = vunpack.c.l.b16 %v1214
    %v1565 = vunpack.c.h.b16 %v1214
    %v1566 = vunpack.c.l.b16 %v1215
    %v1567 = vunpack.c.h.b16 %v1215
    %v1568 = vunpack.c.l.b16 %v1216
    %v1569 = vunpack.c.h.b16 %v1216
    %v1570 = vunpack.c.l.b16 %v1217
    %v1571 = vunpack.c.l.b16 %v1218
    %v1572 = vunpack.c.h.b16 %v1218
    %v1573 = vunpack.c.l.b16 %v1219
    %v1574 = vunpack.c.h.b16 %v1219
    %v1575 = vunpack.c.l.b16 %v1220
    %v1576 = vunpack.c.h.b16 %v1220
    %v1577 = vunpack.c.l.b16 %v1221
    %v1578 = vunpack.c.l.b16 %v1222
    %v1579 = vunpack.c.h.b16 %v1222
    %v1580 = vunpack.c.l.b16 %v1223
    %v1581 = vunpack.c.h.b16 %v1223
    %v1582 = vunpack.c.l.b16 %v1224
    %v1583 = vunpack.c.h.b16 %v1224
    %v1584 = vunpack.c.l.b16 %v1225
    %v1585 = vunpack.c.l.b16 %v1226
    %v1586 = vunpack.c.h.b16 %v1226
    %v1587 = vunpack.c.l.b16 %v1227
    %v1588 = vunpack.c.h.b16 %v1227
    %v1589 = vunpack.c.l.b16 %v1228
    %v1590 = vunpack.c.h.b16 %v1228
    %v1591 = vunpack.c.l.b16 %v1229
    %v1592 = vunpack.c.l.b16 %v1230
    %v1593 = vunpack.c.h.b16 %v1230
    %v1594 = vunpack.c.l.b16 %v1231
    %v1595 = vunpack.c.h.b16 %v1231
    %v1596 = vunpack.c.l.b16 %v1232
    %v1597 = vunpack.c.h.b16 %v1232
    %v1598 = vunpack.c.l.b16 %v1233
    %v1599 = vunpack.c.l.b16 %v1234
    %v1600 = vunpack.c.h.b16 %v1234
    %v1601 = vunpack.c.l.b16 %v1235
    %v1602 = vunpack.c.h.b16 %v1235
    %v1603 = vunpack.c.l.b16 %v1236
    %v1604 = vunpack.c.h.b16 %v1236
    %v1605 = vunpack.c.l.b16 %v1237
    %v1606 = vpack.c.b16 %v1389, %v1382
    %v1607 = vpack.c.b16 %v1390, %v1383
    %v1608 = vpack.c.b16 %v1391, %v1384
    %v1609 = vpack.c.b16 %v1392, %v1385
    %v1610 = vpack.c.b16 %v1393, %v1386
    %v1611 = vpack.c.b16 %v1394, %v1387
    %v1612 = vpack.c.b16 %v1395, %v1388
    %v1613 = vpack.c.b16 %v1403, %v1396
    %v1614 = vpack.c.b16 %v1404, %v1397
    %v1615 = vpack.c.b16 %v1405, %v1398
    %v1616 = vpack.c.b16 %v1406, %v1399
    %v1617 = vpack.c.b16 %v1407, %v1400
    %v1618 = vpack.c.b16 %v1408, %v1401
    %v1619 = vpack.c.b16 %v1409, %v1402
    %v1620 = vpack.c.b16 %v1417, %v1410
    %v1621 = vpack.c.b16 %v1418, %v1411
    %v1622 = vpack.c.b16 %v1419, %v1412
    %v1623 = vpack.c.b16 %v1420, %v1413
    %v1624 = vpack.c.b16 %v1421, %v1414
    %v1625 = vpack.c.b16 %v1422, %v1415
    %v1626 = vpack.c.b16 %v1423, %v1416
    %v1627 = vpack.c.b16 %v1431, %v1424
    %v1628 = vpack.c.b16 %v1432, %v1425
    %v1629 = vpack.c.b16 %v1433, %v1426
    %v1630 = vpack.c.b16 %v1434, %v1427
    %v1631 = vpack.c.b16 %v1435, %v1428
    %v1632 = vpack.c.b16 %v1436, %v1429
    %v1633 = vpack.c.b16 %v1437, %v1430
    %v1634 = vpack.c.b16 %v1445, %v1438
    %v1635 = vpack.c.b16 %v1446, %v1439
    %v1636 = vpack.c.b16 %v1447, %v1440
    %v1637 = vpack.c.b16 %v1448, %v1441
    %v1638 = vpack.c.b16 %v1449, %v1442
    %v1639 = vpack.c.b16 %v1450, %v1443
    %v1640 = vpack.c.b16 %v1451, %v1444
    %v1641 = vpack.c.b16 %v1459, %v1452
    %v1642 = vpack.c.b16 %v1460, %v1453
    %v1643 = vpack.c.b16 %v1461, %v1454
    %v1644 = vpack.c.b16 %v1462, %v1455
    %v1645 = vpack.c.b16 %v1463, %v1456
    %v1646 = vpack.c.b16 %v1464, %v1457
    %v1647 = vpack.c.b16 %v1465, %v1458
    %v1648 = vpack.c.b16 %v1473, %v1466
    %v1649 = vpack.c.b16 %v1474, %v1467
    %v1650 = vpack.c.b16 %v1475, %v1468
    %v1651 = vpack.c.b16 %v1476, %v1469
    %v1652 = vpack.c.b16 %v1477, %v1470
    %v1653 = vpack.c.b16 %v1478, %v1471
    %v1654 = vpack.c.b16 %v1479, %v1472
    %v1655 = vpack.c.b16 %v1487, %v1480
    %v1656 = vpack.c.b16 %v1488, %v1481
    %v1657 = vpack.c.b16 %v1489, %v1482
    %v1658 = vpack.c.b16 %v1490, %v1483
    %v1659 = vpack.c.b16 %v1491, %v1484
    %v1660 = vpack.c.b16 %v1492, %v1485
    %v1661 = vpack.c.b16 %v1493, %v1486
    %v1662 = vpack.c.b16 %v1501, %v1494
    %v1663 = vpack.c.b16 %v1502, %v1495
    %v1664 = vpack.c.b16 %v1503, %v1496
    %v1665 = vpack.c.b16 %v1504, %v1497
    %v1666 = vpack.c.b16 %v1505, %v1498
    %v1667 = vpack.c.b16 %v1506, %v1499
    %v1668 = vpack.c.b16 %v1507, %v1500
    %v1669 = vpack.c.b16 %v1515, %v1508
    %v1670 = vpack.c.b16 %v1516, %v1509
    %v1671 = vpack.c.b16 %v1517, %v1510
    %v1672 = vpack.c.b16 %v1518, %v1511
    %v1673 = vpack.c.b16 %v1519, %v1512
    %v1674 = vpack.c.b16 %v1520, %v1513
    %v1675 = vpack.c.b16 %v1521, %v1514
    %v1676 = vpack.c.b16 %v1529, %v1522
    %v1677 = vpack.c.b16 %v1530, %v1523
    %v1678 = vpack.c.b16 %v1531, %v1524
    %v1679 = vpack.c.b16 %v1532, %v1525
    %v1680 = vpack.c.b16 %v1533, %v1526
    %v1681 = vpack.c.b16 %v1534, %v1527
    %v1682 = vpack.c.b16 %v1535, %v1528
    %v1683 = vpack.c.b16 %v1543, %v1536
    %v1684 = vpack.c.b16 %v1544, %v1537
    %v1685 = vpack.c.b16 %v1545, %v1538
    %v1686 = vpack.c.b16 %v1546, %v1539
    %v1687 = vpack.c.b16 %v1547, %v1540
    %v1688 = vpack.c.b16 %v1548, %v1541
    %v1689 = vpack.c.b16 %v1549, %v1542
    %v1690 = vpack.c.b16 %v1557, %v1550
    %v1691 = vpack.c.b16 %v1558, %v1551
    %v1692 = vpack.c.b16 %v1559, %v1552
    %v1693 = vpack.c.b16 %v1560, %v1553
    %v1694 = vpack.c.b16 %v1561, %v1554
    %v1695 = vpack.c.b16 %v1562, %v1555
    %v1696 = vpack.c.b16 %v1563, %v1556
    %v1697 = vpack.c.b16 %v1571, %v1564
    %v1698 = vpack.c.b16 %v1572, %v1565
    %v1699 = vpack.c.b16 %v1573, %v1566
    %v1700 = vpack.c.b16 %v1574, %v1567
    %v1701 = vpack.c.b16 %v1575, %v1568
    %v1702 = vpack.c.b16 %v1576, %v1569
    %v1703 = vpack.c.b16 %v1577, %v1570
    %v1704 = vpack.c.b16 %v1585, %v1578
    %v1705 = vpack.c.b16 %v1586, %v1579
    %v1706 = vpack.c.b16 %v1587, %v1580
    %v1707 = vpack.c.b16 %v1588, %v1581
    %v1708 = vpack.c.b16 %v1589, %v1582
    %v1709 = vpack.c.b16 %v1590, %v1583
    %v1710 = vpack.c.b16 %v1591, %v1584
    %v1711 = vpack.c.b16 %v1599, %v1592
    %v1712 = vpack.c.b16 %v1600, %v1593
    %v1713 = vpack.c.b16 %v1601, %v1594
    %v1714 = vpack.c.b16 %v1602, %v1595
    %v1715 = vpack.c.b16 %v1603, %v1596
    %v1716 = vpack.c.b16 %v1604, %v1597
    %v1717 = vpack.c.b16 %v1605, %v1598
    %1830 = vmatpush.bf16.msra.mxu0 %v1655
    %1831 = vmatpush.bf16.msra.mxu0 %v1648
    %1832 = vmatpush.bf16.msra.mxu0 %v1641
    %1833 = vmatpush.bf16.msra.mxu0 %v1634
    %1834 = vmatpush.bf16.msra.mxu0 %v1627
    %1835 = vmatpush.bf16.msra.mxu0 %v1620
    %1836 = vmatpush.bf16.msra.mxu0 %v1613
    %1837 = vmatpush.bf16.msra.mxu0 %v1606
    %1838 = vmatmul.bf16.gmra.mxu0 %v1108
    %v1839 = vpop.f32.mrf.mxu0
    %v1840 = vadd.f32 %v1240, %v1839
    %v1841 = vpop.f32.mrf.mxu0
    %v1842 = vadd.f32 %v1240, %v1841
    %1843 = vdwg.mxu0
    %1844 = vmatpush.bf16.msra.mxu0 %v1711
    %1845 = vmatpush.bf16.msra.mxu0 %v1704
    %1846 = vmatpush.bf16.msra.mxu0 %v1697
    %1847 = vmatpush.bf16.msra.mxu0 %v1690
    %1848 = vmatpush.bf16.msra.mxu0 %v1683
    %1849 = vmatpush.bf16.msra.mxu0 %v1676
    %1850 = vmatpush.bf16.msra.mxu0 %v1669
    %1851 = vmatpush.bf16.msra.mxu0 %v1662
    %1852 = vmatmul.bf16.gmra.mxu0 %v1109
    %v1853 = vpop.f32.mrf.mxu0
    %v1854 = vadd.f32 %v1840, %v1853
    %v1855 = vpop.f32.mrf.mxu0
    %v1856 = vadd.f32 %v1842, %v1855
    %1857 = vdwg.mxu0
    %1858 = vmatpush.bf16.msra.mxu0 %v1656
    %1859 = vmatpush.bf16.msra.mxu0 %v1649
    %1860 = vmatpush.bf16.msra.mxu0 %v1642
    %1861 = vmatpush.bf16.msra.mxu0 %v1635
    %1862 = vmatpush.bf16.msra.mxu0 %v1628
    %1863 = vmatpush.bf16.msra.mxu0 %v1621
    %1864 = vmatpush.bf16.msra.mxu0 %v1614
    %1865 = vmatpush.bf16.msra.mxu0 %v1607
    %1866 = vmatmul.bf16.gmra.mxu0 %v1108
    %v1867 = vpop.f32.mrf.mxu0
    %v1868 = vadd.f32 %v1241, %v1867
    %v1869 = vpop.f32.mrf.mxu0
    %v1870 = vadd.f32 %v1241, %v1869
    %1871 = vdwg.mxu0
    %1872 = vmatpush.bf16.msra.mxu0 %v1712
    %1873 = vmatpush.bf16.msra.mxu0 %v1705
    %1874 = vmatpush.bf16.msra.mxu0 %v1698
    %1875 = vmatpush.bf16.msra.mxu0 %v1691
    %1876 = vmatpush.bf16.msra.mxu0 %v1684
    %1877 = vmatpush.bf16.msra.mxu0 %v1677
    %1878 = vmatpush.bf16.msra.mxu0 %v1670
    %1879 = vmatpush.bf16.msra.mxu0 %v1663
    %1880 = vmatmul.bf16.gmra.mxu0 %v1109
    %v1881 = vpop.f32.mrf.mxu0
    %v1882 = vadd.f32 %v1868, %v1881
    %v1883 = vpop.f32.mrf.mxu0
    %v1884 = vadd.f32 %v1870, %v1883
    %1885 = vdwg.mxu0
    %1886 = vmatpush.bf16.msra.mxu0 %v1657
    %1887 = vmatpush.bf16.msra.mxu0 %v1650
    %1888 = vmatpush.bf16.msra.mxu0 %v1643
    %1889 = vmatpush.bf16.msra.mxu0 %v1636
    %1890 = vmatpush.bf16.msra.mxu0 %v1629
    %1891 = vmatpush.bf16.msra.mxu0 %v1622
    %1892 = vmatpush.bf16.msra.mxu0 %v1615
    %1893 = vmatpush.bf16.msra.mxu0 %v1608
    %1894 = vmatmul.bf16.gmra.mxu0 %v1108
    %v1895 = vpop.f32.mrf.mxu0
    %v1896 = vadd.f32 %v1242, %v1895
    %v1897 = vpop.f32.mrf.mxu0
    %v1898 = vadd.f32 %v1242, %v1897
    %1899 = vdwg.mxu0
    %1900 = vmatpush.bf16.msra.mxu0 %v1713
    %1901 = vmatpush.bf16.msra.mxu0 %v1706
    %1902 = vmatpush.bf16.msra.mxu0 %v1699
    %1903 = vmatpush.bf16.msra.mxu0 %v1692
    %1904 = vmatpush.bf16.msra.mxu0 %v1685
    %1905 = vmatpush.bf16.msra.mxu0 %v1678
    %1906 = vmatpush.bf16.msra.mxu0 %v1671
    %1907 = vmatpush.bf16.msra.mxu0 %v1664
    %1908 = vmatmul.bf16.gmra.mxu0 %v1109
    %v1909 = vpop.f32.mrf.mxu0
    %v1910 = vadd.f32 %v1896, %v1909
    %v1911 = vpop.f32.mrf.mxu0
    %v1912 = vadd.f32 %v1898, %v1911
    %1913 = vdwg.mxu0
    %1914 = vmatpush.bf16.msra.mxu0 %v1658
    %1915 = vmatpush.bf16.msra.mxu0 %v1651
    %1916 = vmatpush.bf16.msra.mxu0 %v1644
    %1917 = vmatpush.bf16.msra.mxu0 %v1637
    %1918 = vmatpush.bf16.msra.mxu0 %v1630
    %1919 = vmatpush.bf16.msra.mxu0 %v1623
    %1920 = vmatpush.bf16.msra.mxu0 %v1616
    %1921 = vmatpush.bf16.msra.mxu0 %v1609
    %1922 = vmatmul.bf16.gmra.mxu0 %v1108
    %v1923 = vpop.f32.mrf.mxu0
    %v1924 = vadd.f32 %v1243, %v1923
    %v1925 = vpop.f32.mrf.mxu0
    %v1926 = vadd.f32 %v1243, %v1925
    %1927 = vdwg.mxu0
    %1928 = vmatpush.bf16.msra.mxu0 %v1714
    %1929 = vmatpush.bf16.msra.mxu0 %v1707
    %1930 = vmatpush.bf16.msra.mxu0 %v1700
    %1931 = vmatpush.bf16.msra.mxu0 %v1693
    %1932 = vmatpush.bf16.msra.mxu0 %v1686
    %1933 = vmatpush.bf16.msra.mxu0 %v1679
    %1934 = vmatpush.bf16.msra.mxu0 %v1672
    %1935 = vmatpush.bf16.msra.mxu0 %v1665
    %1936 = vmatmul.bf16.gmra.mxu0 %v1109
    %v1937 = vpop.f32.mrf.mxu0
    %v1938 = vadd.f32 %v1924, %v1937
    %v1939 = vpop.f32.mrf.mxu0
    %v1940 = vadd.f32 %v1926, %v1939
    %1941 = vdwg.mxu0
    %1942 = vmatpush.bf16.msra.mxu0 %v1659
    %1943 = vmatpush.bf16.msra.mxu0 %v1652
    %1944 = vmatpush.bf16.msra.mxu0 %v1645
    %1945 = vmatpush.bf16.msra.mxu0 %v1638
    %1946 = vmatpush.bf16.msra.mxu0 %v1631
    %1947 = vmatpush.bf16.msra.mxu0 %v1624
    %1948 = vmatpush.bf16.msra.mxu0 %v1617
    %1949 = vmatpush.bf16.msra.mxu0 %v1610
    %1950 = vmatmul.bf16.gmra.mxu0 %v1108
    %v1951 = vpop.f32.mrf.mxu0
    %v1952 = vadd.f32 %v1244, %v1951
    %v1953 = vpop.f32.mrf.mxu0
    %v1954 = vadd.f32 %v1244, %v1953
    %1955 = vdwg.mxu0
    %1956 = vmatpush.bf16.msra.mxu0 %v1715
    %1957 = vmatpush.bf16.msra.mxu0 %v1708
    %1958 = vmatpush.bf16.msra.mxu0 %v1701
    %1959 = vmatpush.bf16.msra.mxu0 %v1694
    %1960 = vmatpush.bf16.msra.mxu0 %v1687
    %1961 = vmatpush.bf16.msra.mxu0 %v1680
    %1962 = vmatpush.bf16.msra.mxu0 %v1673
    %1963 = vmatpush.bf16.msra.mxu0 %v1666
    %1964 = vmatmul.bf16.gmra.mxu0 %v1109
    %v1965 = vpop.f32.mrf.mxu0
    %v1966 = vadd.f32 %v1952, %v1965
    %v1967 = vpop.f32.mrf.mxu0
    %v1968 = vadd.f32 %v1954, %v1967
    %1969 = vdwg.mxu0
    %1970 = vmatpush.bf16.msra.mxu0 %v1660
    %1971 = vmatpush.bf16.msra.mxu0 %v1653
    %1972 = vmatpush.bf16.msra.mxu0 %v1646
    %1973 = vmatpush.bf16.msra.mxu0 %v1639
    %1974 = vmatpush.bf16.msra.mxu0 %v1632
    %1975 = vmatpush.bf16.msra.mxu0 %v1625
    %1976 = vmatpush.bf16.msra.mxu0 %v1618
    %1977 = vmatpush.bf16.msra.mxu0 %v1611
    %1978 = vmatmul.bf16.gmra.mxu0 %v1108
    %v1979 = vpop.f32.mrf.mxu0
    %v1980 = vadd.f32 %v1245, %v1979
    %v1981 = vpop.f32.mrf.mxu0
    %v1982 = vadd.f32 %v1245, %v1981
    %1983 = vdwg.mxu0
    %1984 = vmatpush.bf16.msra.mxu0 %v1716
    %1985 = vmatpush.bf16.msra.mxu0 %v1709
    %1986 = vmatpush.bf16.msra.mxu0 %v1702
    %1987 = vmatpush.bf16.msra.mxu0 %v1695
    %1988 = vmatpush.bf16.msra.mxu0 %v1688
    %1989 = vmatpush.bf16.msra.mxu0 %v1681
    %1990 = vmatpush.bf16.msra.mxu0 %v1674
    %1991 = vmatpush.bf16.msra.mxu0 %v1667
    %1992 = vmatmul.bf16.gmra.mxu0 %v1109
    %v1993 = vpop.f32.mrf.mxu0
    %v1994 = vadd.f32 %v1980, %v1993
    %v1995 = vpop.f32.mrf.mxu0
    %v1996 = vadd.f32 %v1982, %v1995
    %1997 = vdwg.mxu0
    %1998 = vmatpush.bf16.msra.mxu0 %v1661
    %1999 = vmatpush.bf16.msra.mxu0 %v1654
    %2000 = vmatpush.bf16.msra.mxu0 %v1647
    %2001 = vmatpush.bf16.msra.mxu0 %v1640
    %2002 = vmatpush.bf16.msra.mxu0 %v1633
    %2003 = vmatpush.bf16.msra.mxu0 %v1626
    %2004 = vmatpush.bf16.msra.mxu0 %v1619
    %2005 = vmatpush.bf16.msra.mxu0 %v1612
    %2006 = vmatmul.bf16.gmra.mxu0 %v1108
    %v2007 = vpop.f32.mrf.mxu0
    %v2008 = vadd.f32 %v1246, %v2007
    %v2009 = vpop.f32.mrf.mxu0
    %v2010 = vadd.f32 %v1246, %v2009
    %2011 = vdwg.mxu0
    %2012 = vmatpush.bf16.msra.mxu0 %v1717
    %2013 = vmatpush.bf16.msra.mxu0 %v1710
    %2014 = vmatpush.bf16.msra.mxu0 %v1703
    %2015 = vmatpush.bf16.msra.mxu0 %v1696
    %2016 = vmatpush.bf16.msra.mxu0 %v1689
    %2017 = vmatpush.bf16.msra.mxu0 %v1682
    %2018 = vmatpush.bf16.msra.mxu0 %v1675
    %2019 = vmatpush.bf16.msra.mxu0 %v1668
    %2020 = vmatmul.bf16.gmra.mxu0 %v1109
    %v2021 = vpop.f32.mrf.mxu0
    %v2022 = vadd.f32 %v2008, %v2021
    %v2023 = vpop.f32.mrf.mxu0
    %v2024 = vadd.f32 %v2010, %v2023
    %2025 = vdwg.mxu0
    %v2026 = vsub.f32 0.0, %v1854
    %v2027 = vsub.f32 0.0, %v1882
    %v2028 = vsub.f32 0.0, %v1910
    %v2029 = vsub.f32 0.0, %v1938
    %v2030 = vsub.f32 0.0, %v1966
    %v2031 = vsub.f32 0.0, %v1994
    %v2032 = vsub.f32 0.0, %v2022
    %v2033 = vsub.f32 0.0, %v1856
    %v2034 = vsub.f32 0.0, %v1884
    %v2035 = vsub.f32 0.0, %v1912
    %v2036 = vsub.f32 0.0, %v1940
    %v2037 = vsub.f32 0.0, %v1968
    %v2038 = vsub.f32 0.0, %v1996
    %v2039 = vsub.f32 0.0, %v2024
    %v2040 = vmul.f32 %v2026, 1.442695
    %v2041 = vpow.pop %v2040
    %v2042 = vmul.f32 %v2027, 1.442695
    %v2043 = vpow.pop %v2042
    %v2044 = vmul.f32 %v2028, 1.442695
    %v2045 = vpow.pop %v2044
    %v2046 = vmul.f32 %v2029, 1.442695
    %v2047 = vpow.pop %v2046
    %v2048 = vmul.f32 %v2030, 1.442695
    %v2049 = vpow.pop %v2048
    %v2050 = vmul.f32 %v2031, 1.442695
    %v2051 = vpow.pop %v2050
    %v2052 = vmul.f32 %v2032, 1.442695
    %v2053 = vpow.pop %v2052
    %v2054 = vmul.f32 %v2033, 1.442695
    %v2055 = vpow.pop %v2054
    %v2056 = vmul.f32 %v2034, 1.442695
    %v2057 = vpow.pop %v2056
    %v2058 = vmul.f32 %v2035, 1.442695
    %v2059 = vpow.pop %v2058
    %v2060 = vmul.f32 %v2036, 1.442695
    %v2061 = vpow.pop %v2060
    %v2062 = vmul.f32 %v2037, 1.442695
    %v2063 = vpow.pop %v2062
    %v2064 = vmul.f32 %v2038, 1.442695
    %v2065 = vpow.pop %v2064
    %v2066 = vmul.f32 %v2039, 1.442695
    %v2067 = vpow.pop %v2066
    %v2068 = vadd.f32 %v2041, 1.0
    %v2069 = vadd.f32 %v2043, 1.0
    %v2070 = vadd.f32 %v2045, 1.0
    %v2071 = vadd.f32 %v2047, 1.0
    %v2072 = vadd.f32 %v2049, 1.0
    %v2073 = vadd.f32 %v2051, 1.0
    %v2074 = vadd.f32 %v2053, 1.0
    %v2075 = vadd.f32 %v2055, 1.0
    %v2076 = vadd.f32 %v2057, 1.0
    %v2077 = vadd.f32 %v2059, 1.0
    %v2078 = vadd.f32 %v2061, 1.0
    %v2079 = vadd.f32 %v2063, 1.0
    %v2080 = vadd.f32 %v2065, 1.0
    %v2081 = vadd.f32 %v2067, 1.0
    %v2082 = vrcp.pop %v2068
    %v2083 = vrcp.pop %v2069
    %v2084 = vrcp.pop %v2070
    %v2085 = vrcp.pop %v2071
    %v2086 = vrcp.pop %v2072
    %v2087 = vrcp.pop %v2073
    %v2088 = vrcp.pop %v2074
    %v2089 = vrcp.pop %v2075
    %v2090 = vrcp.pop %v2076
    %v2091 = vrcp.pop %v2077
    %v2092 = vrcp.pop %v2078
    %v2093 = vrcp.pop %v2079
    %v2094 = vrcp.pop %v2080
    %v2095 = vrcp.pop %v2081
    %v2096 = vpack.c.bf16 %v2083, %v2082
    %v2097 = vpack.c.bf16 %v2085, %v2084
    %v2098 = vpack.c.bf16 %v2087, %v2086
    %v2099 = vpack.c.bf16 %v2088, %v2088
    %v2100 = vpack.c.bf16 %v2090, %v2089
    %v2101 = vpack.c.bf16 %v2092, %v2091
    %v2102 = vpack.c.bf16 %v2094, %v2093
    %v2103 = vpack.c.bf16 %v2095, %v2095
    %2104 = vst [vmem:[#allocation2] sm:$0xff] %v2096
    %2105 = vst [vmem:[#allocation2 + $0x8] sm:$0xff] %v2097
    %2106 = vst [vmem:[#allocation2 + $0x10] sm:$0xff] %v2098
    %vm2107 = vcmask 125952
    %2108 = vst.msk [vmem:[#allocation2 + $0x18] sm:$0xf] %vm2107, %v2099
    %2109 = vst [vmem:[#allocation2 + $0x1c] sm:$0xff] %v2100
    %2110 = vst [vmem:[#allocation2 + $0x24] sm:$0xff] %v2101
    %2111 = vst [vmem:[#allocation2 + $0x2c] sm:$0xff] %v2102
    %2112 = vst.msk [vmem:[#allocation2 + $0x34] sm:$0xf] %vm2107, %v2103
    // Predicated region
    $region38: #{tpu_custom_call.1} parent=1 // pred_check
      _
    $region39: #{tpu_custom_call.1} parent=1 // pred_check_branch
      %2114 = sbr.rel (0) target = $region41
    $region40: #{tpu_custom_call.1} parent=1 // pred_region
      %2116 = vsyncadd [#allocation3], 0
      %s2117 = sshll.u32 [#allocation2], 4
      %s2118 = int_to_ptr.vmem [resolvable:$true] %s2117
      %s2119 = sshll.u32 %s9, 4
      %s2120 = int_to_ptr.hbm [resolvable:$true] %s2119
      %2125 = dma.vmem_to_hbm [thread:$0]  %s2118, 896, %s2120, [#allocation3], 448, 448, 28
    $region41: #{tpu_custom_call.1} parent=1 // pred_fallthru
      _
    // Predicated region
    $region42: #{tpu_custom_call.1} parent=1 // pred_check
      _
    $region43: #{tpu_custom_call.1} parent=1 // pred_check_branch
      %2127 = sbr.rel (0) target = $region45
    $region44: #{tpu_custom_call.1} parent=1 // pred_region
      %2129 = dma.done [#allocation3], 896
    $region45: #{tpu_custom_call.1} parent=1 // pred_fallthru
      _
    %2130 = vsyncpa [#allocation3], 1

// kernel: tpu_custom_call.1
$region0: #{tpu_custom_call.1}
  #allocation0 [shape = 'u32[]', space=smem, size = 0x4, offset = 0x4, fixed_abs, tag = 'smem constant byte address 0x4 - core index']
  #allocation1 [shape = 'u32[72,128]{1,0:T(1,128)}', space=vmem, size = 0x9000, scoped, tag = 'internal scratch']
  %s0 = inlined_call_operand.vmem [shape: f32[16,784], index: 0, kind: input, shape index: {}]
  %s1 = inlined_call_operand.vmem [shape: bf16[784,256], index: 1, kind: input, shape index: {}]
  %s2 = inlined_call_operand.vmem [shape: f32[1,256], index: 2, kind: input, shape index: {}]
  %s3 = inlined_call_operand.vmem [shape: bf16[256,64], index: 3, kind: input, shape index: {}]
  %s4 = inlined_call_operand.vmem [shape: f32[1,64], index: 4, kind: input, shape index: {}]
  %s5 = inlined_call_operand.vmem [shape: bf16[64,256], index: 5, kind: input, shape index: {}]
  %s6 = inlined_call_operand.vmem [shape: f32[1,256], index: 6, kind: input, shape index: {}]
  %s7 = inlined_call_operand.vmem [shape: bf16[256,784], index: 7, kind: input, shape index: {}]
  %s8 = inlined_call_operand.vmem [shape: f32[1,784], index: 8, kind: input, shape index: {}]
  %s9 = inlined_call_operand.hbm [shape: bf16[16,784], index: 9, kind: output, shape index: {}]
  %s10 = sld [smem:[#allocation0]]
  $region46: #{tpu_custom_call.1} parent=0
    _
  %s12 = ssub.s32 1, %s10
  %s13 = scalar_select 0, %s12, %s10
  $region1: #{tpu_custom_call.1} parent=0
    #allocation2 [shape = 'u8[28672]{0}', space=vmem, size = 0x7000, scoped, tag = 'output window, operand 0, single buffered']
    #allocation3 [shape = 's32[1]{0}', space=sflag, size = 0x4, scoped, tag = 'scoped memory for tpu_custom_call.1']
    %14 = vsyncpa [#allocation3], 0
    // Predicated region
    $region2: #{tpu_custom_call.1} parent=1 // pred_check
      _
    $region3: #{tpu_custom_call.1} parent=1 // pred_check_branch
      %16 = sbr.rel (0) target = $region5
    $region4: #{tpu_custom_call.1} parent=1 // pred_region
      _
    $region5: #{tpu_custom_call.1} parent=1 // pred_fallthru
      _
    // Predicated region
    $region6: #{tpu_custom_call.1} parent=1 // pred_check
      _
    $region7: #{tpu_custom_call.1} parent=1 // pred_check_branch
      %18 = sbr.rel (0) target = $region9
    $region8: #{tpu_custom_call.1} parent=1 // pred_region
      _
    $region9: #{tpu_custom_call.1} parent=1 // pred_fallthru
      _
    // Predicated region
    $region10: #{tpu_custom_call.1} parent=1 // pred_check
      _
    $region11: #{tpu_custom_call.1} parent=1 // pred_check_branch
      %20 = sbr.rel (0) target = $region13
    $region12: #{tpu_custom_call.1} parent=1 // pred_region
      _
    $region13: #{tpu_custom_call.1} parent=1 // pred_fallthru
      _
    // Predicated region
    $region14: #{tpu_custom_call.1} parent=1 // pred_check
      _
    $region15: #{tpu_custom_call.1} parent=1 // pred_check_branch
      %22 = sbr.rel (0) target = $region17
    $region16: #{tpu_custom_call.1} parent=1 // pred_region
      _
    $region17: #{tpu_custom_call.1} parent=1 // pred_fallthru
      _
    // Predicated region
    $region18: #{tpu_custom_call.1} parent=1 // pred_check
      _
    $region19: #{tpu_custom_call.1} parent=1 // pred_check_branch
      %24 = sbr.rel (0) target = $region21
    $region20: #{tpu_custom_call.1} parent=1 // pred_region
      _
    $region21: #{tpu_custom_call.1} parent=1 // pred_fallthru
      _
    // Predicated region
    $region22: #{tpu_custom_call.1} parent=1 // pred_check
      _
    $region23: #{tpu_custom_call.1} parent=1 // pred_check_branch
      %26 = sbr.rel (0) target = $region25
    $region24: #{tpu_custom_call.1} parent=1 // pred_region
      _
    $region25: #{tpu_custom_call.1} parent=1 // pred_fallthru
      _
    // Predicated region
    $region26: #{tpu_custom_call.1} parent=1 // pred_check
      _
    $region27: #{tpu_custom_call.1} parent=1 // pred_check_branch
      %28 = sbr.rel (0) target = $region29
    $region28: #{tpu_custom_call.1} parent=1 // pred_region
      _
    $region29: #{tpu_custom_call.1} parent=1 // pred_fallthru
      _
    // Predicated region
    $region30: #{tpu_custom_call.1} parent=1 // pred_check
      _
    $region31: #{tpu_custom_call.1} parent=1 // pred_check_branch
      %30 = sbr.rel (0) target = $region33
    $region32: #{tpu_custom_call.1} parent=1 // pred_region
      _
    $region33: #{tpu_custom_call.1} parent=1 // pred_fallthru
      _
    // Predicated region
    $region34: #{tpu_custom_call.1} parent=1 // pred_check
      _
    $region35: #{tpu_custom_call.1} parent=1 // pred_check_branch
      %32 = sbr.rel (0) target = $region37
    $region36: #{tpu_custom_call.1} parent=1 // pred_region
      _
    $region37: #{tpu_custom_call.1} parent=1 // pred_fallthru
      _
    %v34 = vld [vmem:[%s0] sm:$0xff]
    %v35 = vld [vmem:[%s0 + $0x8] sm:$0xff]
    %v36 = vld [vmem:[%s0 + $0x10] sm:$0xff]
    %v37 = vld [vmem:[%s0 + $0x18] sm:$0xff]
    %v38 = vld [vmem:[%s0 + $0x20] sm:$0xff]
    %v39 = vld [vmem:[%s0 + $0x28] sm:$0xff]
    %v40 = vld [vmem:[%s0 + $0x30] sm:$0xff]
    %v41 = vld [vmem:[%s0 + $0x38] sm:$0xff]
    %v42 = vld [vmem:[%s0 + $0x40] sm:$0xff]
    %v43 = vld [vmem:[%s0 + $0x48] sm:$0xff]
    %v44 = vld [vmem:[%s0 + $0x50] sm:$0xff]
    %v45 = vld [vmem:[%s0 + $0x58] sm:$0xff]
    %v46 = vld [vmem:[%s0 + $0x60] sm:$0xff]
    %v47 = vld [vmem:[%s0 + $0x68] sm:$0xff]
    %v48 = vpack.c.bf16 %v41, %v34
    %v49 = vpack.c.bf16 %v42, %v35
    %v50 = vpack.c.bf16 %v43, %v36
    %v51 = vpack.c.bf16 %v44, %v37
    %v52 = vpack.c.bf16 %v45, %v38
    %v53 = vpack.c.bf16 %v46, %v39
    %v54 = vpack.c.bf16 %v47, %v40
    %v55 = vld [vmem:[%s1] sm:$0xff]
    %v56 = vld [vmem:[%s1 + $0x8] sm:$0xff]
    %v57 = vld [vmem:[%s1 + $0x10] sm:$0xff]
    %v58 = vld [vmem:[%s1 + $0x18] sm:$0xff]
    %v59 = vld [vmem:[%s1 + $0x20] sm:$0xff]
    %v60 = vld [vmem:[%s1 + $0x28] sm:$0xff]
    %v61 = vld [vmem:[%s1 + $0x30] sm:$0xff]
    %v62 = vld [vmem:[%s1 + $0x38] sm:$0xff]
    %v63 = vld [vmem:[%s1 + $0x40] sm:$0xff]
    %v64 = vld [vmem:[%s1 + $0x48] sm:$0xff]
    %v65 = vld [vmem:[%s1 + $0x50] sm:$0xff]
    %v66 = vld [vmem:[%s1 + $0x58] sm:$0xff]
    %v67 = vld [vmem:[%s1 + $0x60] sm:$0xff]
    %v68 = vld [vmem:[%s1 + $0x68] sm:$0xff]
    %v69 = vld [vmem:[%s1 + $0x70] sm:$0xff]
    %v70 = vld [vmem:[%s1 + $0x78] sm:$0xff]
    %v71 = vld [vmem:[%s1 + $0x80] sm:$0xff]
    %v72 = vld [vmem:[%s1 + $0x88] sm:$0xff]
    %v73 = vld [vmem:[%s1 + $0x90] sm:$0xff]
    %v74 = vld [vmem:[%s1 + $0x98] sm:$0xff]
    %v75 = vld [vmem:[%s1 + $0xa0] sm:$0xff]
    %v76 = vld [vmem:[%s1 + $0xa8] sm:$0xff]
    %v77 = vld [vmem:[%s1 + $0xb0] sm:$0xff]
    %v78 = vld [vmem:[%s1 + $0xb8] sm:$0xff]
    %v79 = vld [vmem:[%s1 + $0xc0] sm:$0xff]
    %v80 = vld [vmem:[%s1 + $0xc8] sm:$0xff]
    %v81 = vld [vmem:[%s1 + $0xd0] sm:$0xff]
    %v82 = vld [vmem:[%s1 + $0xd8] sm:$0xff]
    %v83 = vld [vmem:[%s1 + $0xe0] sm:$0xff]
    %v84 = vld [vmem:[%s1 + $0xe8] sm:$0xff]
    %v85 = vld [vmem:[%s1 + $0xf0] sm:$0xff]
    %v86 = vld [vmem:[%s1 + $0xf8] sm:$0xff]
    %v87 = vld [vmem:[%s1 + $0x100] sm:$0xff]
    %v88 = vld [vmem:[%s1 + $0x108] sm:$0xff]
    %v89 = vld [vmem:[%s1 + $0x110] sm:$0xff]
    %v90 = vld [vmem:[%s1 + $0x118] sm:$0xff]
    %v91 = vld [vmem:[%s1 + $0x120] sm:$0xff]
    %v92 = vld [vmem:[%s1 + $0x128] sm:$0xff]
    %v93 = vld [vmem:[%s1 + $0x130] sm:$0xff]
    %v94 = vld [vmem:[%s1 + $0x138] sm:$0xff]
    %v95 = vld [vmem:[%s1 + $0x140] sm:$0xff]
    %v96 = vld [vmem:[%s1 + $0x148] sm:$0xff]
    %v97 = vld [vmem:[%s1 + $0x150] sm:$0xff]
    %v98 = vld [vmem:[%s1 + $0x158] sm:$0xff]
    %v99 = vld [vmem:[%s1 + $0x160] sm:$0xff]
    %v100 = vld [vmem:[%s1 + $0x168] sm:$0xff]
    %v101 = vld [vmem:[%s1 + $0x170] sm:$0xff]
    %v102 = vld [vmem:[%s1 + $0x178] sm:$0xff]
    %v103 = vld [vmem:[%s1 + $0x180] sm:$0xff]
    %v104 = vld [vmem:[%s1 + $0x188] sm:$0xff]
    %v105 = vld [vmem:[%s1 + $0x190] sm:$0xff]
    %v106 = vld [vmem:[%s1 + $0x198] sm:$0xff]
    %v107 = vld [vmem:[%s1 + $0x1a0] sm:$0xff]
    %v108 = vld [vmem:[%s1 + $0x1a8] sm:$0xff]
    %v109 = vld [vmem:[%s1 + $0x1b0] sm:$0xff]
    %v110 = vld [vmem:[%s1 + $0x1b8] sm:$0xff]
    %v111 = vld [vmem:[%s1 + $0x1c0] sm:$0xff]
    %v112 = vld [vmem:[%s1 + $0x1c8] sm:$0xff]
    %v113 = vld [vmem:[%s1 + $0x1d0] sm:$0xff]
    %v114 = vld [vmem:[%s1 + $0x1d8] sm:$0xff]
    %v115 = vld [vmem:[%s1 + $0x1e0] sm:$0xff]
    %v116 = vld [vmem:[%s1 + $0x1e8] sm:$0xff]
    %v117 = vld [vmem:[%s1 + $0x1f0] sm:$0xff]
    %v118 = vld [vmem:[%s1 + $0x1f8] sm:$0xff]
    %v119 = vld [vmem:[%s1 + $0x200] sm:$0xff]
    %v120 = vld [vmem:[%s1 + $0x208] sm:$0xff]
    %v121 = vld [vmem:[%s1 + $0x210] sm:$0xff]
    %v122 = vld [vmem:[%s1 + $0x218] sm:$0xff]
    %v123 = vld [vmem:[%s1 + $0x220] sm:$0xff]
    %v124 = vld [vmem:[%s1 + $0x228] sm:$0xff]
    %v125 = vld [vmem:[%s1 + $0x230] sm:$0xff]
    %v126 = vld [vmem:[%s1 + $0x238] sm:$0xff]
    %v127 = vld [vmem:[%s1 + $0x240] sm:$0xff]
    %v128 = vld [vmem:[%s1 + $0x248] sm:$0xff]
    %v129 = vld [vmem:[%s1 + $0x250] sm:$0xff]
    %v130 = vld [vmem:[%s1 + $0x258] sm:$0xff]
    %v131 = vld [vmem:[%s1 + $0x260] sm:$0xff]
    %v132 = vld [vmem:[%s1 + $0x268] sm:$0xff]
    %v133 = vld [vmem:[%s1 + $0x270] sm:$0xff]
    %v134 = vld [vmem:[%s1 + $0x278] sm:$0xff]
    %v135 = vld [vmem:[%s1 + $0x280] sm:$0xff]
    %v136 = vld [vmem:[%s1 + $0x288] sm:$0xff]
    %v137 = vld [vmem:[%s1 + $0x290] sm:$0xff]
    %v138 = vld [vmem:[%s1 + $0x298] sm:$0xff]
    %v139 = vld [vmem:[%s1 + $0x2a0] sm:$0xff]
    %v140 = vld [vmem:[%s1 + $0x2a8] sm:$0xff]
    %v141 = vld [vmem:[%s1 + $0x2b0] sm:$0xff]
    %v142 = vld [vmem:[%s1 + $0x2b8] sm:$0xff]
    %v143 = vld [vmem:[%s1 + $0x2c0] sm:$0xff]
    %v144 = vld [vmem:[%s1 + $0x2c8] sm:$0xff]
    %v145 = vld [vmem:[%s1 + $0x2d0] sm:$0xff]
    %v146 = vld [vmem:[%s1 + $0x2d8] sm:$0xff]
    %v147 = vld [vmem:[%s1 + $0x2e0] sm:$0xff]
    %v148 = vld [vmem:[%s1 + $0x2e8] sm:$0xff]
    %v149 = vld [vmem:[%s1 + $0x2f0] sm:$0xff]
    %v150 = vld [vmem:[%s1 + $0x2f8] sm:$0xff]
    %v151 = vld [vmem:[%s1 + $0x300] sm:$0xff]
    %v152 = vld [vmem:[%s1 + $0x308] sm:$0xff]
    %v153 = vld [vmem:[%s2] sm:$0x3]
    %v155 = vperm.slane %v153, 0
    %v156 = vperm.slane %v153, 1
    %v257 = vunpack.c.l.b16 %v55
    %v258 = vunpack.c.h.b16 %v55
    %v259 = vunpack.c.l.b16 %v56
    %v260 = vunpack.c.h.b16 %v56
    %v261 = vunpack.c.l.b16 %v57
    %v262 = vunpack.c.h.b16 %v57
    %v263 = vunpack.c.l.b16 %v58
    %v264 = vunpack.c.h.b16 %v58
    %v265 = vunpack.c.l.b16 %v59
    %v266 = vunpack.c.h.b16 %v59
    %v267 = vunpack.c.l.b16 %v60
    %v268 = vunpack.c.h.b16 %v60
    %v269 = vunpack.c.l.b16 %v61
    %v270 = vunpack.c.h.b16 %v61
    %v271 = vunpack.c.l.b16 %v62
    %v272 = vunpack.c.h.b16 %v62
    %v273 = vunpack.c.l.b16 %v63
    %v274 = vunpack.c.h.b16 %v63
    %v275 = vunpack.c.l.b16 %v64
    %v276 = vunpack.c.h.b16 %v64
    %v277 = vunpack.c.l.b16 %v65
    %v278 = vunpack.c.h.b16 %v65
    %v279 = vunpack.c.l.b16 %v66
    %v280 = vunpack.c.h.b16 %v66
    %v281 = vunpack.c.l.b16 %v67
    %v282 = vunpack.c.h.b16 %v67
    %v283 = vunpack.c.l.b16 %v68
    %v284 = vunpack.c.h.b16 %v68
    %v285 = vunpack.c.l.b16 %v69
    %v286 = vunpack.c.h.b16 %v69
    %v287 = vunpack.c.l.b16 %v70
    %v288 = vunpack.c.h.b16 %v70
    %v289 = vunpack.c.l.b16 %v71
    %v290 = vunpack.c.h.b16 %v71
    %v291 = vunpack.c.l.b16 %v72
    %v292 = vunpack.c.h.b16 %v72
    %v293 = vunpack.c.l.b16 %v73
    %v294 = vunpack.c.h.b16 %v73
    %v295 = vunpack.c.l.b16 %v74
    %v296 = vunpack.c.h.b16 %v74
    %v297 = vunpack.c.l.b16 %v75
    %v298 = vunpack.c.h.b16 %v75
    %v299 = vunpack.c.l.b16 %v76
    %v300 = vunpack.c.h.b16 %v76
    %v301 = vunpack.c.l.b16 %v77
    %v302 = vunpack.c.h.b16 %v77
    %v303 = vunpack.c.l.b16 %v78
    %v304 = vunpack.c.h.b16 %v78
    %v305 = vunpack.c.l.b16 %v79
    %v306 = vunpack.c.h.b16 %v79
    %v307 = vunpack.c.l.b16 %v80
    %v308 = vunpack.c.h.b16 %v80
    %v309 = vunpack.c.l.b16 %v81
    %v310 = vunpack.c.h.b16 %v81
    %v311 = vunpack.c.l.b16 %v82
    %v312 = vunpack.c.h.b16 %v82
    %v313 = vunpack.c.l.b16 %v83
    %v314 = vunpack.c.h.b16 %v83
    %v315 = vunpack.c.l.b16 %v84
    %v316 = vunpack.c.h.b16 %v84
    %v317 = vunpack.c.l.b16 %v85
    %v318 = vunpack.c.h.b16 %v85
    %v319 = vunpack.c.l.b16 %v86
    %v320 = vunpack.c.h.b16 %v86
    %v321 = vunpack.c.l.b16 %v87
    %v322 = vunpack.c.h.b16 %v87
    %v323 = vunpack.c.l.b16 %v88
    %v324 = vunpack.c.h.b16 %v88
    %v325 = vunpack.c.l.b16 %v89
    %v326 = vunpack.c.h.b16 %v89
    %v327 = vunpack.c.l.b16 %v90
    %v328 = vunpack.c.h.b16 %v90
    %v329 = vunpack.c.l.b16 %v91
    %v330 = vunpack.c.h.b16 %v91
    %v331 = vunpack.c.l.b16 %v92
    %v332 = vunpack.c.h.b16 %v92
    %v333 = vunpack.c.l.b16 %v93
    %v334 = vunpack.c.h.b16 %v93
    %v335 = vunpack.c.l.b16 %v94
    %v336 = vunpack.c.h.b16 %v94
    %v337 = vunpack.c.l.b16 %v95
    %v338 = vunpack.c.h.b16 %v95
    %v339 = vunpack.c.l.b16 %v96
    %v340 = vunpack.c.h.b16 %v96
    %v341 = vunpack.c.l.b16 %v97
    %v342 = vunpack.c.h.b16 %v97
    %v343 = vunpack.c.l.b16 %v98
    %v344 = vunpack.c.h.b16 %v98
    %v345 = vunpack.c.l.b16 %v99
    %v346 = vunpack.c.h.b16 %v99
    %v347 = vunpack.c.l.b16 %v100
    %v348 = vunpack.c.h.b16 %v100
    %v349 = vunpack.c.l.b16 %v101
    %v350 = vunpack.c.h.b16 %v101
    %v351 = vunpack.c.l.b16 %v102
    %v352 = vunpack.c.h.b16 %v102
    %v353 = vunpack.c.l.b16 %v103
    %v354 = vunpack.c.h.b16 %v103
    %v355 = vunpack.c.l.b16 %v104
    %v356 = vunpack.c.h.b16 %v104
    %v357 = vunpack.c.l.b16 %v105
    %v358 = vunpack.c.h.b16 %v105
    %v359 = vunpack.c.l.b16 %v106
    %v360 = vunpack.c.h.b16 %v106
    %v361 = vunpack.c.l.b16 %v107
    %v362 = vunpack.c.h.b16 %v107
    %v363 = vunpack.c.l.b16 %v108
    %v364 = vunpack.c.h.b16 %v108
    %v365 = vunpack.c.l.b16 %v109
    %v366 = vunpack.c.h.b16 %v109
    %v367 = vunpack.c.l.b16 %v110
    %v368 = vunpack.c.h.b16 %v110
    %v369 = vunpack.c.l.b16 %v111
    %v370 = vunpack.c.h.b16 %v111
    %v371 = vunpack.c.l.b16 %v112
    %v372 = vunpack.c.h.b16 %v112
    %v373 = vunpack.c.l.b16 %v113
    %v374 = vunpack.c.h.b16 %v113
    %v375 = vunpack.c.l.b16 %v114
    %v376 = vunpack.c.h.b16 %v114
    %v377 = vunpack.c.l.b16 %v115
    %v378 = vunpack.c.h.b16 %v115
    %v379 = vunpack.c.l.b16 %v116
    %v380 = vunpack.c.h.b16 %v116
    %v381 = vunpack.c.l.b16 %v117
    %v382 = vunpack.c.h.b16 %v117
    %v383 = vunpack.c.l.b16 %v118
    %v384 = vunpack.c.h.b16 %v118
    %v385 = vunpack.c.l.b16 %v119
    %v386 = vunpack.c.h.b16 %v119
    %v387 = vunpack.c.l.b16 %v120
    %v388 = vunpack.c.h.b16 %v120
    %v389 = vunpack.c.l.b16 %v121
    %v390 = vunpack.c.h.b16 %v121
    %v391 = vunpack.c.l.b16 %v122
    %v392 = vunpack.c.h.b16 %v122
    %v393 = vunpack.c.l.b16 %v123
    %v394 = vunpack.c.h.b16 %v123
    %v395 = vunpack.c.l.b16 %v124
    %v396 = vunpack.c.h.b16 %v124
    %v397 = vunpack.c.l.b16 %v125
    %v398 = vunpack.c.h.b16 %v125
    %v399 = vunpack.c.l.b16 %v126
    %v400 = vunpack.c.h.b16 %v126
    %v401 = vunpack.c.l.b16 %v127
    %v402 = vunpack.c.h.b16 %v127
    %v403 = vunpack.c.l.b16 %v128
    %v404 = vunpack.c.h.b16 %v128
    %v405 = vunpack.c.l.b16 %v129
    %v406 = vunpack.c.h.b16 %v129
    %v407 = vunpack.c.l.b16 %v130
    %v408 = vunpack.c.h.b16 %v130
    %v409 = vunpack.c.l.b16 %v131
    %v410 = vunpack.c.h.b16 %v131
    %v411 = vunpack.c.l.b16 %v132
    %v412 = vunpack.c.h.b16 %v132
    %v413 = vunpack.c.l.b16 %v133
    %v414 = vunpack.c.h.b16 %v133
    %v415 = vunpack.c.l.b16 %v134
    %v416 = vunpack.c.h.b16 %v134
    %v417 = vunpack.c.l.b16 %v135
    %v418 = vunpack.c.h.b16 %v135
    %v419 = vunpack.c.l.b16 %v136
    %v420 = vunpack.c.h.b16 %v136
    %v421 = vunpack.c.l.b16 %v137
    %v422 = vunpack.c.h.b16 %v137
    %v423 = vunpack.c.l.b16 %v138
    %v424 = vunpack.c.h.b16 %v138
    %v425 = vunpack.c.l.b16 %v139
    %v426 = vunpack.c.h.b16 %v139
    %v427 = vunpack.c.l.b16 %v140
    %v428 = vunpack.c.h.b16 %v140
    %v429 = vunpack.c.l.b16 %v141
    %v430 = vunpack.c.h.b16 %v141
    %v431 = vunpack.c.l.b16 %v142
    %v432 = vunpack.c.h.b16 %v142
    %v433 = vunpack.c.l.b16 %v143
    %v434 = vunpack.c.h.b16 %v143
    %v435 = vunpack.c.l.b16 %v144
    %v436 = vunpack.c.h.b16 %v144
    %v437 = vunpack.c.l.b16 %v145
    %v438 = vunpack.c.h.b16 %v145
    %v439 = vunpack.c.l.b16 %v146
    %v440 = vunpack.c.h.b16 %v146
    %v441 = vunpack.c.l.b16 %v147
    %v442 = vunpack.c.h.b16 %v147
    %v443 = vunpack.c.l.b16 %v148
    %v444 = vunpack.c.h.b16 %v148
    %v445 = vunpack.c.l.b16 %v149
    %v446 = vunpack.c.h.b16 %v149
    %v447 = vunpack.c.l.b16 %v150
    %v448 = vunpack.c.h.b16 %v150
    %v449 = vunpack.c.l.b16 %v151
    %v450 = vunpack.c.h.b16 %v151
    %v451 = vunpack.c.l.b16 %v152
    %v452 = vunpack.c.h.b16 %v152
    %v453 = vpack.c.b16 %v259, %v257
    %v454 = vpack.c.b16 %v260, %v258
    %v455 = vpack.c.b16 %v263, %v261
    %v456 = vpack.c.b16 %v264, %v262
    %v457 = vpack.c.b16 %v267, %v265
    %v458 = vpack.c.b16 %v268, %v266
    %v459 = vpack.c.b16 %v271, %v269
    %v460 = vpack.c.b16 %v272, %v270
    %v461 = vpack.c.b16 %v275, %v273
    %v462 = vpack.c.b16 %v276, %v274
    %v463 = vpack.c.b16 %v279, %v277
    %v464 = vpack.c.b16 %v280, %v278
    %v465 = vpack.c.b16 %v283, %v281
    %v466 = vpack.c.b16 %v284, %v282
    %v467 = vpack.c.b16 %v287, %v285
    %v468 = vpack.c.b16 %v288, %v286
    %v469 = vpack.c.b16 %v291, %v289
    %v470 = vpack.c.b16 %v292, %v290
    %v471 = vpack.c.b16 %v295, %v293
    %v472 = vpack.c.b16 %v296, %v294
    %v473 = vpack.c.b16 %v299, %v297
    %v474 = vpack.c.b16 %v300, %v298
    %v475 = vpack.c.b16 %v303, %v301
    %v476 = vpack.c.b16 %v304, %v302
    %v477 = vpack.c.b16 %v307, %v305
    %v478 = vpack.c.b16 %v308, %v306
    %v479 = vpack.c.b16 %v311, %v309
    %v480 = vpack.c.b16 %v312, %v310
    %v481 = vpack.c.b16 %v315, %v313
    %v482 = vpack.c.b16 %v316, %v314
    %v483 = vpack.c.b16 %v319, %v317
    %v484 = vpack.c.b16 %v320, %v318
    %v485 = vpack.c.b16 %v323, %v321
    %v486 = vpack.c.b16 %v324, %v322
    %v487 = vpack.c.b16 %v327, %v325
    %v488 = vpack.c.b16 %v328, %v326
    %v489 = vpack.c.b16 %v331, %v329
    %v490 = vpack.c.b16 %v332, %v330
    %v491 = vpack.c.b16 %v335, %v333
    %v492 = vpack.c.b16 %v336, %v334
    %v493 = vpack.c.b16 %v339, %v337
    %v494 = vpack.c.b16 %v340, %v338
    %v495 = vpack.c.b16 %v343, %v341
    %v496 = vpack.c.b16 %v344, %v342
    %v497 = vpack.c.b16 %v347, %v345
    %v498 = vpack.c.b16 %v348, %v346
    %v499 = vpack.c.b16 %v351, %v349
    %v500 = vpack.c.b16 %v352, %v350
    %v501 = vpack.c.b16 %v355, %v353
    %v502 = vpack.c.b16 %v356, %v354
    %v503 = vpack.c.b16 %v359, %v357
    %v504 = vpack.c.b16 %v360, %v358
    %v505 = vpack.c.b16 %v363, %v361
    %v506 = vpack.c.b16 %v364, %v362
    %v507 = vpack.c.b16 %v367, %v365
    %v508 = vpack.c.b16 %v368, %v366
    %v509 = vpack.c.b16 %v371, %v369
    %v510 = vpack.c.b16 %v372, %v370
    %v511 = vpack.c.b16 %v375, %v373
    %v512 = vpack.c.b16 %v376, %v374
    %v513 = vpack.c.b16 %v379, %v377
    %v514 = vpack.c.b16 %v380, %v378
    %v515 = vpack.c.b16 %v383, %v381
    %v516 = vpack.c.b16 %v384, %v382
    %v517 = vpack.c.b16 %v387, %v385
    %v518 = vpack.c.b16 %v388, %v386
    %v519 = vpack.c.b16 %v391, %v389
    %v520 = vpack.c.b16 %v392, %v390
    %v521 = vpack.c.b16 %v395, %v393
    %v522 = vpack.c.b16 %v396, %v394
    %v523 = vpack.c.b16 %v399, %v397
    %v524 = vpack.c.b16 %v400, %v398
    %v525 = vpack.c.b16 %v403, %v401
    %v526 = vpack.c.b16 %v404, %v402
    %v527 = vpack.c.b16 %v407, %v405
    %v528 = vpack.c.b16 %v408, %v406
    %v529 = vpack.c.b16 %v411, %v409
    %v530 = vpack.c.b16 %v412, %v410
    %v531 = vpack.c.b16 %v415, %v413
    %v532 = vpack.c.b16 %v416, %v414
    %v533 = vpack.c.b16 %v419, %v417
    %v534 = vpack.c.b16 %v420, %v418
    %v535 = vpack.c.b16 %v423, %v421
    %v536 = vpack.c.b16 %v424, %v422
    %v537 = vpack.c.b16 %v427, %v425
    %v538 = vpack.c.b16 %v428, %v426
    %v539 = vpack.c.b16 %v431, %v429
    %v540 = vpack.c.b16 %v432, %v430
    %v541 = vpack.c.b16 %v435, %v433
    %v542 = vpack.c.b16 %v436, %v434
    %v543 = vpack.c.b16 %v439, %v437
    %v544 = vpack.c.b16 %v440, %v438
    %v545 = vpack.c.b16 %v443, %v441
    %v546 = vpack.c.b16 %v444, %v442
    %v547 = vpack.c.b16 %v447, %v445
    %v548 = vpack.c.b16 %v448, %v446
    %v549 = vpack.c.b16 %v451, %v449
    %v550 = vpack.c.b16 %v452, %v450
    %vm649 = vcmask 130048
    %v651 = vsel %vm649, %v54, 0
    %653 = vmatpush.bf16.msra.mxu0 %v467
    %654 = vmatpush.bf16.msra.mxu0 %v465
    %655 = vmatpush.bf16.msra.mxu0 %v463
    %656 = vmatpush.bf16.msra.mxu0 %v461
    %657 = vmatpush.bf16.msra.mxu0 %v459
    %658 = vmatpush.bf16.msra.mxu0 %v457
    %659 = vmatpush.bf16.msra.mxu0 %v455
    %660 = vmatpush.bf16.msra.mxu0 %v453
    %661 = vmatmul.bf16.gmra.mxu0 %v48
    %v662 = vpop.f32.mrf.mxu0
    %v663 = vadd.f32 %v155, %v662
    %v664 = vpop.f32.mrf.mxu0
    %v665 = vadd.f32 %v155, %v664
    %666 = vdwg.mxu0
    %667 = vmatpush.bf16.msra.mxu0 %v483
    %668 = vmatpush.bf16.msra.mxu0 %v481
    %669 = vmatpush.bf16.msra.mxu0 %v479
    %670 = vmatpush.bf16.msra.mxu0 %v477
    %671 = vmatpush.bf16.msra.mxu0 %v475
    %672 = vmatpush.bf16.msra.mxu0 %v473
    %673 = vmatpush.bf16.msra.mxu0 %v471
    %674 = vmatpush.bf16.msra.mxu0 %v469
    %675 = vmatmul.bf16.gmra.mxu0 %v49
    %v676 = vpop.f32.mrf.mxu0
    %v677 = vadd.f32 %v663, %v676
    %v678 = vpop.f32.mrf.mxu0
    %v679 = vadd.f32 %v665, %v678
    %680 = vdwg.mxu0
    %681 = vmatpush.bf16.msra.mxu0 %v499
    %682 = vmatpush.bf16.msra.mxu0 %v497
    %683 = vmatpush.bf16.msra.mxu0 %v495
    %684 = vmatpush.bf16.msra.mxu0 %v493
    %685 = vmatpush.bf16.msra.mxu0 %v491
    %686 = vmatpush.bf16.msra.mxu0 %v489
    %687 = vmatpush.bf16.msra.mxu0 %v487
    %688 = vmatpush.bf16.msra.mxu0 %v485
    %689 = vmatmul.bf16.gmra.mxu0 %v50
    %v690 = vpop.f32.mrf.mxu0
    %v691 = vadd.f32 %v677, %v690
    %v692 = vpop.f32.mrf.mxu0
    %v693 = vadd.f32 %v679, %v692
    %694 = vdwg.mxu0
    %695 = vmatpush.bf16.msra.mxu0 %v515
    %696 = vmatpush.bf16.msra.mxu0 %v513
    %697 = vmatpush.bf16.msra.mxu0 %v511
    %698 = vmatpush.bf16.msra.mxu0 %v509
    %699 = vmatpush.bf16.msra.mxu0 %v507
    %700 = vmatpush.bf16.msra.mxu0 %v505
    %701 = vmatpush.bf16.msra.mxu0 %v503
    %702 = vmatpush.bf16.msra.mxu0 %v501
    %703 = vmatmul.bf16.gmra.mxu0 %v51
    %v704 = vpop.f32.mrf.mxu0
    %v705 = vadd.f32 %v691, %v704
    %v706 = vpop.f32.mrf.mxu0
    %v707 = vadd.f32 %v693, %v706
    %708 = vdwg.mxu0
    %709 = vmatpush.bf16.msra.mxu0 %v531
    %710 = vmatpush.bf16.msra.mxu0 %v529
    %711 = vmatpush.bf16.msra.mxu0 %v527
    %712 = vmatpush.bf16.msra.mxu0 %v525
    %713 = vmatpush.bf16.msra.mxu0 %v523
    %714 = vmatpush.bf16.msra.mxu0 %v521
    %715 = vmatpush.bf16.msra.mxu0 %v519
    %716 = vmatpush.bf16.msra.mxu0 %v517
    %717 = vmatmul.bf16.gmra.mxu0 %v52
    %v718 = vpop.f32.mrf.mxu0
    %v719 = vadd.f32 %v705, %v718
    %v720 = vpop.f32.mrf.mxu0
    %v721 = vadd.f32 %v707, %v720
    %722 = vdwg.mxu0
    %723 = vmatpush.bf16.msra.mxu0 %v547
    %724 = vmatpush.bf16.msra.mxu0 %v545
    %725 = vmatpush.bf16.msra.mxu0 %v543
    %726 = vmatpush.bf16.msra.mxu0 %v541
    %727 = vmatpush.bf16.msra.mxu0 %v539
    %728 = vmatpush.bf16.msra.mxu0 %v537
    %729 = vmatpush.bf16.msra.mxu0 %v535
    %730 = vmatpush.bf16.msra.mxu0 %v533
    %731 = vmatmul.bf16.gmra.mxu0 %v53
    %v732 = vpop.f32.mrf.mxu0
    %v733 = vadd.f32 %v719, %v732
    %v734 = vpop.f32.mrf.mxu0
    %v735 = vadd.f32 %v721, %v734
    %736 = vdwg.mxu0
    %737 = vmatpush.bf16.msra.mxu0 0
    %738 = vmatpush.bf16.msra.mxu0 0
    %739 = vmatpush.bf16.msra.mxu0 0
    %740 = vmatpush.bf16.msra.mxu0 0
    %741 = vmatpush.bf16.msra.mxu0 0
    %742 = vmatpush.bf16.msra.mxu0 0
    %743 = vmatpush.bf16.msra.mxu0 0
    %744 = vmatpush.bf16.msra.mxu0 %v549
    %745 = vmatmul.bf16.gmra.mxu0 %v651
    %v746 = vpop.f32.mrf.mxu0
    %v747 = vadd.f32 %v733, %v746
    %v748 = vpop.f32.mrf.mxu0
    %v749 = vadd.f32 %v735, %v748
    %750 = vdwg.mxu0
    %751 = vmatpush.bf16.msra.mxu0 %v468
    %752 = vmatpush.bf16.msra.mxu0 %v466
    %753 = vmatpush.bf16.msra.mxu0 %v464
    %754 = vmatpush.bf16.msra.mxu0 %v462
    %755 = vmatpush.bf16.msra.mxu0 %v460
    %756 = vmatpush.bf16.msra.mxu0 %v458
    %757 = vmatpush.bf16.msra.mxu0 %v456
    %758 = vmatpush.bf16.msra.mxu0 %v454
    %759 = vmatmul.bf16.gmra.mxu0 %v48
    %v760 = vpop.f32.mrf.mxu0
    %v761 = vadd.f32 %v156, %v760
    %v762 = vpop.f32.mrf.mxu0
    %v763 = vadd.f32 %v156, %v762
    %764 = vdwg.mxu0
    %765 = vmatpush.bf16.msra.mxu0 %v484
    %766 = vmatpush.bf16.msra.mxu0 %v482
    %767 = vmatpush.bf16.msra.mxu0 %v480
    %768 = vmatpush.bf16.msra.mxu0 %v478
    %769 = vmatpush.bf16.msra.mxu0 %v476
    %770 = vmatpush.bf16.msra.mxu0 %v474
    %771 = vmatpush.bf16.msra.mxu0 %v472
    %772 = vmatpush.bf16.msra.mxu0 %v470
    %773 = vmatmul.bf16.gmra.mxu0 %v49
    %v774 = vpop.f32.mrf.mxu0
    %v775 = vadd.f32 %v761, %v774
    %v776 = vpop.f32.mrf.mxu0
    %v777 = vadd.f32 %v763, %v776
    %778 = vdwg.mxu0
    %779 = vmatpush.bf16.msra.mxu0 %v500
    %780 = vmatpush.bf16.msra.mxu0 %v498
    %781 = vmatpush.bf16.msra.mxu0 %v496
    %782 = vmatpush.bf16.msra.mxu0 %v494
    %783 = vmatpush.bf16.msra.mxu0 %v492
    %784 = vmatpush.bf16.msra.mxu0 %v490
    %785 = vmatpush.bf16.msra.mxu0 %v488
    %786 = vmatpush.bf16.msra.mxu0 %v486
    %787 = vmatmul.bf16.gmra.mxu0 %v50
    %v788 = vpop.f32.mrf.mxu0
    %v789 = vadd.f32 %v775, %v788
    %v790 = vpop.f32.mrf.mxu0
    %v791 = vadd.f32 %v777, %v790
    %792 = vdwg.mxu0
    %793 = vmatpush.bf16.msra.mxu0 %v516
    %794 = vmatpush.bf16.msra.mxu0 %v514
    %795 = vmatpush.bf16.msra.mxu0 %v512
    %796 = vmatpush.bf16.msra.mxu0 %v510
    %797 = vmatpush.bf16.msra.mxu0 %v508
    %798 = vmatpush.bf16.msra.mxu0 %v506
    %799 = vmatpush.bf16.msra.mxu0 %v504
    %800 = vmatpush.bf16.msra.mxu0 %v502
    %801 = vmatmul.bf16.gmra.mxu0 %v51
    %v802 = vpop.f32.mrf.mxu0
    %v803 = vadd.f32 %v789, %v802
    %v804 = vpop.f32.mrf.mxu0
    %v805 = vadd.f32 %v791, %v804
    %806 = vdwg.mxu0
    %807 = vmatpush.bf16.msra.mxu0 %v532
    %808 = vmatpush.bf16.msra.mxu0 %v530
    %809 = vmatpush.bf16.msra.mxu0 %v528
    %810 = vmatpush.bf16.msra.mxu0 %v526
    %811 = vmatpush.bf16.msra.mxu0 %v524
    %812 = vmatpush.bf16.msra.mxu0 %v522
    %813 = vmatpush.bf16.msra.mxu0 %v520
    %814 = vmatpush.bf16.msra.mxu0 %v518
    %815 = vmatmul.bf16.gmra.mxu0 %v52
    %v816 = vpop.f32.mrf.mxu0
    %v817 = vadd.f32 %v803, %v816
    %v818 = vpop.f32.mrf.mxu0
    %v819 = vadd.f32 %v805, %v818
    %820 = vdwg.mxu0
    %821 = vmatpush.bf16.msra.mxu0 %v548
    %822 = vmatpush.bf16.msra.mxu0 %v546
    %823 = vmatpush.bf16.msra.mxu0 %v544
    %824 = vmatpush.bf16.msra.mxu0 %v542
    %825 = vmatpush.bf16.msra.mxu0 %v540
    %826 = vmatpush.bf16.msra.mxu0 %v538
    %827 = vmatpush.bf16.msra.mxu0 %v536
    %828 = vmatpush.bf16.msra.mxu0 %v534
    %829 = vmatmul.bf16.gmra.mxu0 %v53
    %v830 = vpop.f32.mrf.mxu0
    %v831 = vadd.f32 %v817, %v830
    %v832 = vpop.f32.mrf.mxu0
    %v833 = vadd.f32 %v819, %v832
    %834 = vdwg.mxu0
    %835 = vmatpush.bf16.msra.mxu0 0
    %836 = vmatpush.bf16.msra.mxu0 0
    %837 = vmatpush.bf16.msra.mxu0 0
    %838 = vmatpush.bf16.msra.mxu0 0
    %839 = vmatpush.bf16.msra.mxu0 0
    %840 = vmatpush.bf16.msra.mxu0 0
    %841 = vmatpush.bf16.msra.mxu0 0
    %842 = vmatpush.bf16.msra.mxu0 %v550
    %843 = vmatmul.bf16.gmra.mxu0 %v651
    %v844 = vpop.f32.mrf.mxu0
    %v845 = vadd.f32 %v831, %v844
    %v846 = vpop.f32.mrf.mxu0
    %v847 = vadd.f32 %v833, %v846
    %848 = vdwg.mxu0
    %v849 = vmax.f32 %v747, 0.0
    %v850 = vmax.f32 %v845, 0.0
    %v851 = vmax.f32 %v749, 0.0
    %v852 = vmax.f32 %v847, 0.0
    %v853 = vpack.c.bf16 %v851, %v849
    %v854 = vpack.c.bf16 %v852, %v850
    %v855 = vld [vmem:[%s3] sm:$0xf]
    %v856 = vld [vmem:[%s3 + $0x4] sm:$0xf]
    %v857 = vld [vmem:[%s3 + $0x8] sm:$0xf]
    %v858 = vld [vmem:[%s3 + $0xc] sm:$0xf]
    %v859 = vld [vmem:[%s3 + $0x10] sm:$0xf]
    %v860 = vld [vmem:[%s3 + $0x14] sm:$0xf]
    %v861 = vld [vmem:[%s3 + $0x18] sm:$0xf]
    %v862 = vld [vmem:[%s3 + $0x1c] sm:$0xf]
    %v863 = vld [vmem:[%s3 + $0x20] sm:$0xf]
    %v864 = vld [vmem:[%s3 + $0x24] sm:$0xf]
    %v865 = vld [vmem:[%s3 + $0x28] sm:$0xf]
    %v866 = vld [vmem:[%s3 + $0x2c] sm:$0xf]
    %v867 = vld [vmem:[%s3 + $0x30] sm:$0xf]
    %v868 = vld [vmem:[%s3 + $0x34] sm:$0xf]
    %v869 = vld [vmem:[%s3 + $0x38] sm:$0xf]
    %v870 = vld [vmem:[%s3 + $0x3c] sm:$0xf]
    %v871 = vld [vmem:[%s3 + $0x40] sm:$0xf]
    %v872 = vld [vmem:[%s3 + $0x44] sm:$0xf]
    %v873 = vld [vmem:[%s3 + $0x48] sm:$0xf]
    %v874 = vld [vmem:[%s3 + $0x4c] sm:$0xf]
    %v875 = vld [vmem:[%s3 + $0x50] sm:$0xf]
    %v876 = vld [vmem:[%s3 + $0x54] sm:$0xf]
    %v877 = vld [vmem:[%s3 + $0x58] sm:$0xf]
    %v878 = vld [vmem:[%s3 + $0x5c] sm:$0xf]
    %v879 = vld [vmem:[%s3 + $0x60] sm:$0xf]
    %v880 = vld [vmem:[%s3 + $0x64] sm:$0xf]
    %v881 = vld [vmem:[%s3 + $0x68] sm:$0xf]
    %v882 = vld [vmem:[%s3 + $0x6c] sm:$0xf]
    %v883 = vld [vmem:[%s3 + $0x70] sm:$0xf]
    %v884 = vld [vmem:[%s3 + $0x74] sm:$0xf]
    %v885 = vld [vmem:[%s3 + $0x78] sm:$0xf]
    %v886 = vld [vmem:[%s3 + $0x7c] sm:$0xf]
    %v887 = vld [vmem:[%s4] sm:$0x1]
    %v889 = vperm.slane %v887, 0
    %v923 = vunpack.c.l.b16 %v855
    %v924 = vunpack.c.l.b16 %v856
    %v925 = vunpack.c.l.b16 %v857
    %v926 = vunpack.c.l.b16 %v858
    %v927 = vunpack.c.l.b16 %v859
    %v928 = vunpack.c.l.b16 %v860
    %v929 = vunpack.c.l.b16 %v861
    %v930 = vunpack.c.l.b16 %v862
    %v931 = vunpack.c.l.b16 %v863
    %v932 = vunpack.c.l.b16 %v864
    %v933 = vunpack.c.l.b16 %v865
    %v934 = vunpack.c.l.b16 %v866
    %v935 = vunpack.c.l.b16 %v867
    %v936 = vunpack.c.l.b16 %v868
    %v937 = vunpack.c.l.b16 %v869
    %v938 = vunpack.c.l.b16 %v870
    %v939 = vunpack.c.l.b16 %v871
    %v940 = vunpack.c.l.b16 %v872
    %v941 = vunpack.c.l.b16 %v873
    %v942 = vunpack.c.l.b16 %v874
    %v943 = vunpack.c.l.b16 %v875
    %v944 = vunpack.c.l.b16 %v876
    %v945 = vunpack.c.l.b16 %v877
    %v946 = vunpack.c.l.b16 %v878
    %v947 = vunpack.c.l.b16 %v879
    %v948 = vunpack.c.l.b16 %v880
    %v949 = vunpack.c.l.b16 %v881
    %v950 = vunpack.c.l.b16 %v882
    %v951 = vunpack.c.l.b16 %v883
    %v952 = vunpack.c.l.b16 %v884
    %v953 = vunpack.c.l.b16 %v885
    %v954 = vunpack.c.l.b16 %v886
    %v955 = vpack.c.b16 %v924, %v923
    %v956 = vpack.c.b16 %v926, %v925
    %v957 = vpack.c.b16 %v928, %v927
    %v958 = vpack.c.b16 %v930, %v929
    %v959 = vpack.c.b16 %v932, %v931
    %v960 = vpack.c.b16 %v934, %v933
    %v961 = vpack.c.b16 %v936, %v935
    %v962 = vpack.c.b16 %v938, %v937
    %v963 = vpack.c.b16 %v940, %v939
    %v964 = vpack.c.b16 %v942, %v941
    %v965 = vpack.c.b16 %v944, %v943
    %v966 = vpack.c.b16 %v946, %v945
    %v967 = vpack.c.b16 %v948, %v947
    %v968 = vpack.c.b16 %v950, %v949
    %v969 = vpack.c.b16 %v952, %v951
    %v970 = vpack.c.b16 %v954, %v953
    %987 = vmatpush.bf16.msra.mxu0 %v962
    %988 = vmatpush.bf16.msra.mxu0 %v961
    %989 = vmatpush.bf16.msra.mxu0 %v960
    %990 = vmatpush.bf16.msra.mxu0 %v959
    %991 = vmatpush.bf16.msra.mxu0 %v958
    %992 = vmatpush.bf16.msra.mxu0 %v957
    %993 = vmatpush.bf16.msra.mxu0 %v956
    %994 = vmatpush.bf16.msra.mxu0 %v955
    %995 = vmatmul.bf16.gmra.mxu0 %v853
    %v996 = vpop.f32.mrf.mxu0
    %v997 = vadd.f32 %v889, %v996
    %v998 = vpop.f32.mrf.mxu0
    %v999 = vadd.f32 %v889, %v998
    %1000 = vdwg.mxu0
    %1001 = vmatpush.bf16.msra.mxu0 %v970
    %1002 = vmatpush.bf16.msra.mxu0 %v969
    %1003 = vmatpush.bf16.msra.mxu0 %v968
    %1004 = vmatpush.bf16.msra.mxu0 %v967
    %1005 = vmatpush.bf16.msra.mxu0 %v966
    %1006 = vmatpush.bf16.msra.mxu0 %v965
    %1007 = vmatpush.bf16.msra.mxu0 %v964
    %1008 = vmatpush.bf16.msra.mxu0 %v963
    %1009 = vmatmul.bf16.gmra.mxu0 %v854
    %v1010 = vpop.f32.mrf.mxu0
    %v1011 = vadd.f32 %v997, %v1010
    %v1012 = vpop.f32.mrf.mxu0
    %v1013 = vadd.f32 %v999, %v1012
    %1014 = vdwg.mxu0
    %v1015 = vmax.f32 %v1011, 0.0
    %v1016 = vmax.f32 %v1013, 0.0
    %v1017 = vpack.c.bf16 %v1016, %v1015
    %v1018 = vld [vmem:[%s5] sm:$0xff]
    %v1019 = vld [vmem:[%s5 + $0x8] sm:$0xff]
    %v1020 = vld [vmem:[%s5 + $0x10] sm:$0xff]
    %v1021 = vld [vmem:[%s5 + $0x18] sm:$0xff]
    %v1022 = vld [vmem:[%s5 + $0x20] sm:$0xff]
    %v1023 = vld [vmem:[%s5 + $0x28] sm:$0xff]
    %v1024 = vld [vmem:[%s5 + $0x30] sm:$0xff]
    %v1025 = vld [vmem:[%s5 + $0x38] sm:$0xff]
    %v1026 = vld [vmem:[%s6] sm:$0x3]
    %v1028 = vperm.slane %v1026, 0
    %v1029 = vperm.slane %v1026, 1
    %v1040 = vunpack.c.l.b16 %v1018
    %v1041 = vunpack.c.h.b16 %v1018
    %v1042 = vunpack.c.l.b16 %v1019
    %v1043 = vunpack.c.h.b16 %v1019
    %v1044 = vunpack.c.l.b16 %v1020
    %v1045 = vunpack.c.h.b16 %v1020
    %v1046 = vunpack.c.l.b16 %v1021
    %v1047 = vunpack.c.h.b16 %v1021
    %v1048 = vunpack.c.l.b16 %v1022
    %v1049 = vunpack.c.h.b16 %v1022
    %v1050 = vunpack.c.l.b16 %v1023
    %v1051 = vunpack.c.h.b16 %v1023
    %v1052 = vunpack.c.l.b16 %v1024
    %v1053 = vunpack.c.h.b16 %v1024
    %v1054 = vunpack.c.l.b16 %v1025
    %v1055 = vunpack.c.h.b16 %v1025
    %v1056 = vpack.c.b16 %v1042, %v1040
    %v1057 = vpack.c.b16 %v1043, %v1041
    %v1058 = vpack.c.b16 %v1046, %v1044
    %v1059 = vpack.c.b16 %v1047, %v1045
    %v1060 = vpack.c.b16 %v1050, %v1048
    %v1061 = vpack.c.b16 %v1051, %v1049
    %v1062 = vpack.c.b16 %v1054, %v1052
    %v1063 = vpack.c.b16 %v1055, %v1053
    %vm1072 = vcmask 523264
    %v1074 = vsel %vm1072, %v1017, 0
    %1076 = vmatpush.bf16.msra.mxu0 0
    %1077 = vmatpush.bf16.msra.mxu0 0
    %1078 = vmatpush.bf16.msra.mxu0 0
    %1079 = vmatpush.bf16.msra.mxu0 0
    %1080 = vmatpush.bf16.msra.mxu0 %v1062
    %1081 = vmatpush.bf16.msra.mxu0 %v1060
    %1082 = vmatpush.bf16.msra.mxu0 %v1058
    %1083 = vmatpush.bf16.msra.mxu0 %v1056
    %1084 = vmatmul.bf16.gmra.mxu0 %v1074
    %v1085 = vpop.f32.mrf.mxu0
    %v1086 = vadd.f32 %v1028, %v1085
    %v1087 = vpop.f32.mrf.mxu0
    %v1088 = vadd.f32 %v1028, %v1087
    %1089 = vdwg.mxu0
    %1090 = vmatpush.bf16.msra.mxu0 0
    %1091 = vmatpush.bf16.msra.mxu0 0
    %1092 = vmatpush.bf16.msra.mxu0 0
    %1093 = vmatpush.bf16.msra.mxu0 0
    %1094 = vmatpush.bf16.msra.mxu0 %v1063
    %1095 = vmatpush.bf16.msra.mxu0 %v1061
    %1096 = vmatpush.bf16.msra.mxu0 %v1059
    %1097 = vmatpush.bf16.msra.mxu0 %v1057
    %1098 = vmatmul.bf16.gmra.mxu0 %v1074
    %v1099 = vpop.f32.mrf.mxu0
    %v1100 = vadd.f32 %v1029, %v1099
    %v1101 = vpop.f32.mrf.mxu0
    %v1102 = vadd.f32 %v1029, %v1101
    %1103 = vdwg.mxu0
    %v1104 = vmax.f32 %v1086, 0.0
    %v1105 = vmax.f32 %v1100, 0.0
    %v1106 = vmax.f32 %v1088, 0.0
    %v1107 = vmax.f32 %v1102, 0.0
    %v1108 = vpack.c.bf16 %v1106, %v1104
    %v1109 = vpack.c.bf16 %v1107, %v1105
    %v1110 = vld [vmem:[%s7] sm:$0xff]
    %v1111 = vld [vmem:[%s7 + $0x8] sm:$0xff]
    %v1112 = vld [vmem:[%s7 + $0x10] sm:$0xff]
    %v1113 = vld [vmem:[%s7 + $0x18] sm:$0xf]
    %v1114 = vld [vmem:[%s7 + $0x1c] sm:$0xff]
    %v1115 = vld [vmem:[%s7 + $0x24] sm:$0xff]
    %v1116 = vld [vmem:[%s7 + $0x2c] sm:$0xff]
    %v1117 = vld [vmem:[%s7 + $0x34] sm:$0xf]
    %v1118 = vld [vmem:[%s7 + $0x38] sm:$0xff]
    %v1119 = vld [vmem:[%s7 + $0x40] sm:$0xff]
    %v1120 = vld [vmem:[%s7 + $0x48] sm:$0xff]
    %v1121 = vld [vmem:[%s7 + $0x50] sm:$0xf]
    %v1122 = vld [vmem:[%s7 + $0x54] sm:$0xff]
    %v1123 = vld [vmem:[%s7 + $0x5c] sm:$0xff]
    %v1124 = vld [vmem:[%s7 + $0x64] sm:$0xff]
    %v1125 = vld [vmem:[%s7 + $0x6c] sm:$0xf]
    %v1126 = vld [vmem:[%s7 + $0x70] sm:$0xff]
    %v1127 = vld [vmem:[%s7 + $0x78] sm:$0xff]
    %v1128 = vld [vmem:[%s7 + $0x80] sm:$0xff]
    %v1129 = vld [vmem:[%s7 + $0x88] sm:$0xf]
    %v1130 = vld [vmem:[%s7 + $0x8c] sm:$0xff]
    %v1131 = vld [vmem:[%s7 + $0x94] sm:$0xff]
    %v1132 = vld [vmem:[%s7 + $0x9c] sm:$0xff]
    %v1133 = vld [vmem:[%s7 + $0xa4] sm:$0xf]
    %v1134 = vld [vmem:[%s7 + $0xa8] sm:$0xff]
    %v1135 = vld [vmem:[%s7 + $0xb0] sm:$0xff]
    %v1136 = vld [vmem:[%s7 + $0xb8] sm:$0xff]
    %v1137 = vld [vmem:[%s7 + $0xc0] sm:$0xf]
    %v1138 = vld [vmem:[%s7 + $0xc4] sm:$0xff]
    %v1139 = vld [vmem:[%s7 + $0xcc] sm:$0xff]
    %v1140 = vld [vmem:[%s7 + $0xd4] sm:$0xff]
    %v1141 = vld [vmem:[%s7 + $0xdc] sm:$0xf]
    %v1142 = vld [vmem:[%s7 + $0xe0] sm:$0xff]
    %v1143 = vld [vmem:[%s7 + $0xe8] sm:$0xff]
    %v1144 = vld [vmem:[%s7 + $0xf0] sm:$0xff]
    %v1145 = vld [vmem:[%s7 + $0xf8] sm:$0xf]
    %v1146 = vld [vmem:[%s7 + $0xfc] sm:$0xff]
    %v1147 = vld [vmem:[%s7 + $0x104] sm:$0xff]
    %v1148 = vld [vmem:[%s7 + $0x10c] sm:$0xff]
    %v1149 = vld [vmem:[%s7 + $0x114] sm:$0xf]
    %v1150 = vld [vmem:[%s7 + $0x118] sm:$0xff]
    %v1151 = vld [vmem:[%s7 + $0x120] sm:$0xff]
    %v1152 = vld [vmem:[%s7 + $0x128] sm:$0xff]
    %v1153 = vld [vmem:[%s7 + $0x130] sm:$0xf]
    %v1154 = vld [vmem:[%s7 + $0x134] sm:$0xff]
    %v1155 = vld [vmem:[%s7 + $0x13c] sm:$0xff]
    %v1156 = vld [vmem:[%s7 + $0x144] sm:$0xff]
    %v1157 = vld [vmem:[%s7 + $0x14c] sm:$0xf]
    %v1158 = vld [vmem:[%s7 + $0x150] sm:$0xff]
    %v1159 = vld [vmem:[%s7 + $0x158] sm:$0xff]
    %v1160 = vld [vmem:[%s7 + $0x160] sm:$0xff]
    %v1161 = vld [vmem:[%s7 + $0x168] sm:$0xf]
    %v1162 = vld [vmem:[%s7 + $0x16c] sm:$0xff]
    %v1163 = vld [vmem:[%s7 + $0x174] sm:$0xff]
    %v1164 = vld [vmem:[%s7 + $0x17c] sm:$0xff]
    %v1165 = vld [vmem:[%s7 + $0x184] sm:$0xf]
    %v1166 = vld [vmem:[%s7 + $0x188] sm:$0xff]
    %v1167 = vld [vmem:[%s7 + $0x190] sm:$0xff]
    %v1168 = vld [vmem:[%s7 + $0x198] sm:$0xff]
    %v1169 = vld [vmem:[%s7 + $0x1a0] sm:$0xf]
    %v1170 = vld [vmem:[%s7 + $0x1a4] sm:$0xff]
    %v1171 = vld [vmem:[%s7 + $0x1ac] sm:$0xff]
    %v1172 = vld [vmem:[%s7 + $0x1b4] sm:$0xff]
    %v1173 = vld [vmem:[%s7 + $0x1bc] sm:$0xf]
    %v1174 = vld [vmem:[%s7 + $0x1c0] sm:$0xff]
    %v1175 = vld [vmem:[%s7 + $0x1c8] sm:$0xff]
    %v1176 = vld [vmem:[%s7 + $0x1d0] sm:$0xff]
    %v1177 = vld [vmem:[%s7 + $0x1d8] sm:$0xf]
    %v1178 = vld [vmem:[%s7 + $0x1dc] sm:$0xff]
    %v1179 = vld [vmem:[%s7 + $0x1e4] sm:$0xff]
    %v1180 = vld [vmem:[%s7 + $0x1ec] sm:$0xff]
    %v1181 = vld [vmem:[%s7 + $0x1f4] sm:$0xf]
    %v1182 = vld [vmem:[%s7 + $0x1f8] sm:$0xff]
    %v1183 = vld [vmem:[%s7 + $0x200] sm:$0xff]
    %v1184 = vld [vmem:[%s7 + $0x208] sm:$0xff]
    %v1185 = vld [vmem:[%s7 + $0x210] sm:$0xf]
    %v1186 = vld [vmem:[%s7 + $0x214] sm:$0xff]
    %v1187 = vld [vmem:[%s7 + $0x21c] sm:$0xff]
    %v1188 = vld [vmem:[%s7 + $0x224] sm:$0xff]
    %v1189 = vld [vmem:[%s7 + $0x22c] sm:$0xf]
    %v1190 = vld [vmem:[%s7 + $0x230] sm:$0xff]
    %v1191 = vld [vmem:[%s7 + $0x238] sm:$0xff]
    %v1192 = vld [vmem:[%s7 + $0x240] sm:$0xff]
    %v1193 = vld [vmem:[%s7 + $0x248] sm:$0xf]
    %v1194 = vld [vmem:[%s7 + $0x24c] sm:$0xff]
    %v1195 = vld [vmem:[%s7 + $0x254] sm:$0xff]
    %v1196 = vld [vmem:[%s7 + $0x25c] sm:$0xff]
    %v1197 = vld [vmem:[%s7 + $0x264] sm:$0xf]
    %v1198 = vld [vmem:[%s7 + $0x268] sm:$0xff]
    %v1199 = vld [vmem:[%s7 + $0x270] sm:$0xff]
    %v1200 = vld [vmem:[%s7 + $0x278] sm:$0xff]
    %v1201 = vld [vmem:[%s7 + $0x280] sm:$0xf]
    %v1202 = vld [vmem:[%s7 + $0x284] sm:$0xff]
    %v1203 = vld [vmem:[%s7 + $0x28c] sm:$0xff]
    %v1204 = vld [vmem:[%s7 + $0x294] sm:$0xff]
    %v1205 = vld [vmem:[%s7 + $0x29c] sm:$0xf]
    %v1206 = vld [vmem:[%s7 + $0x2a0] sm:$0xff]
    %v1207 = vld [vmem:[%s7 + $0x2a8] sm:$0xff]
    %v1208 = vld [vmem:[%s7 + $0x2b0] sm:$0xff]
    %v1209 = vld [vmem:[%s7 + $0x2b8] sm:$0xf]
    %v1210 = vld [vmem:[%s7 + $0x2bc] sm:$0xff]
    %v1211 = vld [vmem:[%s7 + $0x2c4] sm:$0xff]
    %v1212 = vld [vmem:[%s7 + $0x2cc] sm:$0xff]
    %v1213 = vld [vmem:[%s7 + $0x2d4] sm:$0xf]
    %v1214 = vld [vmem:[%s7 + $0x2d8] sm:$0xff]
    %v1215 = vld [vmem:[%s7 + $0x2e0] sm:$0xff]
    %v1216 = vld [vmem:[%s7 + $0x2e8] sm:$0xff]
    %v1217 = vld [vmem:[%s7 + $0x2f0] sm:$0xf]
    %v1218 = vld [vmem:[%s7 + $0x2f4] sm:$0xff]
    %v1219 = vld [vmem:[%s7 + $0x2fc] sm:$0xff]
    %v1220 = vld [vmem:[%s7 + $0x304] sm:$0xff]
    %v1221 = vld [vmem:[%s7 + $0x30c] sm:$0xf]
    %v1222 = vld [vmem:[%s7 + $0x310] sm:$0xff]
    %v1223 = vld [vmem:[%s7 + $0x318] sm:$0xff]
    %v1224 = vld [vmem:[%s7 + $0x320] sm:$0xff]
    %v1225 = vld [vmem:[%s7 + $0x328] sm:$0xf]
    %v1226 = vld [vmem:[%s7 + $0x32c] sm:$0xff]
    %v1227 = vld [vmem:[%s7 + $0x334] sm:$0xff]
    %v1228 = vld [vmem:[%s7 + $0x33c] sm:$0xff]
    %v1229 = vld [vmem:[%s7 + $0x344] sm:$0xf]
    %v1230 = vld [vmem:[%s7 + $0x348] sm:$0xff]
    %v1231 = vld [vmem:[%s7 + $0x350] sm:$0xff]
    %v1232 = vld [vmem:[%s7 + $0x358] sm:$0xff]
    %v1233 = vld [vmem:[%s7 + $0x360] sm:$0xf]
    %v1234 = vld [vmem:[%s7 + $0x364] sm:$0xff]
    %v1235 = vld [vmem:[%s7 + $0x36c] sm:$0xff]
    %v1236 = vld [vmem:[%s7 + $0x374] sm:$0xff]
    %v1237 = vld [vmem:[%s7 + $0x37c] sm:$0xf]
    %v1238 = vld [vmem:[%s8] sm:$0x7f]
    %v1240 = vperm.slane %v1238, 0
    %v1241 = vperm.slane %v1238, 1
    %v1242 = vperm.slane %v1238, 2
    %v1243 = vperm.slane %v1238, 3
    %v1244 = vperm.slane %v1238, 4
    %v1245 = vperm.slane %v1238, 5
    %v1246 = vperm.slane %v1238, 6
    %v1382 = vunpack.c.l.b16 %v1110
    %v1383 = vunpack.c.h.b16 %v1110
    %v1384 = vunpack.c.l.b16 %v1111
    %v1385 = vunpack.c.h.b16 %v1111
    %v1386 = vunpack.c.l.b16 %v1112
    %v1387 = vunpack.c.h.b16 %v1112
    %v1388 = vunpack.c.l.b16 %v1113
    %v1389 = vunpack.c.l.b16 %v1114
    %v1390 = vunpack.c.h.b16 %v1114
    %v1391 = vunpack.c.l.b16 %v1115
    %v1392 = vunpack.c.h.b16 %v1115
    %v1393 = vunpack.c.l.b16 %v1116
    %v1394 = vunpack.c.h.b16 %v1116
    %v1395 = vunpack.c.l.b16 %v1117
    %v1396 = vunpack.c.l.b16 %v1118
    %v1397 = vunpack.c.h.b16 %v1118
    %v1398 = vunpack.c.l.b16 %v1119
    %v1399 = vunpack.c.h.b16 %v1119
    %v1400 = vunpack.c.l.b16 %v1120
    %v1401 = vunpack.c.h.b16 %v1120
    %v1402 = vunpack.c.l.b16 %v1121
    %v1403 = vunpack.c.l.b16 %v1122
    %v1404 = vunpack.c.h.b16 %v1122
    %v1405 = vunpack.c.l.b16 %v1123
    %v1406 = vunpack.c.h.b16 %v1123
    %v1407 = vunpack.c.l.b16 %v1124
    %v1408 = vunpack.c.h.b16 %v1124
    %v1409 = vunpack.c.l.b16 %v1125
    %v1410 = vunpack.c.l.b16 %v1126
    %v1411 = vunpack.c.h.b16 %v1126
    %v1412 = vunpack.c.l.b16 %v1127
    %v1413 = vunpack.c.h.b16 %v1127
    %v1414 = vunpack.c.l.b16 %v1128
    %v1415 = vunpack.c.h.b16 %v1128
    %v1416 = vunpack.c.l.b16 %v1129
    %v1417 = vunpack.c.l.b16 %v1130
    %v1418 = vunpack.c.h.b16 %v1130
    %v1419 = vunpack.c.l.b16 %v1131
    %v1420 = vunpack.c.h.b16 %v1131
    %v1421 = vunpack.c.l.b16 %v1132
    %v1422 = vunpack.c.h.b16 %v1132
    %v1423 = vunpack.c.l.b16 %v1133
    %v1424 = vunpack.c.l.b16 %v1134
    %v1425 = vunpack.c.h.b16 %v1134
    %v1426 = vunpack.c.l.b16 %v1135
    %v1427 = vunpack.c.h.b16 %v1135
    %v1428 = vunpack.c.l.b16 %v1136
    %v1429 = vunpack.c.h.b16 %v1136
    %v1430 = vunpack.c.l.b16 %v1137
    %v1431 = vunpack.c.l.b16 %v1138
    %v1432 = vunpack.c.h.b16 %v1138
    %v1433 = vunpack.c.l.b16 %v1139
    %v1434 = vunpack.c.h.b16 %v1139
    %v1435 = vunpack.c.l.b16 %v1140
    %v1436 = vunpack.c.h.b16 %v1140
    %v1437 = vunpack.c.l.b16 %v1141
    %v1438 = vunpack.c.l.b16 %v1142
    %v1439 = vunpack.c.h.b16 %v1142
    %v1440 = vunpack.c.l.b16 %v1143
    %v1441 = vunpack.c.h.b16 %v1143
    %v1442 = vunpack.c.l.b16 %v1144
    %v1443 = vunpack.c.h.b16 %v1144
    %v1444 = vunpack.c.l.b16 %v1145
    %v1445 = vunpack.c.l.b16 %v1146
    %v1446 = vunpack.c.h.b16 %v1146
    %v1447 = vunpack.c.l.b16 %v1147
    %v1448 = vunpack.c.h.b16 %v1147
    %v1449 = vunpack.c.l.b16 %v1148
    %v1450 = vunpack.c.h.b16 %v1148
    %v1451 = vunpack.c.l.b16 %v1149
    %v1452 = vunpack.c.l.b16 %v1150
    %v1453 = vunpack.c.h.b16 %v1150
    %v1454 = vunpack.c.l.b16 %v1151
    %v1455 = vunpack.c.h.b16 %v1151
    %v1456 = vunpack.c.l.b16 %v1152
    %v1457 = vunpack.c.h.b16 %v1152
    %v1458 = vunpack.c.l.b16 %v1153
    %v1459 = vunpack.c.l.b16 %v1154
    %v1460 = vunpack.c.h.b16 %v1154
    %v1461 = vunpack.c.l.b16 %v1155
    %v1462 = vunpack.c.h.b16 %v1155
    %v1463 = vunpack.c.l.b16 %v1156
    %v1464 = vunpack.c.h.b16 %v1156
    %v1465 = vunpack.c.l.b16 %v1157
    %v1466 = vunpack.c.l.b16 %v1158
    %v1467 = vunpack.c.h.b16 %v1158
    %v1468 = vunpack.c.l.b16 %v1159
    %v1469 = vunpack.c.h.b16 %v1159
    %v1470 = vunpack.c.l.b16 %v1160
    %v1471 = vunpack.c.h.b16 %v1160
    %v1472 = vunpack.c.l.b16 %v1161
    %v1473 = vunpack.c.l.b16 %v1162
    %v1474 = vunpack.c.h.b16 %v1162
    %v1475 = vunpack.c.l.b16 %v1163
    %v1476 = vunpack.c.h.b16 %v1163
    %v1477 = vunpack.c.l.b16 %v1164
    %v1478 = vunpack.c.h.b16 %v1164
    %v1479 = vunpack.c.l.b16 %v1165
    %v1480 = vunpack.c.l.b16 %v1166
    %v1481 = vunpack.c.h.b16 %v1166
    %v1482 = vunpack.c.l.b16 %v1167
    %v1483 = vunpack.c.h.b16 %v1167
    %v1484 = vunpack.c.l.b16 %v1168
    %v1485 = vunpack.c.h.b16 %v1168
    %v1486 = vunpack.c.l.b16 %v1169
    %v1487 = vunpack.c.l.b16 %v1170
    %v1488 = vunpack.c.h.b16 %v1170
    %v1489 = vunpack.c.l.b16 %v1171
    %v1490 = vunpack.c.h.b16 %v1171
    %v1491 = vunpack.c.l.b16 %v1172
    %v1492 = vunpack.c.h.b16 %v1172
    %v1493 = vunpack.c.l.b16 %v1173
    %v1494 = vunpack.c.l.b16 %v1174
    %v1495 = vunpack.c.h.b16 %v1174
    %v1496 = vunpack.c.l.b16 %v1175
    %v1497 = vunpack.c.h.b16 %v1175
    %v1498 = vunpack.c.l.b16 %v1176
    %v1499 = vunpack.c.h.b16 %v1176
    %v1500 = vunpack.c.l.b16 %v1177
    %v1501 = vunpack.c.l.b16 %v1178
    %v1502 = vunpack.c.h.b16 %v1178
    %v1503 = vunpack.c.l.b16 %v1179
    %v1504 = vunpack.c.h.b16 %v1179
    %v1505 = vunpack.c.l.b16 %v1180
    %v1506 = vunpack.c.h.b16 %v1180
    %v1507 = vunpack.c.l.b16 %v1181
    %v1508 = vunpack.c.l.b16 %v1182
    %v1509 = vunpack.c.h.b16 %v1182
    %v1510 = vunpack.c.l.b16 %v1183
    %v1511 = vunpack.c.h.b16 %v1183
    %v1512 = vunpack.c.l.b16 %v1184
    %v1513 = vunpack.c.h.b16 %v1184
    %v1514 = vunpack.c.l.b16 %v1185
    %v1515 = vunpack.c.l.b16 %v1186
    %v1516 = vunpack.c.h.b16 %v1186
    %v1517 = vunpack.c.l.b16 %v1187
    %v1518 = vunpack.c.h.b16 %v1187
    %v1519 = vunpack.c.l.b16 %v1188
    %v1520 = vunpack.c.h.b16 %v1188
    %v1521 = vunpack.c.l.b16 %v1189
    %v1522 = vunpack.c.l.b16 %v1190
    %v1523 = vunpack.c.h.b16 %v1190
    %v1524 = vunpack.c.l.b16 %v1191
    %v1525 = vunpack.c.h.b16 %v1191
    %v1526 = vunpack.c.l.b16 %v1192
    %v1527 = vunpack.c.h.b16 %v1192
    %v1528 = vunpack.c.l.b16 %v1193
    %v1529 = vunpack.c.l.b16 %v1194
    %v1530 = vunpack.c.h.b16 %v1194
    %v1531 = vunpack.c.l.b16 %v1195
    %v1532 = vunpack.c.h.b16 %v1195
    %v1533 = vunpack.c.l.b16 %v1196
    %v1534 = vunpack.c.h.b16 %v1196
    %v1535 = vunpack.c.l.b16 %v1197
    %v1536 = vunpack.c.l.b16 %v1198
    %v1537 = vunpack.c.h.b16 %v1198
    %v1538 = vunpack.c.l.b16 %v1199
    %v1539 = vunpack.c.h.b16 %v1199
    %v1540 = vunpack.c.l.b16 %v1200
    %v1541 = vunpack.c.h.b16 %v1200
    %v1542 = vunpack.c.l.b16 %v1201
    %v1543 = vunpack.c.l.b16 %v1202
    %v1544 = vunpack.c.h.b16 %v1202
    %v1545 = vunpack.c.l.b16 %v1203
    %v1546 = vunpack.c.h.b16 %v1203
    %v1547 = vunpack.c.l.b16 %v1204
    %v1548 = vunpack.c.h.b16 %v1204
    %v1549 = vunpack.c.l.b16 %v1205
    %v1550 = vunpack.c.l.b16 %v1206
    %v1551 = vunpack.c.h.b16 %v1206
    %v1552 = vunpack.c.l.b16 %v1207
    %v1553 = vunpack.c.h.b16 %v1207
    %v1554 = vunpack.c.l.b16 %v1208
    %v1555 = vunpack.c.h.b16 %v1208
    %v1556 = vunpack.c.l.b16 %v1209
    %v1557 = vunpack.c.l.b16 %v1210
    %v1558 = vunpack.c.h.b16 %v1210
    %v1559 = vunpack.c.l.b16 %v1211
    %v1560 = vunpack.c.h.b16 %v1211
    %v1561 = vunpack.c.l.b16 %v1212
    %v1562 = vunpack.c.h.b16 %v1212
    %v1563 = vunpack.c.l.b16 %v1213
    %v1564 = vunpack.c.l.b16 %v1214
    %v1565 = vunpack.c.h.b16 %v1214
    %v1566 = vunpack.c.l.b16 %v1215
    %v1567 = vunpack.c.h.b16 %v1215
    %v1568 = vunpack.c.l.b16 %v1216
    %v1569 = vunpack.c.h.b16 %v1216
    %v1570 = vunpack.c.l.b16 %v1217
    %v1571 = vunpack.c.l.b16 %v1218
    %v1572 = vunpack.c.h.b16 %v1218
    %v1573 = vunpack.c.l.b16 %v1219
    %v1574 = vunpack.c.h.b16 %v1219
    %v1575 = vunpack.c.l.b16 %v1220
    %v1576 = vunpack.c.h.b16 %v1220
    %v1577 = vunpack.c.l.b16 %v1221
    %v1578 = vunpack.c.l.b16 %v1222
    %v1579 = vunpack.c.h.b16 %v1222
    %v1580 = vunpack.c.l.b16 %v1223
    %v1581 = vunpack.c.h.b16 %v1223
    %v1582 = vunpack.c.l.b16 %v1224
    %v1583 = vunpack.c.h.b16 %v1224
    %v1584 = vunpack.c.l.b16 %v1225
    %v1585 = vunpack.c.l.b16 %v1226
    %v1586 = vunpack.c.h.b16 %v1226
    %v1587 = vunpack.c.l.b16 %v1227
    %v1588 = vunpack.c.h.b16 %v1227
    %v1589 = vunpack.c.l.b16 %v1228
    %v1590 = vunpack.c.h.b16 %v1228
    %v1591 = vunpack.c.l.b16 %v1229
    %v1592 = vunpack.c.l.b16 %v1230
    %v1593 = vunpack.c.h.b16 %v1230
    %v1594 = vunpack.c.l.b16 %v1231
    %v1595 = vunpack.c.h.b16 %v1231
    %v1596 = vunpack.c.l.b16 %v1232
    %v1597 = vunpack.c.h.b16 %v1232
    %v1598 = vunpack.c.l.b16 %v1233
    %v1599 = vunpack.c.l.b16 %v1234
    %v1600 = vunpack.c.h.b16 %v1234
    %v1601 = vunpack.c.l.b16 %v1235
    %v1602 = vunpack.c.h.b16 %v1235
    %v1603 = vunpack.c.l.b16 %v1236
    %v1604 = vunpack.c.h.b16 %v1236
    %v1605 = vunpack.c.l.b16 %v1237
    %v1606 = vpack.c.b16 %v1389, %v1382
    %v1607 = vpack.c.b16 %v1390, %v1383
    %v1608 = vpack.c.b16 %v1391, %v1384
    %v1609 = vpack.c.b16 %v1392, %v1385
    %v1610 = vpack.c.b16 %v1393, %v1386
    %v1611 = vpack.c.b16 %v1394, %v1387
    %v1612 = vpack.c.b16 %v1395, %v1388
    %v1613 = vpack.c.b16 %v1403, %v1396
    %v1614 = vpack.c.b16 %v1404, %v1397
    %v1615 = vpack.c.b16 %v1405, %v1398
    %v1616 = vpack.c.b16 %v1406, %v1399
    %v1617 = vpack.c.b16 %v1407, %v1400
    %v1618 = vpack.c.b16 %v1408, %v1401
    %v1619 = vpack.c.b16 %v1409, %v1402
    %v1620 = vpack.c.b16 %v1417, %v1410
    %v1621 = vpack.c.b16 %v1418, %v1411
    %v1622 = vpack.c.b16 %v1419, %v1412
    %v1623 = vpack.c.b16 %v1420, %v1413
    %v1624 = vpack.c.b16 %v1421, %v1414
    %v1625 = vpack.c.b16 %v1422, %v1415
    %v1626 = vpack.c.b16 %v1423, %v1416
    %v1627 = vpack.c.b16 %v1431, %v1424
    %v1628 = vpack.c.b16 %v1432, %v1425
    %v1629 = vpack.c.b16 %v1433, %v1426
    %v1630 = vpack.c.b16 %v1434, %v1427
    %v1631 = vpack.c.b16 %v1435, %v1428
    %v1632 = vpack.c.b16 %v1436, %v1429
    %v1633 = vpack.c.b16 %v1437, %v1430
    %v1634 = vpack.c.b16 %v1445, %v1438
    %v1635 = vpack.c.b16 %v1446, %v1439
    %v1636 = vpack.c.b16 %v1447, %v1440
    %v1637 = vpack.c.b16 %v1448, %v1441
    %v1638 = vpack.c.b16 %v1449, %v1442
    %v1639 = vpack.c.b16 %v1450, %v1443
    %v1640 = vpack.c.b16 %v1451, %v1444
    %v1641 = vpack.c.b16 %v1459, %v1452
    %v1642 = vpack.c.b16 %v1460, %v1453
    %v1643 = vpack.c.b16 %v1461, %v1454
    %v1644 = vpack.c.b16 %v1462, %v1455
    %v1645 = vpack.c.b16 %v1463, %v1456
    %v1646 = vpack.c.b16 %v1464, %v1457
    %v1647 = vpack.c.b16 %v1465, %v1458
    %v1648 = vpack.c.b16 %v1473, %v1466
    %v1649 = vpack.c.b16 %v1474, %v1467
    %v1650 = vpack.c.b16 %v1475, %v1468
    %v1651 = vpack.c.b16 %v1476, %v1469
    %v1652 = vpack.c.b16 %v1477, %v1470
    %v1653 = vpack.c.b16 %v1478, %v1471
    %v1654 = vpack.c.b16 %v1479, %v1472
    %v1655 = vpack.c.b16 %v1487, %v1480
    %v1656 = vpack.c.b16 %v1488, %v1481
    %v1657 = vpack.c.b16 %v1489, %v1482
    %v1658 = vpack.c.b16 %v1490, %v1483
    %v1659 = vpack.c.b16 %v1491, %v1484
    %v1660 = vpack.c.b16 %v1492, %v1485
    %v1661 = vpack.c.b16 %v1493, %v1486
    %v1662 = vpack.c.b16 %v1501, %v1494
    %v1663 = vpack.c.b16 %v1502, %v1495
    %v1664 = vpack.c.b16 %v1503, %v1496
    %v1665 = vpack.c.b16 %v1504, %v1497
    %v1666 = vpack.c.b16 %v1505, %v1498
    %v1667 = vpack.c.b16 %v1506, %v1499
    %v1668 = vpack.c.b16 %v1507, %v1500
    %v1669 = vpack.c.b16 %v1515, %v1508
    %v1670 = vpack.c.b16 %v1516, %v1509
    %v1671 = vpack.c.b16 %v1517, %v1510
    %v1672 = vpack.c.b16 %v1518, %v1511
    %v1673 = vpack.c.b16 %v1519, %v1512
    %v1674 = vpack.c.b16 %v1520, %v1513
    %v1675 = vpack.c.b16 %v1521, %v1514
    %v1676 = vpack.c.b16 %v1529, %v1522
    %v1677 = vpack.c.b16 %v1530, %v1523
    %v1678 = vpack.c.b16 %v1531, %v1524
    %v1679 = vpack.c.b16 %v1532, %v1525
    %v1680 = vpack.c.b16 %v1533, %v1526
    %v1681 = vpack.c.b16 %v1534, %v1527
    %v1682 = vpack.c.b16 %v1535, %v1528
    %v1683 = vpack.c.b16 %v1543, %v1536
    %v1684 = vpack.c.b16 %v1544, %v1537
    %v1685 = vpack.c.b16 %v1545, %v1538
    %v1686 = vpack.c.b16 %v1546, %v1539
    %v1687 = vpack.c.b16 %v1547, %v1540
    %v1688 = vpack.c.b16 %v1548, %v1541
    %v1689 = vpack.c.b16 %v1549, %v1542
    %v1690 = vpack.c.b16 %v1557, %v1550
    %v1691 = vpack.c.b16 %v1558, %v1551
    %v1692 = vpack.c.b16 %v1559, %v1552
    %v1693 = vpack.c.b16 %v1560, %v1553
    %v1694 = vpack.c.b16 %v1561, %v1554
    %v1695 = vpack.c.b16 %v1562, %v1555
    %v1696 = vpack.c.b16 %v1563, %v1556
    %v1697 = vpack.c.b16 %v1571, %v1564
    %v1698 = vpack.c.b16 %v1572, %v1565
    %v1699 = vpack.c.b16 %v1573, %v1566
    %v1700 = vpack.c.b16 %v1574, %v1567
    %v1701 = vpack.c.b16 %v1575, %v1568
    %v1702 = vpack.c.b16 %v1576, %v1569
    %v1703 = vpack.c.b16 %v1577, %v1570
    %v1704 = vpack.c.b16 %v1585, %v1578
    %v1705 = vpack.c.b16 %v1586, %v1579
    %v1706 = vpack.c.b16 %v1587, %v1580
    %v1707 = vpack.c.b16 %v1588, %v1581
    %v1708 = vpack.c.b16 %v1589, %v1582
    %v1709 = vpack.c.b16 %v1590, %v1583
    %v1710 = vpack.c.b16 %v1591, %v1584
    %v1711 = vpack.c.b16 %v1599, %v1592
    %v1712 = vpack.c.b16 %v1600, %v1593
    %v1713 = vpack.c.b16 %v1601, %v1594
    %v1714 = vpack.c.b16 %v1602, %v1595
    %v1715 = vpack.c.b16 %v1603, %v1596
    %v1716 = vpack.c.b16 %v1604, %v1597
    %v1717 = vpack.c.b16 %v1605, %v1598
    %1830 = vmatpush.bf16.msra.mxu0 %v1655
    %1831 = vmatpush.bf16.msra.mxu0 %v1648
    %1832 = vmatpush.bf16.msra.mxu0 %v1641
    %1833 = vmatpush.bf16.msra.mxu0 %v1634
    %1834 = vmatpush.bf16.msra.mxu0 %v1627
    %1835 = vmatpush.bf16.msra.mxu0 %v1620
    %1836 = vmatpush.bf16.msra.mxu0 %v1613
    %1837 = vmatpush.bf16.msra.mxu0 %v1606
    %1838 = vmatmul.bf16.gmra.mxu0 %v1108
    %v1839 = vpop.f32.mrf.mxu0
    %v1840 = vadd.f32 %v1240, %v1839
    %v1841 = vpop.f32.mrf.mxu0
    %v1842 = vadd.f32 %v1240, %v1841
    %1843 = vdwg.mxu0
    %1844 = vmatpush.bf16.msra.mxu0 %v1711
    %1845 = vmatpush.bf16.msra.mxu0 %v1704
    %1846 = vmatpush.bf16.msra.mxu0 %v1697
    %1847 = vmatpush.bf16.msra.mxu0 %v1690
    %1848 = vmatpush.bf16.msra.mxu0 %v1683
    %1849 = vmatpush.bf16.msra.mxu0 %v1676
    %1850 = vmatpush.bf16.msra.mxu0 %v1669
    %1851 = vmatpush.bf16.msra.mxu0 %v1662
    %1852 = vmatmul.bf16.gmra.mxu0 %v1109
    %v1853 = vpop.f32.mrf.mxu0
    %v1854 = vadd.f32 %v1840, %v1853
    %v1855 = vpop.f32.mrf.mxu0
    %v1856 = vadd.f32 %v1842, %v1855
    %1857 = vdwg.mxu0
    %1858 = vmatpush.bf16.msra.mxu0 %v1656
    %1859 = vmatpush.bf16.msra.mxu0 %v1649
    %1860 = vmatpush.bf16.msra.mxu0 %v1642
    %1861 = vmatpush.bf16.msra.mxu0 %v1635
    %1862 = vmatpush.bf16.msra.mxu0 %v1628
    %1863 = vmatpush.bf16.msra.mxu0 %v1621
    %1864 = vmatpush.bf16.msra.mxu0 %v1614
    %1865 = vmatpush.bf16.msra.mxu0 %v1607
    %1866 = vmatmul.bf16.gmra.mxu0 %v1108
    %v1867 = vpop.f32.mrf.mxu0
    %v1868 = vadd.f32 %v1241, %v1867
    %v1869 = vpop.f32.mrf.mxu0
    %v1870 = vadd.f32 %v1241, %v1869
    %1871 = vdwg.mxu0
    %1872 = vmatpush.bf16.msra.mxu0 %v1712
    %1873 = vmatpush.bf16.msra.mxu0 %v1705
    %1874 = vmatpush.bf16.msra.mxu0 %v1698
    %1875 = vmatpush.bf16.msra.mxu0 %v1691
    %1876 = vmatpush.bf16.msra.mxu0 %v1684
    %1877 = vmatpush.bf16.msra.mxu0 %v1677
    %1878 = vmatpush.bf16.msra.mxu0 %v1670
    %1879 = vmatpush.bf16.msra.mxu0 %v1663
    %1880 = vmatmul.bf16.gmra.mxu0 %v1109
    %v1881 = vpop.f32.mrf.mxu0
    %v1882 = vadd.f32 %v1868, %v1881
    %v1883 = vpop.f32.mrf.mxu0
    %v1884 = vadd.f32 %v1870, %v1883
    %1885 = vdwg.mxu0
    %1886 = vmatpush.bf16.msra.mxu0 %v1657
    %1887 = vmatpush.bf16.msra.mxu0 %v1650
    %1888 = vmatpush.bf16.msra.mxu0 %v1643
    %1889 = vmatpush.bf16.msra.mxu0 %v1636
    %1890 = vmatpush.bf16.msra.mxu0 %v1629
    %1891 = vmatpush.bf16.msra.mxu0 %v1622
    %1892 = vmatpush.bf16.msra.mxu0 %v1615
    %1893 = vmatpush.bf16.msra.mxu0 %v1608
    %1894 = vmatmul.bf16.gmra.mxu0 %v1108
    %v1895 = vpop.f32.mrf.mxu0
    %v1896 = vadd.f32 %v1242, %v1895
    %v1897 = vpop.f32.mrf.mxu0
    %v1898 = vadd.f32 %v1242, %v1897
    %1899 = vdwg.mxu0
    %1900 = vmatpush.bf16.msra.mxu0 %v1713
    %1901 = vmatpush.bf16.msra.mxu0 %v1706
    %1902 = vmatpush.bf16.msra.mxu0 %v1699
    %1903 = vmatpush.bf16.msra.mxu0 %v1692
    %1904 = vmatpush.bf16.msra.mxu0 %v1685
    %1905 = vmatpush.bf16.msra.mxu0 %v1678
    %1906 = vmatpush.bf16.msra.mxu0 %v1671
    %1907 = vmatpush.bf16.msra.mxu0 %v1664
    %1908 = vmatmul.bf16.gmra.mxu0 %v1109
    %v1909 = vpop.f32.mrf.mxu0
    %v1910 = vadd.f32 %v1896, %v1909
    %v1911 = vpop.f32.mrf.mxu0
    %v1912 = vadd.f32 %v1898, %v1911
    %1913 = vdwg.mxu0
    %1914 = vmatpush.bf16.msra.mxu0 %v1658
    %1915 = vmatpush.bf16.msra.mxu0 %v1651
    %1916 = vmatpush.bf16.msra.mxu0 %v1644
    %1917 = vmatpush.bf16.msra.mxu0 %v1637
    %1918 = vmatpush.bf16.msra.mxu0 %v1630
    %1919 = vmatpush.bf16.msra.mxu0 %v1623
    %1920 = vmatpush.bf16.msra.mxu0 %v1616
    %1921 = vmatpush.bf16.msra.mxu0 %v1609
    %1922 = vmatmul.bf16.gmra.mxu0 %v1108
    %v1923 = vpop.f32.mrf.mxu0
    %v1924 = vadd.f32 %v1243, %v1923
    %v1925 = vpop.f32.mrf.mxu0
    %v1926 = vadd.f32 %v1243, %v1925
    %1927 = vdwg.mxu0
    %1928 = vmatpush.bf16.msra.mxu0 %v1714
    %1929 = vmatpush.bf16.msra.mxu0 %v1707
    %1930 = vmatpush.bf16.msra.mxu0 %v1700
    %1931 = vmatpush.bf16.msra.mxu0 %v1693
    %1932 = vmatpush.bf16.msra.mxu0 %v1686
    %1933 = vmatpush.bf16.msra.mxu0 %v1679
    %1934 = vmatpush.bf16.msra.mxu0 %v1672
    %1935 = vmatpush.bf16.msra.mxu0 %v1665
    %1936 = vmatmul.bf16.gmra.mxu0 %v1109
    %v1937 = vpop.f32.mrf.mxu0
    %v1938 = vadd.f32 %v1924, %v1937
    %v1939 = vpop.f32.mrf.mxu0
    %v1940 = vadd.f32 %v1926, %v1939
    %1941 = vdwg.mxu0
    %1942 = vmatpush.bf16.msra.mxu0 %v1659
    %1943 = vmatpush.bf16.msra.mxu0 %v1652
    %1944 = vmatpush.bf16.msra.mxu0 %v1645
    %1945 = vmatpush.bf16.msra.mxu0 %v1638
    %1946 = vmatpush.bf16.msra.mxu0 %v1631
    %1947 = vmatpush.bf16.msra.mxu0 %v1624
    %1948 = vmatpush.bf16.msra.mxu0 %v1617
    %1949 = vmatpush.bf16.msra.mxu0 %v1610
    %1950 = vmatmul.bf16.gmra.mxu0 %v1108
    %v1951 = vpop.f32.mrf.mxu0
    %v1952 = vadd.f32 %v1244, %v1951
    %v1953 = vpop.f32.mrf.mxu0
    %v1954 = vadd.f32 %v1244, %v1953
    %1955 = vdwg.mxu0
    %1956 = vmatpush.bf16.msra.mxu0 %v1715
    %1957 = vmatpush.bf16.msra.mxu0 %v1708
    %1958 = vmatpush.bf16.msra.mxu0 %v1701
    %1959 = vmatpush.bf16.msra.mxu0 %v1694
    %1960 = vmatpush.bf16.msra.mxu0 %v1687
    %1961 = vmatpush.bf16.msra.mxu0 %v1680
    %1962 = vmatpush.bf16.msra.mxu0 %v1673
    %1963 = vmatpush.bf16.msra.mxu0 %v1666
    %1964 = vmatmul.bf16.gmra.mxu0 %v1109
    %v1965 = vpop.f32.mrf.mxu0
    %v1966 = vadd.f32 %v1952, %v1965
    %v1967 = vpop.f32.mrf.mxu0
    %v1968 = vadd.f32 %v1954, %v1967
    %1969 = vdwg.mxu0
    %1970 = vmatpush.bf16.msra.mxu0 %v1660
    %1971 = vmatpush.bf16.msra.mxu0 %v1653
    %1972 = vmatpush.bf16.msra.mxu0 %v1646
    %1973 = vmatpush.bf16.msra.mxu0 %v1639
    %1974 = vmatpush.bf16.msra.mxu0 %v1632
    %1975 = vmatpush.bf16.msra.mxu0 %v1625
    %1976 = vmatpush.bf16.msra.mxu0 %v1618
    %1977 = vmatpush.bf16.msra.mxu0 %v1611
    %1978 = vmatmul.bf16.gmra.mxu0 %v1108
    %v1979 = vpop.f32.mrf.mxu0
    %v1980 = vadd.f32 %v1245, %v1979
    %v1981 = vpop.f32.mrf.mxu0
    %v1982 = vadd.f32 %v1245, %v1981
    %1983 = vdwg.mxu0
    %1984 = vmatpush.bf16.msra.mxu0 %v1716
    %1985 = vmatpush.bf16.msra.mxu0 %v1709
    %1986 = vmatpush.bf16.msra.mxu0 %v1702
    %1987 = vmatpush.bf16.msra.mxu0 %v1695
    %1988 = vmatpush.bf16.msra.mxu0 %v1688
    %1989 = vmatpush.bf16.msra.mxu0 %v1681
    %1990 = vmatpush.bf16.msra.mxu0 %v1674
    %1991 = vmatpush.bf16.msra.mxu0 %v1667
    %1992 = vmatmul.bf16.gmra.mxu0 %v1109
    %v1993 = vpop.f32.mrf.mxu0
    %v1994 = vadd.f32 %v1980, %v1993
    %v1995 = vpop.f32.mrf.mxu0
    %v1996 = vadd.f32 %v1982, %v1995
    %1997 = vdwg.mxu0
    %1998 = vmatpush.bf16.msra.mxu0 %v1661
    %1999 = vmatpush.bf16.msra.mxu0 %v1654
    %2000 = vmatpush.bf16.msra.mxu0 %v1647
    %2001 = vmatpush.bf16.msra.mxu0 %v1640
    %2002 = vmatpush.bf16.msra.mxu0 %v1633
    %2003 = vmatpush.bf16.msra.mxu0 %v1626
    %2004 = vmatpush.bf16.msra.mxu0 %v1619
    %2005 = vmatpush.bf16.msra.mxu0 %v1612
    %2006 = vmatmul.bf16.gmra.mxu0 %v1108
    %v2007 = vpop.f32.mrf.mxu0
    %v2008 = vadd.f32 %v1246, %v2007
    %v2009 = vpop.f32.mrf.mxu0
    %v2010 = vadd.f32 %v1246, %v2009
    %2011 = vdwg.mxu0
    %2012 = vmatpush.bf16.msra.mxu0 %v1717
    %2013 = vmatpush.bf16.msra.mxu0 %v1710
    %2014 = vmatpush.bf16.msra.mxu0 %v1703
    %2015 = vmatpush.bf16.msra.mxu0 %v1696
    %2016 = vmatpush.bf16.msra.mxu0 %v1689
    %2017 = vmatpush.bf16.msra.mxu0 %v1682
    %2018 = vmatpush.bf16.msra.mxu0 %v1675
    %2019 = vmatpush.bf16.msra.mxu0 %v1668
    %2020 = vmatmul.bf16.gmra.mxu0 %v1109
    %v2021 = vpop.f32.mrf.mxu0
    %v2022 = vadd.f32 %v2008, %v2021
    %v2023 = vpop.f32.mrf.mxu0
    %v2024 = vadd.f32 %v2010, %v2023
    %2025 = vdwg.mxu0
    %v2026 = vsub.f32 0.0, %v1854
    %v2027 = vsub.f32 0.0, %v1882
    %v2028 = vsub.f32 0.0, %v1910
    %v2029 = vsub.f32 0.0, %v1938
    %v2030 = vsub.f32 0.0, %v1966
    %v2031 = vsub.f32 0.0, %v1994
    %v2032 = vsub.f32 0.0, %v2022
    %v2033 = vsub.f32 0.0, %v1856
    %v2034 = vsub.f32 0.0, %v1884
    %v2035 = vsub.f32 0.0, %v1912
    %v2036 = vsub.f32 0.0, %v1940
    %v2037 = vsub.f32 0.0, %v1968
    %v2038 = vsub.f32 0.0, %v1996
    %v2039 = vsub.f32 0.0, %v2024
    %v2040 = vmul.f32 %v2026, 1.442695
    %v2041 = vpow.pop %v2040
    %v2042 = vmul.f32 %v2027, 1.442695
    %v2043 = vpow.pop %v2042
    %v2044 = vmul.f32 %v2028, 1.442695
    %v2045 = vpow.pop %v2044
    %v2046 = vmul.f32 %v2029, 1.442695
    %v2047 = vpow.pop %v2046
    %v2048 = vmul.f32 %v2030, 1.442695
    %v2049 = vpow.pop %v2048
    %v2050 = vmul.f32 %v2031, 1.442695
    %v2051 = vpow.pop %v2050
    %v2052 = vmul.f32 %v2032, 1.442695
    %v2053 = vpow.pop %v2052
    %v2054 = vmul.f32 %v2033, 1.442695
    %v2055 = vpow.pop %v2054
    %v2056 = vmul.f32 %v2034, 1.442695
    %v2057 = vpow.pop %v2056
    %v2058 = vmul.f32 %v2035, 1.442695
    %v2059 = vpow.pop %v2058
    %v2060 = vmul.f32 %v2036, 1.442695
    %v2061 = vpow.pop %v2060
    %v2062 = vmul.f32 %v2037, 1.442695
    %v2063 = vpow.pop %v2062
    %v2064 = vmul.f32 %v2038, 1.442695
    %v2065 = vpow.pop %v2064
    %v2066 = vmul.f32 %v2039, 1.442695
    %v2067 = vpow.pop %v2066
    %v2068 = vadd.f32 %v2041, 1.0
    %v2069 = vadd.f32 %v2043, 1.0
    %v2070 = vadd.f32 %v2045, 1.0
    %v2071 = vadd.f32 %v2047, 1.0
    %v2072 = vadd.f32 %v2049, 1.0
    %v2073 = vadd.f32 %v2051, 1.0
    %v2074 = vadd.f32 %v2053, 1.0
    %v2075 = vadd.f32 %v2055, 1.0
    %v2076 = vadd.f32 %v2057, 1.0
    %v2077 = vadd.f32 %v2059, 1.0
    %v2078 = vadd.f32 %v2061, 1.0
    %v2079 = vadd.f32 %v2063, 1.0
    %v2080 = vadd.f32 %v2065, 1.0
    %v2081 = vadd.f32 %v2067, 1.0
    %v2082 = vrcp.pop %v2068
    %v2083 = vrcp.pop %v2069
    %v2084 = vrcp.pop %v2070
    %v2085 = vrcp.pop %v2071
    %v2086 = vrcp.pop %v2072
    %v2087 = vrcp.pop %v2073
    %v2088 = vrcp.pop %v2074
    %v2089 = vrcp.pop %v2075
    %v2090 = vrcp.pop %v2076
    %v2091 = vrcp.pop %v2077
    %v2092 = vrcp.pop %v2078
    %v2093 = vrcp.pop %v2079
    %v2094 = vrcp.pop %v2080
    %v2095 = vrcp.pop %v2081
    %v2096 = vpack.c.bf16 %v2083, %v2082
    %v2097 = vpack.c.bf16 %v2085, %v2084
    %v2098 = vpack.c.bf16 %v2087, %v2086
    %v2099 = vpack.c.bf16 %v2088, %v2088
    %v2100 = vpack.c.bf16 %v2090, %v2089
    %v2101 = vpack.c.bf16 %v2092, %v2091
    %v2102 = vpack.c.bf16 %v2094, %v2093
    %v2103 = vpack.c.bf16 %v2095, %v2095
    %2104 = vst [vmem:[#allocation2] sm:$0xff] %v2096
    %2105 = vst [vmem:[#allocation2 + $0x8] sm:$0xff] %v2097
    %2106 = vst [vmem:[#allocation2 + $0x10] sm:$0xff] %v2098
    %vm2107 = vcmask 125952
    %2108 = vst.msk [vmem:[#allocation2 + $0x18] sm:$0xf] %vm2107, %v2099
    %2109 = vst [vmem:[#allocation2 + $0x1c] sm:$0xff] %v2100
    %2110 = vst [vmem:[#allocation2 + $0x24] sm:$0xff] %v2101
    %2111 = vst [vmem:[#allocation2 + $0x2c] sm:$0xff] %v2102
    %2112 = vst.msk [vmem:[#allocation2 + $0x34] sm:$0xf] %vm2107, %v2103
    // Predicated region
    $region38: #{tpu_custom_call.1} parent=1 // pred_check
      _
    $region39: #{tpu_custom_call.1} parent=1 // pred_check_branch
      %2114 = sbr.rel (0) target = $region41
    $region40: #{tpu_custom_call.1} parent=1 // pred_region
      %2116 = vsyncadd [#allocation3], 0
      %s2117 = sshll.u32 [#allocation2], 4
      %s2118 = int_to_ptr.vmem [resolvable:$true] %s2117
      %s2119 = sshll.u32 %s9, 4
      %s2120 = int_to_ptr.hbm [resolvable:$true] %s2119
      %2125 = dma.vmem_to_hbm [thread:$0]  %s2118, 896, %s2120, [#allocation3], 448, 448, 28
    $region41: #{tpu_custom_call.1} parent=1 // pred_fallthru
      _
    // Predicated region
    $region42: #{tpu_custom_call.1} parent=1 // pred_check
      _
    $region43: #{tpu_custom_call.1} parent=1 // pred_check_branch
      %2127 = sbr.rel (0) target = $region45
    $region44: #{tpu_custom_call.1} parent=1 // pred_region
      %2129 = dma.done [#allocation3], 896
    $region45: #{tpu_custom_call.1} parent=1 // pred_fallthru
      _
    %2130 = vsyncpa [#allocation3], 1

</llo_original>
